<compile_context>
chip_gen: v5e
topology: v5e:2x2
jax: 0.10.0
libtpu: 0.0.40
codegen_flags: <defaults>
</compile_context>

<pallas_src>
import functools

import jax
import jax.numpy as jnp
from jax.experimental import pallas as pl
from jax.experimental.pallas import tpu as pltpu


def _round_up(x, m):
    return (x + m - 1) // m * m


# ----------------------------------------------------------------------------
# Fused  act(X @ W + b)  Pallas kernel (bf16 inputs, f32 accumulation)
# ----------------------------------------------------------------------------
def _matmul_bias_act_kernel(x_ref, w_ref, b_ref, o_ref, *, activation):
    acc = jnp.dot(x_ref[...], w_ref[...], preferred_element_type=jnp.float32)
    y = acc + b_ref[...]
    if activation == "relu":
        y = jnp.maximum(y, 0.0)
    elif activation == "sigmoid":
        y = 1.0 / (1.0 + jnp.exp(-y))
    o_ref[...] = y.astype(o_ref.dtype)


def matmul_bias_act(x_bf16, w_padded, b_padded, n_real, *, activation,
                    out_dtype):
    """act(x @ w + b).  x:(M,K) bf16, w:(Kp,Np) bf16 pre-padded, b:(1,Np) f32.

    Returns (M, n_real) in out_dtype.
    """
    M, K = x_bf16.shape
    Kp, Np = w_padded.shape
    assert K <= Kp and n_real <= Np and Np % 128 == 0

    # Tile selection.  256-row tiles when M allows (v6e/v7x MXU width); the
    # per-block working set (tm*Kp + Kp*tn in bf16) is < 1 MiB for every layer
    # of this decoder, so the same choice is safe on v5e.
    m16 = _round_up(max(M, 16), 16)          # bf16 sublane packing
    tm = 256 if m16 >= 256 else m16
    Mp = _round_up(M, tm)                    # grid is exact: no truncation
    tn = 256 if Np % 256 == 0 else 128

    if Mp == M and Kp == K:
        xp = x_bf16
    else:
        xp = jnp.pad(x_bf16, ((0, Mp - M), (0, Kp - K)))

    grid = (Mp // tm, Np // tn)

    out = pl.pallas_call(
        functools.partial(_matmul_bias_act_kernel, activation=activation),
        out_shape=jax.ShapeDtypeStruct((Mp, Np), out_dtype),
        grid_spec=pltpu.PrefetchScalarGridSpec(
            num_scalar_prefetch=0,
            grid=grid,
            in_specs=[
                pl.BlockSpec((tm, Kp), lambda i, j: (i, 0)),
                pl.BlockSpec((Kp, tn), lambda i, j: (0, j)),
                pl.BlockSpec((1, tn), lambda i, j: (0, j)),
            ],
            out_specs=pl.BlockSpec((tm, tn), lambda i, j: (i, j)),
        ),
        compiler_params=pltpu.CompilerParams(
            dimension_semantics=("parallel", "parallel"),
            vmem_limit_bytes=48 * 1024 * 1024),
    )(xp, w_padded, b_padded)
    return out[:M, :n_real]


# ----------------------------------------------------------------------------
# im2col (bf16) for 3x3 stride-1 convs; 1x1 convs are just a reshape
# ----------------------------------------------------------------------------
def _im2col_bf16(x_nhwc, kh, kw, stride, pad):
    N, H, W, C = x_nhwc.shape
    x = x_nhwc.astype(jnp.bfloat16)
    xp = jnp.pad(x, ((0, 0), (pad, pad), (pad, pad), (0, 0)))
    Ho = (H + 2 * pad - kh) // stride + 1
    Wo = (W + 2 * pad - kw) // stride + 1
    patches = []
    for i in range(kh):
        for j in range(kw):
            patches.append(
                xp[:, i:i + stride * Ho:stride, j:j + stride * Wo:stride, :])
    p = jnp.stack(patches, axis=3)                 # (N, Ho, Wo, kh*kw, C) bf16
    return p.reshape(N * Ho * Wo, kh * kw * C), Ho, Wo


# ----------------------------------------------------------------------------
# Bilinear upsample, align_corners=True (plain-JAX glue; memory-bound)
# ----------------------------------------------------------------------------
def _interp_axis_align_corners(x, out_size, axis):
    in_size = x.shape[axis]
    if in_size == out_size:
        return x
    if in_size == 1 or out_size == 1:
        idx = jnp.zeros((out_size,), jnp.int32)
        return jnp.take(x, idx, axis=axis)
    pos = jnp.arange(out_size, dtype=jnp.float32) * ((in_size - 1) / (out_size - 1))
    lo = jnp.floor(pos).astype(jnp.int32)
    hi = jnp.minimum(lo + 1, in_size - 1)
    frac_shape = [1] * x.ndim
    frac_shape[axis] = out_size
    frac = (pos - lo.astype(jnp.float32)).reshape(frac_shape)
    a = jnp.take(x, lo, axis=axis).astype(jnp.float32)
    b = jnp.take(x, hi, axis=axis).astype(jnp.float32)
    return (a * (1.0 - frac) + b * frac).astype(x.dtype)


def upsample_bilinear_align_corners(x_nhwc, size):
    y = _interp_axis_align_corners(x_nhwc, size[0], axis=1)
    y = _interp_axis_align_corners(y, size[1], axis=2)
    return y


# ----------------------------------------------------------------------------
# Decoder: static config, parameter init (with BN folding + padding), forward
# ----------------------------------------------------------------------------
def decoder_configs(inplanes):
    if inplanes == 1024:
        return [
            dict(cin=1024, cout=192, k=1, pad=0, bn=True, act="relu", up=(28, 28)),
            dict(cin=192, cout=64, k=1, pad=0, bn=True, act="relu", up=(56, 56)),
            dict(cin=64, cout=32, k=3, pad=1, bn=True, act="relu", up=(112, 112)),
            dict(cin=32, cout=12, k=3, pad=1, bn=True, act="relu", up=(224, 224)),
            dict(cin=12, cout=3, k=3, pad=1, bn=False, act="sigmoid", up=None),
        ]
    elif inplanes == 512:
        return [
            dict(cin=512, cout=128, k=1, pad=0, bn=True, act="relu", up=(56, 56)),
            dict(cin=128, cout=32, k=3, pad=1, bn=True, act="relu", up=(112, 112)),
            dict(cin=32, cout=12, k=3, pad=1, bn=True, act="relu", up=(224, 224)),
            dict(cin=12, cout=3, k=3, pad=1, bn=False, act="sigmoid", up=None),
        ]
    raise ValueError("inplanes must be 512 or 1024")


def init_decoder_params(key, inplanes, eps=1e-5):
    """Random params matching the torch module's structure; BN (eval-mode) is
    folded into the conv weight/bias once here, then pre-padded to MXU-friendly
    (Kp, Np) shapes in bf16 so the forward pass never touches raw weights."""
    cfgs = decoder_configs(inplanes)
    params = []
    for cfg in cfgs:
        cin, cout, k = cfg["cin"], cfg["cout"], cfg["k"]
        key, kw, kb, kg, kbt, km, kv = jax.random.split(key, 7)
        w = jax.random.normal(kw, (cout, cin, k, k), jnp.float32) * 0.05
        b = 0.01 * jax.random.normal(kb, (cout,), jnp.float32)
        # (Cout,Cin,kh,kw) -> (kh,kw,Cin,Cout) -> (kh*kw*Cin, Cout), matching
        # the (kh, kw, C) flattening order of the im2col patches.
        wmat = jnp.transpose(w, (2, 3, 1, 0)).reshape(k * k * cin, cout)
        if cfg["bn"]:
            gamma = 1.0 + 0.1 * jax.random.normal(kg, (cout,), jnp.float32)
            beta = 0.1 * jax.random.normal(kbt, (cout,), jnp.float32)
            mean = 0.05 * jax.random.normal(km, (cout,), jnp.float32)
            var = 1.0 + 0.1 * jnp.abs(jax.random.normal(kv, (cout,), jnp.float32))
            scale = gamma / jnp.sqrt(var + eps)
            wmat = wmat * scale[None, :]
            bias = (b - mean) * scale + beta
        else:
            bias = b
        K = k * k * cin
        Kp = _round_up(K, 128)
        Np = _round_up(cout, 128)
        w_padded = jnp.pad(wmat, ((0, Kp - K), (0, Np - cout))).astype(jnp.bfloat16)
        b_padded = jnp.pad(bias[None, :], ((0, 0), (0, Np - cout))).astype(jnp.float32)
        params.append((w_padded, b_padded))
    return params, cfgs


def decoder_forward(x_nchw, params, configs):
    # NCHW -> NHWC, carry activations in bf16 (matmul inputs are bf16 anyway).
    x = jnp.transpose(x_nchw, (0, 2, 3, 1)).astype(jnp.bfloat16)
    for (w_p, b_p), cfg in zip(params, configs):
        N, H, W, C = x.shape
        if cfg["k"] == 1:
            cols = x.reshape(N * H * W, C)
            Ho, Wo = H, W
        else:
            cols, Ho, Wo = _im2col_bf16(x, cfg["k"], cfg["k"], 1, cfg["pad"])
        out_dtype = jnp.float32 if cfg["up"] is None else jnp.bfloat16
        y = matmul_bias_act(cols, w_p, b_p, cfg["cout"],
                            activation=cfg["act"], out_dtype=out_dtype)
        x = y.reshape(N, Ho, Wo, cfg["cout"])
        if cfg["up"] is not None:
            x = upsample_bilinear_align_corners(x, cfg["up"])
    return jnp.transpose(x, (0, 3, 1, 2))  # NHWC -> NCHW (f32 sigmoid output)


if __name__ == "__main__":
    key = jax.random.PRNGKey(0)
    key, pkey, xkey = jax.random.split(key, 3)

    inplanes = 512          # channel widths / upsample sizes fixed by the module
    batch, spatial = 2, 4   # small batch / spatial for the demo
    params, cfgs = init_decoder_params(pkey, inplanes)

    x = jax.random.normal(xkey, (batch, inplanes, spatial, spatial), jnp.float32)

    fwd = jax.jit(functools.partial(decoder_forward, configs=cfgs))
    out = fwd(x, params)
    out = jax.block_until_ready(out)

    assert out.shape == (batch, 3, 224, 224), out.shape
    assert bool(jnp.all(jnp.isfinite(out)))
    assert bool(jnp.all((out >= 0.0) & (out <= 1.0)))   # Sigmoid range
    print("KERNEL_OK")
</pallas_src>

<mosaic_0001>
module attributes {stable_mosaic.version = 11 : i64} {
  func.func @_matmul_bias_act_kernel(%arg0: i32, %arg1: i32, %arg2: memref<32x512xbf16, #tpu.memory_space<vmem>>, %arg3: memref<512x128xbf16, #tpu.memory_space<vmem>>, %arg4: memref<1x128xf32, #tpu.memory_space<vmem>>, %arg5: memref<32x128xbf16, #tpu.memory_space<vmem>>) attributes {dimension_semantics = [#tpu.dimension_semantics<parallel>, #tpu.dimension_semantics<parallel>], iteration_bounds = array<i64: 1, 1>, scalar_prefetch = 0 : i64, scratch_operands = 0 : i64, tpu.core_type = #tpu.core_type<tc>, window_params = [{transform_indices = @transform_0, window_bounds = array<i64: 32, 512>}, {transform_indices = @transform_1, window_bounds = array<i64: 512, 128>}, {transform_indices = @transform_2, window_bounds = array<i64: 1, 128>}, {transform_indices = @transform_3, window_bounds = array<i64: 32, 128>}]} {
    %c0 = arith.constant 0 : index
    %c0_0 = arith.constant 0 : index
    %0 = vector.load %arg2[%c0, %c0_0] : memref<32x512xbf16, #tpu.memory_space<vmem>>, vector<32x512xbf16>
    %c0_1 = arith.constant 0 : index
    %c0_2 = arith.constant 0 : index
    %1 = vector.load %arg3[%c0_1, %c0_2] : memref<512x128xbf16, #tpu.memory_space<vmem>>, vector<512x128xbf16>
    %cst = arith.constant dense<0.000000e+00> : vector<32x128xf32>
    %2 = tpu.matmul %0, %1, %cst {dimension_numbers = #tpu.dot_dimension_numbers<[1], [0], [0], [1], [0, 0, 1, 1], [], []>} : vector<32x512xbf16>, vector<512x128xbf16>, vector<32x128xf32> -> vector<32x128xf32>
    %c0_3 = arith.constant 0 : index
    %c0_4 = arith.constant 0 : index
    %3 = vector.load %arg4[%c0_3, %c0_4] : memref<1x128xf32, #tpu.memory_space<vmem>>, vector<1x128xf32>
    %4 = vector.broadcast %3 : vector<1x128xf32> to vector<32x128xf32>
    %5 = arith.addf %2, %4 : vector<32x128xf32>
    %cst_5 = arith.constant 0.000000e+00 : f32
    %6 = vector.broadcast %cst_5 : f32 to vector<32x128xf32>
    %7 = arith.maximumf %5, %6 : vector<32x128xf32>
    %8 = arith.truncf %7 : vector<32x128xf32> to vector<32x128xbf16>
    %c0_6 = arith.constant 0 : index
    %c0_7 = arith.constant 0 : index
    %9 = vector.load %arg5[%c0_6, %c0_7] : memref<32x128xbf16, #tpu.memory_space<vmem>>, vector<32x128xbf16>
    tpu.vector_store %arg5[%c0_6, %c0_7], %8 {strides = array<i32>} : memref<32x128xbf16, #tpu.memory_space<vmem>>, vector<32x128xbf16>,
    return
  }
  func.func @transform_0(%arg0: i32, %arg1: i32) -> (i32, i32) {
    %c0_i32 = arith.constant 0 : i32
    %c0_i32_0 = arith.constant 0 : i32
    return %arg0, %c0_i32 : i32, i32
  }
  func.func @transform_1(%arg0: i32, %arg1: i32) -> (i32, i32) {
    %c0_i32 = arith.constant 0 : i32
    %c0_i32_0 = arith.constant 0 : i32
    return %c0_i32, %arg1 : i32, i32
  }
  func.func @transform_2(%arg0: i32, %arg1: i32) -> (i32, i32) {
    %c0_i32 = arith.constant 0 : i32
    %c0_i32_0 = arith.constant 0 : i32
    return %c0_i32, %arg1 : i32, i32
  }
  func.func @transform_3(%arg0: i32, %arg1: i32) -> (i32, i32) {
    %c0_i32 = arith.constant 0 : i32
    return %arg0, %arg1 : i32, i32
  }
}

module attributes {stable_mosaic.version = 11 : i64} {
  func.func @_matmul_bias_act_kernel(%arg0: i32, %arg1: i32, %arg2: memref<256x1152xbf16, #tpu.memory_space<vmem>>, %arg3: memref<1152x128xbf16, #tpu.memory_space<vmem>>, %arg4: memref<1x128xf32, #tpu.memory_space<vmem>>, %arg5: memref<256x128xbf16, #tpu.memory_space<vmem>>) attributes {dimension_semantics = [#tpu.dimension_semantics<parallel>, #tpu.dimension_semantics<parallel>], iteration_bounds = array<i64: 25, 1>, scalar_prefetch = 0 : i64, scratch_operands = 0 : i64, tpu.core_type = #tpu.core_type<tc>, window_params = [{transform_indices = @transform_0, window_bounds = array<i64: 256, 1152>}, {transform_indices = @transform_1, window_bounds = array<i64: 1152, 128>}, {transform_indices = @transform_2, window_bounds = array<i64: 1, 128>}, {transform_indices = @transform_3, window_bounds = array<i64: 256, 128>}]} {
    %c0 = arith.constant 0 : index
    %c0_0 = arith.constant 0 : index
    %0 = vector.load %arg2[%c0, %c0_0] : memref<256x1152xbf16, #tpu.memory_space<vmem>>, vector<256x1152xbf16>
    %c0_1 = arith.constant 0 : index
    %c0_2 = arith.constant 0 : index
    %1 = vector.load %arg3[%c0_1, %c0_2] : memref<1152x128xbf16, #tpu.memory_space<vmem>>, vector<1152x128xbf16>
    %cst = arith.constant dense<0.000000e+00> : vector<256x128xf32>
    %2 = tpu.matmul %0, %1, %cst {dimension_numbers = #tpu.dot_dimension_numbers<[1], [0], [0], [1], [0, 0, 1, 1], [], []>} : vector<256x1152xbf16>, vector<1152x128xbf16>, vector<256x128xf32> -> vector<256x128xf32>
    %c0_3 = arith.constant 0 : index
    %c0_4 = arith.constant 0 : index
    %3 = vector.load %arg4[%c0_3, %c0_4] : memref<1x128xf32, #tpu.memory_space<vmem>>, vector<1x128xf32>
    %4 = vector.broadcast %3 : vector<1x128xf32> to vector<256x128xf32>
    %5 = arith.addf %2, %4 : vector<256x128xf32>
    %cst_5 = arith.constant 0.000000e+00 : f32
    %6 = vector.broadcast %cst_5 : f32 to vector<256x128xf32>
    %7 = arith.maximumf %5, %6 : vector<256x128xf32>
    %8 = arith.truncf %7 : vector<256x128xf32> to vector<256x128xbf16>
    %c0_6 = arith.constant 0 : index
    %c0_7 = arith.constant 0 : index
    %9 = vector.load %arg5[%c0_6, %c0_7] : memref<256x128xbf16, #tpu.memory_space<vmem>>, vector<256x128xbf16>
    tpu.vector_store %arg5[%c0_6, %c0_7], %8 {strides = array<i32>} : memref<256x128xbf16, #tpu.memory_space<vmem>>, vector<256x128xbf16>,
    return
  }
  func.func @transform_0(%arg0: i32, %arg1: i32) -> (i32, i32) {
    %c0_i32 = arith.constant 0 : i32
    %c0_i32_0 = arith.constant 0 : i32
    return %arg0, %c0_i32 : i32, i32
  }
  func.func @transform_1(%arg0: i32, %arg1: i32) -> (i32, i32) {
    %c0_i32 = arith.constant 0 : i32
    %c0_i32_0 = arith.constant 0 : i32
    return %c0_i32, %arg1 : i32, i32
  }
  func.func @transform_2(%arg0: i32, %arg1: i32) -> (i32, i32) {
    %c0_i32 = arith.constant 0 : i32
    %c0_i32_0 = arith.constant 0 : i32
    return %c0_i32, %arg1 : i32, i32
  }
  func.func @transform_3(%arg0: i32, %arg1: i32) -> (i32, i32) {
    %c0_i32 = arith.constant 0 : i32
    return %arg0, %arg1 : i32, i32
  }
}

module attributes {stable_mosaic.version = 11 : i64} {
  func.func @_matmul_bias_act_kernel(%arg0: i32, %arg1: i32, %arg2: memref<256x384xbf16, #tpu.memory_space<vmem>>, %arg3: memref<384x128xbf16, #tpu.memory_space<vmem>>, %arg4: memref<1x128xf32, #tpu.memory_space<vmem>>, %arg5: memref<256x128xbf16, #tpu.memory_space<vmem>>) attributes {dimension_semantics = [#tpu.dimension_semantics<parallel>, #tpu.dimension_semantics<parallel>], iteration_bounds = array<i64: 98, 1>, scalar_prefetch = 0 : i64, scratch_operands = 0 : i64, tpu.core_type = #tpu.core_type<tc>, window_params = [{transform_indices = @transform_0, window_bounds = array<i64: 256, 384>}, {transform_indices = @transform_1, window_bounds = array<i64: 384, 128>}, {transform_indices = @transform_2, window_bounds = array<i64: 1, 128>}, {transform_indices = @transform_3, window_bounds = array<i64: 256, 128>}]} {
    %c0 = arith.constant 0 : index
    %c0_0 = arith.constant 0 : index
    %0 = vector.load %arg2[%c0, %c0_0] : memref<256x384xbf16, #tpu.memory_space<vmem>>, vector<256x384xbf16>
    %c0_1 = arith.constant 0 : index
    %c0_2 = arith.constant 0 : index
    %1 = vector.load %arg3[%c0_1, %c0_2] : memref<384x128xbf16, #tpu.memory_space<vmem>>, vector<384x128xbf16>
    %cst = arith.constant dense<0.000000e+00> : vector<256x128xf32>
    %2 = tpu.matmul %0, %1, %cst {dimension_numbers = #tpu.dot_dimension_numbers<[1], [0], [0], [1], [0, 0, 1, 1], [], []>} : vector<256x384xbf16>, vector<384x128xbf16>, vector<256x128xf32> -> vector<256x128xf32>
    %c0_3 = arith.constant 0 : index
    %c0_4 = arith.constant 0 : index
    %3 = vector.load %arg4[%c0_3, %c0_4] : memref<1x128xf32, #tpu.memory_space<vmem>>, vector<1x128xf32>
    %4 = vector.broadcast %3 : vector<1x128xf32> to vector<256x128xf32>
    %5 = arith.addf %2, %4 : vector<256x128xf32>
    %cst_5 = arith.constant 0.000000e+00 : f32
    %6 = vector.broadcast %cst_5 : f32 to vector<256x128xf32>
    %7 = arith.maximumf %5, %6 : vector<256x128xf32>
    %8 = arith.truncf %7 : vector<256x128xf32> to vector<256x128xbf16>
    %c0_6 = arith.constant 0 : index
    %c0_7 = arith.constant 0 : index
    %9 = vector.load %arg5[%c0_6, %c0_7] : memref<256x128xbf16, #tpu.memory_space<vmem>>, vector<256x128xbf16>
    tpu.vector_store %arg5[%c0_6, %c0_7], %8 {strides = array<i32>} : memref<256x128xbf16, #tpu.memory_space<vmem>>, vector<256x128xbf16>,
    return
  }
  func.func @transform_0(%arg0: i32, %arg1: i32) -> (i32, i32) {
    %c0_i32 = arith.constant 0 : i32
    %c0_i32_0 = arith.constant 0 : i32
    return %arg0, %c0_i32 : i32, i32
  }
  func.func @transform_1(%arg0: i32, %arg1: i32) -> (i32, i32) {
    %c0_i32 = arith.constant 0 : i32
    %c0_i32_0 = arith.constant 0 : i32
    return %c0_i32, %arg1 : i32, i32
  }
  func.func @transform_2(%arg0: i32, %arg1: i32) -> (i32, i32) {
    %c0_i32 = arith.constant 0 : i32
    %c0_i32_0 = arith.constant 0 : i32
    return %c0_i32, %arg1 : i32, i32
  }
  func.func @transform_3(%arg0: i32, %arg1: i32) -> (i32, i32) {
    %c0_i32 = arith.constant 0 : i32
    return %arg0, %arg1 : i32, i32
  }
}

module attributes {stable_mosaic.version = 11 : i64} {
  func.func @_matmul_bias_act_kernel(%arg0: i32, %arg1: i32, %arg2: memref<256x128xbf16, #tpu.memory_space<vmem>>, %arg3: memref<128x128xbf16, #tpu.memory_space<vmem>>, %arg4: memref<1x128xf32, #tpu.memory_space<vmem>>, %arg5: memref<256x128xf32, #tpu.memory_space<vmem>>) attributes {dimension_semantics = [#tpu.dimension_semantics<parallel>, #tpu.dimension_semantics<parallel>], iteration_bounds = array<i64: 392, 1>, scalar_prefetch = 0 : i64, scratch_operands = 0 : i64, tpu.core_type = #tpu.core_type<tc>, window_params = [{transform_indices = @transform_0, window_bounds = array<i64: 256, 128>}, {transform_indices = @transform_1, window_bounds = array<i64: 128, 128>}, {transform_indices = @transform_2, window_bounds = array<i64: 1, 128>}, {transform_indices = @transform_3, window_bounds = array<i64: 256, 128>}]} {
    %c0 = arith.constant 0 : index
    %c0_0 = arith.constant 0 : index
    %0 = vector.load %arg2[%c0, %c0_0] : memref<256x128xbf16, #tpu.memory_space<vmem>>, vector<256x128xbf16>
    %c0_1 = arith.constant 0 : index
    %c0_2 = arith.constant 0 : index
    %1 = vector.load %arg3[%c0_1, %c0_2] : memref<128x128xbf16, #tpu.memory_space<vmem>>, vector<128x128xbf16>
    %cst = arith.constant dense<0.000000e+00> : vector<256x128xf32>
    %2 = tpu.matmul %0, %1, %cst {dimension_numbers = #tpu.dot_dimension_numbers<[1], [0], [0], [1], [0, 0, 1, 1], [], []>} : vector<256x128xbf16>, vector<128x128xbf16>, vector<256x128xf32> -> vector<256x128xf32>
    %c0_3 = arith.constant 0 : index
    %c0_4 = arith.constant 0 : index
    %3 = vector.load %arg4[%c0_3, %c0_4] : memref<1x128xf32, #tpu.memory_space<vmem>>, vector<1x128xf32>
    %4 = vector.broadcast %3 : vector<1x128xf32> to vector<256x128xf32>
    %5 = arith.addf %2, %4 : vector<256x128xf32>
    %cst_5 = arith.constant 0.000000e+00 : f32
    %6 = vector.broadcast %cst_5 : f32 to vector<256x128xf32>
    %7 = arith.subf %6, %5 : vector<256x128xf32>
    %8 = math.exp %7 : vector<256x128xf32>
    %cst_6 = arith.constant 1.000000e+00 : f32
    %9 = vector.broadcast %cst_6 : f32 to vector<256x128xf32>
    %10 = arith.addf %9, %8 : vector<256x128xf32>
    %cst_7 = arith.constant 1.000000e+00 : f32
    %11 = vector.broadcast %cst_7 : f32 to vector<256x128xf32>
    %12 = arith.divf %11, %10 : vector<256x128xf32>
    %c0_8 = arith.constant 0 : index
    %c0_9 = arith.constant 0 : index
    %13 = vector.load %arg5[%c0_8, %c0_9] : memref<256x128xf32, #tpu.memory_space<vmem>>, vector<256x128xf32>
    tpu.vector_store %arg5[%c0_8, %c0_9], %12 {strides = array<i32>} : memref<256x128xf32, #tpu.memory_space<vmem>>, vector<256x128xf32>,
    return
  }
  func.func @transform_0(%arg0: i32, %arg1: i32) -> (i32, i32) {
    %c0_i32 = arith.constant 0 : i32
    %c0_i32_0 = arith.constant 0 : i32
    return %arg0, %c0_i32 : i32, i32
  }
  func.func @transform_1(%arg0: i32, %arg1: i32) -> (i32, i32) {
    %c0_i32 = arith.constant 0 : i32
    %c0_i32_0 = arith.constant 0 : i32
    return %c0_i32, %arg1 : i32, i32
  }
  func.func @transform_2(%arg0: i32, %arg1: i32) -> (i32, i32) {
    %c0_i32 = arith.constant 0 : i32
    %c0_i32_0 = arith.constant 0 : i32
    return %c0_i32, %arg1 : i32, i32
  }
  func.func @transform_3(%arg0: i32, %arg1: i32) -> (i32, i32) {
    %c0_i32 = arith.constant 0 : i32
    return %arg0, %arg1 : i32, i32
  }
}

</mosaic_0001>

<llo_original>
// kernel: decoder_forward.4
$region0: #{decoder_forward.4}
  #allocation0 [shape = 'u32[]', space=smem, size = 0x4, offset = 0x4, fixed_abs, tag = 'smem constant byte address 0x4 - core index']
  #allocation1 [shape = 'u32[72,128]{1,0:T(1,128)}', space=vmem, size = 0x9000, scoped, tag = 'internal scratch']
  %s0 = inlined_call_operand.vmem [shape: bf16[32,512], index: 0, kind: input, shape index: {}]
  %s1 = inlined_call_operand.hbm [shape: bf16[512,128], index: 1, kind: input, shape index: {}]
  %s2 = inlined_call_operand.hbm [shape: f32[1,128], index: 2, kind: input, shape index: {}]
  %s3 = inlined_call_operand.vmem [shape: bf16[32,128], index: 3, kind: output, shape index: {}]
  %s4 = sld [smem:[#allocation0]]
  $region30: #{decoder_forward.4} parent=0
    _
  %s6 = ssub.s32 1, %s4
  %s7 = scalar_select 0, %s6, %s4
  $region1: #{decoder_forward.4} parent=0
    #allocation2 [shape = 'u8[131072]{0}', space=vmem, size = 0x20000, scoped, tag = 'input window, operand 1, single buffered']
    #allocation3 [shape = 's32[1]{0}', space=sflag, size = 0x4, scoped, tag = 'scoped memory for decoder_forward.4']
    #allocation4 [shape = 'u8[512]{0}', space=vmem, size = 0x400, scoped, tag = 'input window, operand 2, single buffered']
    #allocation5 [shape = 's32[1]{0}', space=sflag, size = 0x4, scoped, tag = 'scoped memory for decoder_forward.4']
    %8 = vsyncpa [#allocation3], 0
    %9 = vsyncpa [#allocation5], 0
    // Predicated region
    $region2: #{decoder_forward.4} parent=1 // pred_check
      _
    $region3: #{decoder_forward.4} parent=1 // pred_check_branch
      %11 = sbr.rel (0) target = $region5
    $region4: #{decoder_forward.4} parent=1 // pred_region
      _
    $region5: #{decoder_forward.4} parent=1 // pred_fallthru
      _
    // Predicated region
    $region6: #{decoder_forward.4} parent=1 // pred_check
      _
    $region7: #{decoder_forward.4} parent=1 // pred_check_branch
      %13 = sbr.rel (0) target = $region9
    $region8: #{decoder_forward.4} parent=1 // pred_region
      %15 = vsyncadd [#allocation3], 0
      %s16 = sshll.u32 %s1, 4
      %s17 = int_to_ptr.hbm [resolvable:$true] %s16
      %s18 = sshll.u32 [#allocation2], 4
      %s19 = int_to_ptr.vmem [resolvable:$true] %s18
      %24 = dma.hbm_to_vmem [thread:$0]  %s17, 4096, %s19, [#allocation3], 64, 64, 4
    $region9: #{decoder_forward.4} parent=1 // pred_fallthru
      _
    // Predicated region
    $region10: #{decoder_forward.4} parent=1 // pred_check
      _
    $region11: #{decoder_forward.4} parent=1 // pred_check_branch
      %26 = sbr.rel (0) target = $region13
    $region12: #{decoder_forward.4} parent=1 // pred_region
      %28 = vsyncadd [#allocation5], 0
      %s30 = sshll.u32 %s2, 4
      %s31 = int_to_ptr.hbm [resolvable:$true] %s30
      %s32 = sshll.u32 [#allocation4], 4
      %s33 = int_to_ptr.vmem [resolvable:$true] %s32
      %35 = dma.hbm_to_vmem [thread:$0]  %s31, 16, %s33, [#allocation5]
    $region13: #{decoder_forward.4} parent=1 // pred_fallthru
      _
    // Predicated region
    $region14: #{decoder_forward.4} parent=1 // pred_check
      _
    $region15: #{decoder_forward.4} parent=1 // pred_check_branch
      %37 = sbr.rel (0) target = $region17
    $region16: #{decoder_forward.4} parent=1 // pred_region
      %39 = dma.done [#allocation3], 4096
    $region17: #{decoder_forward.4} parent=1 // pred_fallthru
      _
    // Predicated region
    $region18: #{decoder_forward.4} parent=1 // pred_check
      _
    $region19: #{decoder_forward.4} parent=1 // pred_check_branch
      %41 = sbr.rel (0) target = $region21
    $region20: #{decoder_forward.4} parent=1 // pred_region
      %43 = dma.done [#allocation5], 16
    $region21: #{decoder_forward.4} parent=1 // pred_fallthru
      _
    %v44 = vld [vmem:[%s0] sm:$0xff]
    %v45 = vld [vmem:[%s0 + $0x8] sm:$0xff]
    %v46 = vld [vmem:[%s0 + $0x10] sm:$0xff]
    %v47 = vld [vmem:[%s0 + $0x18] sm:$0xff]
    %v48 = vld [vmem:[%s0 + $0x20] sm:$0xff]
    %v49 = vld [vmem:[%s0 + $0x28] sm:$0xff]
    %v50 = vld [vmem:[%s0 + $0x30] sm:$0xff]
    %v51 = vld [vmem:[%s0 + $0x38] sm:$0xff]
    %v52 = vld [vmem:[#allocation2] sm:$0xf]
    %v53 = vld [vmem:[#allocation2 + $0x4] sm:$0xf]
    %v54 = vld [vmem:[#allocation2 + $0x8] sm:$0xf]
    %v55 = vld [vmem:[#allocation2 + $0xc] sm:$0xf]
    %v56 = vld [vmem:[#allocation2 + $0x10] sm:$0xf]
    %v57 = vld [vmem:[#allocation2 + $0x14] sm:$0xf]
    %v58 = vld [vmem:[#allocation2 + $0x18] sm:$0xf]
    %v59 = vld [vmem:[#allocation2 + $0x1c] sm:$0xf]
    %v60 = vld [vmem:[#allocation2 + $0x20] sm:$0xf]
    %v61 = vld [vmem:[#allocation2 + $0x24] sm:$0xf]
    %v62 = vld [vmem:[#allocation2 + $0x28] sm:$0xf]
    %v63 = vld [vmem:[#allocation2 + $0x2c] sm:$0xf]
    %v64 = vld [vmem:[#allocation2 + $0x30] sm:$0xf]
    %v65 = vld [vmem:[#allocation2 + $0x34] sm:$0xf]
    %v66 = vld [vmem:[#allocation2 + $0x38] sm:$0xf]
    %v67 = vld [vmem:[#allocation2 + $0x3c] sm:$0xf]
    %v68 = vld [vmem:[#allocation2 + $0x40] sm:$0xf]
    %v69 = vld [vmem:[#allocation2 + $0x44] sm:$0xf]
    %v70 = vld [vmem:[#allocation2 + $0x48] sm:$0xf]
    %v71 = vld [vmem:[#allocation2 + $0x4c] sm:$0xf]
    %v72 = vld [vmem:[#allocation2 + $0x50] sm:$0xf]
    %v73 = vld [vmem:[#allocation2 + $0x54] sm:$0xf]
    %v74 = vld [vmem:[#allocation2 + $0x58] sm:$0xf]
    %v75 = vld [vmem:[#allocation2 + $0x5c] sm:$0xf]
    %v76 = vld [vmem:[#allocation2 + $0x60] sm:$0xf]
    %v77 = vld [vmem:[#allocation2 + $0x64] sm:$0xf]
    %v78 = vld [vmem:[#allocation2 + $0x68] sm:$0xf]
    %v79 = vld [vmem:[#allocation2 + $0x6c] sm:$0xf]
    %v80 = vld [vmem:[#allocation2 + $0x70] sm:$0xf]
    %v81 = vld [vmem:[#allocation2 + $0x74] sm:$0xf]
    %v82 = vld [vmem:[#allocation2 + $0x78] sm:$0xf]
    %v83 = vld [vmem:[#allocation2 + $0x7c] sm:$0xf]
    %v84 = vld [vmem:[#allocation2 + $0x80] sm:$0xf]
    %v85 = vld [vmem:[#allocation2 + $0x84] sm:$0xf]
    %v86 = vld [vmem:[#allocation2 + $0x88] sm:$0xf]
    %v87 = vld [vmem:[#allocation2 + $0x8c] sm:$0xf]
    %v88 = vld [vmem:[#allocation2 + $0x90] sm:$0xf]
    %v89 = vld [vmem:[#allocation2 + $0x94] sm:$0xf]
    %v90 = vld [vmem:[#allocation2 + $0x98] sm:$0xf]
    %v91 = vld [vmem:[#allocation2 + $0x9c] sm:$0xf]
    %v92 = vld [vmem:[#allocation2 + $0xa0] sm:$0xf]
    %v93 = vld [vmem:[#allocation2 + $0xa4] sm:$0xf]
    %v94 = vld [vmem:[#allocation2 + $0xa8] sm:$0xf]
    %v95 = vld [vmem:[#allocation2 + $0xac] sm:$0xf]
    %v96 = vld [vmem:[#allocation2 + $0xb0] sm:$0xf]
    %v97 = vld [vmem:[#allocation2 + $0xb4] sm:$0xf]
    %v98 = vld [vmem:[#allocation2 + $0xb8] sm:$0xf]
    %v99 = vld [vmem:[#allocation2 + $0xbc] sm:$0xf]
    %v100 = vld [vmem:[#allocation2 + $0xc0] sm:$0xf]
    %v101 = vld [vmem:[#allocation2 + $0xc4] sm:$0xf]
    %v102 = vld [vmem:[#allocation2 + $0xc8] sm:$0xf]
    %v103 = vld [vmem:[#allocation2 + $0xcc] sm:$0xf]
    %v104 = vld [vmem:[#allocation2 + $0xd0] sm:$0xf]
    %v105 = vld [vmem:[#allocation2 + $0xd4] sm:$0xf]
    %v106 = vld [vmem:[#allocation2 + $0xd8] sm:$0xf]
    %v107 = vld [vmem:[#allocation2 + $0xdc] sm:$0xf]
    %v108 = vld [vmem:[#allocation2 + $0xe0] sm:$0xf]
    %v109 = vld [vmem:[#allocation2 + $0xe4] sm:$0xf]
    %v110 = vld [vmem:[#allocation2 + $0xe8] sm:$0xf]
    %v111 = vld [vmem:[#allocation2 + $0xec] sm:$0xf]
    %v112 = vld [vmem:[#allocation2 + $0xf0] sm:$0xf]
    %v113 = vld [vmem:[#allocation2 + $0xf4] sm:$0xf]
    %v114 = vld [vmem:[#allocation2 + $0xf8] sm:$0xf]
    %v115 = vld [vmem:[#allocation2 + $0xfc] sm:$0xf]
    %v116 = vld [vmem:[#allocation4] sm:$0x1]
    %v118 = vperm.slane %v116, 0
    %v128 = vunpack.c.l.b16 %v44
    %v129 = vunpack.c.h.b16 %v44
    %v130 = vunpack.c.l.b16 %v45
    %v131 = vunpack.c.h.b16 %v45
    %v132 = vunpack.c.l.b16 %v46
    %v133 = vunpack.c.h.b16 %v46
    %v134 = vunpack.c.l.b16 %v47
    %v135 = vunpack.c.h.b16 %v47
    %v136 = vunpack.c.l.b16 %v48
    %v137 = vunpack.c.h.b16 %v48
    %v138 = vunpack.c.l.b16 %v49
    %v139 = vunpack.c.h.b16 %v49
    %v140 = vunpack.c.l.b16 %v50
    %v141 = vunpack.c.h.b16 %v50
    %v142 = vunpack.c.l.b16 %v51
    %v143 = vunpack.c.h.b16 %v51
    %v144 = vpack.c.b16 %v132, %v128
    %v145 = vpack.c.b16 %v133, %v129
    %v146 = vpack.c.b16 %v134, %v130
    %v147 = vpack.c.b16 %v135, %v131
    %v148 = vpack.c.b16 %v140, %v136
    %v149 = vpack.c.b16 %v141, %v137
    %v150 = vpack.c.b16 %v142, %v138
    %v151 = vpack.c.b16 %v143, %v139
    %v224 = vunpack.c.l.b16 %v52
    %v225 = vunpack.c.l.b16 %v53
    %v226 = vunpack.c.l.b16 %v54
    %v227 = vunpack.c.l.b16 %v55
    %v228 = vunpack.c.l.b16 %v56
    %v229 = vunpack.c.l.b16 %v57
    %v230 = vunpack.c.l.b16 %v58
    %v231 = vunpack.c.l.b16 %v59
    %v232 = vunpack.c.l.b16 %v60
    %v233 = vunpack.c.l.b16 %v61
    %v234 = vunpack.c.l.b16 %v62
    %v235 = vunpack.c.l.b16 %v63
    %v236 = vunpack.c.l.b16 %v64
    %v237 = vunpack.c.l.b16 %v65
    %v238 = vunpack.c.l.b16 %v66
    %v239 = vunpack.c.l.b16 %v67
    %v240 = vunpack.c.l.b16 %v68
    %v241 = vunpack.c.l.b16 %v69
    %v242 = vunpack.c.l.b16 %v70
    %v243 = vunpack.c.l.b16 %v71
    %v244 = vunpack.c.l.b16 %v72
    %v245 = vunpack.c.l.b16 %v73
    %v246 = vunpack.c.l.b16 %v74
    %v247 = vunpack.c.l.b16 %v75
    %v248 = vunpack.c.l.b16 %v76
    %v249 = vunpack.c.l.b16 %v77
    %v250 = vunpack.c.l.b16 %v78
    %v251 = vunpack.c.l.b16 %v79
    %v252 = vunpack.c.l.b16 %v80
    %v253 = vunpack.c.l.b16 %v81
    %v254 = vunpack.c.l.b16 %v82
    %v255 = vunpack.c.l.b16 %v83
    %v256 = vunpack.c.l.b16 %v84
    %v257 = vunpack.c.l.b16 %v85
    %v258 = vunpack.c.l.b16 %v86
    %v259 = vunpack.c.l.b16 %v87
    %v260 = vunpack.c.l.b16 %v88
    %v261 = vunpack.c.l.b16 %v89
    %v262 = vunpack.c.l.b16 %v90
    %v263 = vunpack.c.l.b16 %v91
    %v264 = vunpack.c.l.b16 %v92
    %v265 = vunpack.c.l.b16 %v93
    %v266 = vunpack.c.l.b16 %v94
    %v267 = vunpack.c.l.b16 %v95
    %v268 = vunpack.c.l.b16 %v96
    %v269 = vunpack.c.l.b16 %v97
    %v270 = vunpack.c.l.b16 %v98
    %v271 = vunpack.c.l.b16 %v99
    %v272 = vunpack.c.l.b16 %v100
    %v273 = vunpack.c.l.b16 %v101
    %v274 = vunpack.c.l.b16 %v102
    %v275 = vunpack.c.l.b16 %v103
    %v276 = vunpack.c.l.b16 %v104
    %v277 = vunpack.c.l.b16 %v105
    %v278 = vunpack.c.l.b16 %v106
    %v279 = vunpack.c.l.b16 %v107
    %v280 = vunpack.c.l.b16 %v108
    %v281 = vunpack.c.l.b16 %v109
    %v282 = vunpack.c.l.b16 %v110
    %v283 = vunpack.c.l.b16 %v111
    %v284 = vunpack.c.l.b16 %v112
    %v285 = vunpack.c.l.b16 %v113
    %v286 = vunpack.c.l.b16 %v114
    %v287 = vunpack.c.l.b16 %v115
    %v288 = vpack.c.b16 %v225, %v224
    %v289 = vpack.c.b16 %v227, %v226
    %v290 = vpack.c.b16 %v229, %v228
    %v291 = vpack.c.b16 %v231, %v230
    %v292 = vpack.c.b16 %v233, %v232
    %v293 = vpack.c.b16 %v235, %v234
    %v294 = vpack.c.b16 %v237, %v236
    %v295 = vpack.c.b16 %v239, %v238
    %v296 = vpack.c.b16 %v241, %v240
    %v297 = vpack.c.b16 %v243, %v242
    %v298 = vpack.c.b16 %v245, %v244
    %v299 = vpack.c.b16 %v247, %v246
    %v300 = vpack.c.b16 %v249, %v248
    %v301 = vpack.c.b16 %v251, %v250
    %v302 = vpack.c.b16 %v253, %v252
    %v303 = vpack.c.b16 %v255, %v254
    %v304 = vpack.c.b16 %v257, %v256
    %v305 = vpack.c.b16 %v259, %v258
    %v306 = vpack.c.b16 %v261, %v260
    %v307 = vpack.c.b16 %v263, %v262
    %v308 = vpack.c.b16 %v265, %v264
    %v309 = vpack.c.b16 %v267, %v266
    %v310 = vpack.c.b16 %v269, %v268
    %v311 = vpack.c.b16 %v271, %v270
    %v312 = vpack.c.b16 %v273, %v272
    %v313 = vpack.c.b16 %v275, %v274
    %v314 = vpack.c.b16 %v277, %v276
    %v315 = vpack.c.b16 %v279, %v278
    %v316 = vpack.c.b16 %v281, %v280
    %v317 = vpack.c.b16 %v283, %v282
    %v318 = vpack.c.b16 %v285, %v284
    %v319 = vpack.c.b16 %v287, %v286
    %352 = vmatpush.bf16.msra.mxu0 %v295
    %353 = vmatpush.bf16.msra.mxu0 %v294
    %354 = vmatpush.bf16.msra.mxu0 %v293
    %355 = vmatpush.bf16.msra.mxu0 %v292
    %356 = vmatpush.bf16.msra.mxu0 %v291
    %357 = vmatpush.bf16.msra.mxu0 %v290
    %358 = vmatpush.bf16.msra.mxu0 %v289
    %359 = vmatpush.bf16.msra.mxu0 %v288
    %360 = vmatmul.bf16.gmra.mxu0 %v144
    %v361 = vpop.f32.mrf.mxu0
    %v362 = vadd.f32 %v118, %v361
    %v363 = vpop.f32.mrf.mxu0
    %v364 = vadd.f32 %v118, %v363
    %365 = vmatmul.bf16.gmra.mxu0 %v148
    %v366 = vpop.f32.mrf.mxu0
    %v367 = vadd.f32 %v118, %v366
    %v368 = vpop.f32.mrf.mxu0
    %v369 = vadd.f32 %v118, %v368
    %370 = vdwg.mxu0
    %371 = vmatpush.bf16.msra.mxu0 %v303
    %372 = vmatpush.bf16.msra.mxu0 %v302
    %373 = vmatpush.bf16.msra.mxu0 %v301
    %374 = vmatpush.bf16.msra.mxu0 %v300
    %375 = vmatpush.bf16.msra.mxu0 %v299
    %376 = vmatpush.bf16.msra.mxu0 %v298
    %377 = vmatpush.bf16.msra.mxu0 %v297
    %378 = vmatpush.bf16.msra.mxu0 %v296
    %379 = vmatmul.bf16.gmra.mxu0 %v145
    %v380 = vpop.f32.mrf.mxu0
    %v381 = vadd.f32 %v362, %v380
    %v382 = vpop.f32.mrf.mxu0
    %v383 = vadd.f32 %v364, %v382
    %384 = vmatmul.bf16.gmra.mxu0 %v149
    %v385 = vpop.f32.mrf.mxu0
    %v386 = vadd.f32 %v367, %v385
    %v387 = vpop.f32.mrf.mxu0
    %v388 = vadd.f32 %v369, %v387
    %389 = vdwg.mxu0
    %390 = vmatpush.bf16.msra.mxu0 %v311
    %391 = vmatpush.bf16.msra.mxu0 %v310
    %392 = vmatpush.bf16.msra.mxu0 %v309
    %393 = vmatpush.bf16.msra.mxu0 %v308
    %394 = vmatpush.bf16.msra.mxu0 %v307
    %395 = vmatpush.bf16.msra.mxu0 %v306
    %396 = vmatpush.bf16.msra.mxu0 %v305
    %397 = vmatpush.bf16.msra.mxu0 %v304
    %398 = vmatmul.bf16.gmra.mxu0 %v146
    %v399 = vpop.f32.mrf.mxu0
    %v400 = vadd.f32 %v381, %v399
    %v401 = vpop.f32.mrf.mxu0
    %v402 = vadd.f32 %v383, %v401
    %403 = vmatmul.bf16.gmra.mxu0 %v150
    %v404 = vpop.f32.mrf.mxu0
    %v405 = vadd.f32 %v386, %v404
    %v406 = vpop.f32.mrf.mxu0
    %v407 = vadd.f32 %v388, %v406
    %408 = vdwg.mxu0
    %409 = vmatpush.bf16.msra.mxu0 %v319
    %410 = vmatpush.bf16.msra.mxu0 %v318
    %411 = vmatpush.bf16.msra.mxu0 %v317
    %412 = vmatpush.bf16.msra.mxu0 %v316
    %413 = vmatpush.bf16.msra.mxu0 %v315
    %414 = vmatpush.bf16.msra.mxu0 %v314
    %415 = vmatpush.bf16.msra.mxu0 %v313
    %416 = vmatpush.bf16.msra.mxu0 %v312
    %417 = vmatmul.bf16.gmra.mxu0 %v147
    %v418 = vpop.f32.mrf.mxu0
    %v419 = vadd.f32 %v400, %v418
    %v420 = vpop.f32.mrf.mxu0
    %v421 = vadd.f32 %v402, %v420
    %422 = vmatmul.bf16.gmra.mxu0 %v151
    %v423 = vpop.f32.mrf.mxu0
    %v424 = vadd.f32 %v405, %v423
    %v425 = vpop.f32.mrf.mxu0
    %v426 = vadd.f32 %v407, %v425
    %427 = vdwg.mxu0
    %v428 = vmax.f32 %v419, 0.0
    %v429 = vmax.f32 %v421, 0.0
    %v430 = vmax.f32 %v424, 0.0
    %v431 = vmax.f32 %v426, 0.0
    %v432 = vpack.c.bf16 %v428, %v428
    %v433 = vpack.c.bf16 %v429, %v429
    %v434 = vpack.c.bf16 %v430, %v430
    %v435 = vpack.c.bf16 %v431, %v431
    %436 = vst [vmem:[%s3] sm:$0xf] %v432
    %437 = vst [vmem:[%s3 + $0x4] sm:$0xf] %v433
    %438 = vst [vmem:[%s3 + $0x8] sm:$0xf] %v434
    %439 = vst [vmem:[%s3 + $0xc] sm:$0xf] %v435
    // Predicated region
    $region22: #{decoder_forward.4} parent=1 // pred_check
      _
    $region23: #{decoder_forward.4} parent=1 // pred_check_branch
      %441 = sbr.rel (0) target = $region25
    $region24: #{decoder_forward.4} parent=1 // pred_region
      _
    $region25: #{decoder_forward.4} parent=1 // pred_fallthru
      _
    // Predicated region
    $region26: #{decoder_forward.4} parent=1 // pred_check
      _
    $region27: #{decoder_forward.4} parent=1 // pred_check_branch
      %443 = sbr.rel (0) target = $region29
    $region28: #{decoder_forward.4} parent=1 // pred_region
      _
    $region29: #{decoder_forward.4} parent=1 // pred_fallthru
      _
    %444 = vsyncpa [#allocation3], 1
    %445 = vsyncpa [#allocation5], 1

// kernel: decoder_forward.5
$region0: #{decoder_forward.5}
  #allocation0 [shape = 'u32[]', space=smem, size = 0x4, offset = 0x4, fixed_abs, tag = 'smem constant byte address 0x4 - core index']
  #allocation1 [shape = 'u32[72,128]{1,0:T(1,128)}', space=vmem, size = 0x9000, scoped, tag = 'internal scratch']
  %s0 = inlined_call_operand.vmem [shape: bf16[6400,1152], index: 0, kind: input, shape index: {}]
  %s1 = inlined_call_operand.vmem [shape: bf16[1152,128], index: 1, kind: input, shape index: {}]
  %s2 = inlined_call_operand.vmem [shape: f32[1,128], index: 2, kind: input, shape index: {}]
  %s3 = inlined_call_operand.vmem [shape: bf16[6400,128], index: 3, kind: output, shape index: {}]
  %s4 = sld [smem:[#allocation0]]
  $region45: #{decoder_forward.5} parent=0
    _
  %s6 = ssub.s32 1, %s4
  %s7 = scalar_select 0, %s6, %s4
  loop: start=0, step=1, limit=27
  $region2: #{decoder_forward.5} parent=0 // loop_pre_header
    _
  $region3: #{decoder_forward.5} parent=0 // loop_header
    %s9 = sphi 0, %s13
    %p10 = scmp.ge.s32.totalorder %s9, 27
    %s16 = sphi 0, %s28
    %s17 = sphi 0, %s24
    %s18 = sphi 0, %s16
    %s19 = sphi 0, %s17
    %s20 = sphi 0, %s18
    %s21 = sphi 0, %s19
    %s31 = sphi 0, %s33
    %s34 = sphi 0, %s31
    %s35 = sphi 0, %s34
    %s51 = sphi 0, %s35
    %s57 = sphi 0, %s59
    %s60 = sphi 0, %s57
    %s61 = sphi 0, %s60
    %s77 = sphi 0, %s61
    %s83 = sphi 0, %s85
    %s86 = sphi 0, %s83
    %s87 = sphi 0, %s86
    %s103 = sphi 0, %s87
    %s111 = sphi 0, %s113
    %s114 = sphi 0, %s111
    %s115 = sphi 0, %s114
    %s131 = sphi 0, %s115
  $region4: #{decoder_forward.5} parent=0 // loop_header_branch
    %12 = sbr.rel (%p10) target = $region8
  $region5: #{decoder_forward.5} parent=0 // loop_body
    %s14 = ssub.s32 %s9, 1
    %s15 = ssub.s32 %s9, 2
    %s22 = sadd.s32 1, %s17
    %p23 = scmp.ge.s32.totalorder %s22, 1
    %s24 = scalar_select %p23, 0, %s22
    %s25 = sadd.s32 1, %s16
    %s26 = scalar_select %p23, %s25, %s16
    %p27 = scmp.ge.s32.totalorder %s26, 25
    %s28 = scalar_select %p27, 0, %s26
    %s29 = ssub.s32 %s16, %s28
    %p30 = scmp.eq.s32.totalorder %s29, 0
    %s32 = sadd.s32 %s31, 1
    %s33 = scalar_select %p30, %s31, %s32
    %p36 = pneg %p30
    %p37 = scmp.eq.s32.totalorder %s9, 24
    %p38 = por %p36, %p37
    %p39 = scmp.ne.s32.totalorder %s31, %s34
    %p40 = scmp.eq.s32.totalorder %s9, 0
    %p41 = por %p39, %p40
    %p42 = scmp.ne.s32.totalorder %s31, %s34
    %p43 = scmp.eq.s32.totalorder %s14, 24
    %p44 = por %p42, %p43
    %p45 = scmp.ne.s32.totalorder %s34, %s35
    %p46 = scmp.eq.s32.totalorder %s14, 0
    %p47 = por %p45, %p46
    %p48 = scmp.ne.s32.totalorder %s34, %s35
    %p49 = scmp.eq.s32.totalorder %s15, 24
    %p50 = por %p48, %p49
    %p52 = scmp.ne.s32.totalorder %s35, %s51
    %p53 = scmp.eq.s32.totalorder %s15, 0
    %p54 = por %p52, %p53
    %s55 = ssub.s32 %s17, %s24
    %p56 = scmp.eq.s32.totalorder %s55, 0
    %s58 = sadd.s32 %s57, 1
    %s59 = scalar_select %p56, %s57, %s58
    %p62 = pneg %p56
    %p63 = scmp.eq.s32.totalorder %s9, 24
    %p64 = por %p62, %p63
    %p65 = scmp.ne.s32.totalorder %s57, %s60
    %p66 = scmp.eq.s32.totalorder %s9, 0
    %p67 = por %p65, %p66
    %p68 = scmp.ne.s32.totalorder %s57, %s60
    %p69 = scmp.eq.s32.totalorder %s14, 24
    %p70 = por %p68, %p69
    %p71 = scmp.ne.s32.totalorder %s60, %s61
    %p72 = scmp.eq.s32.totalorder %s14, 0
    %p73 = por %p71, %p72
    %p74 = scmp.ne.s32.totalorder %s60, %s61
    %p75 = scmp.eq.s32.totalorder %s15, 24
    %p76 = por %p74, %p75
    %p78 = scmp.ne.s32.totalorder %s61, %s77
    %p79 = scmp.eq.s32.totalorder %s15, 0
    %p80 = por %p78, %p79
    %s81 = ssub.s32 %s17, %s24
    %p82 = scmp.eq.s32.totalorder %s81, 0
    %s84 = sadd.s32 %s83, 1
    %s85 = scalar_select %p82, %s83, %s84
    %p88 = pneg %p82
    %p89 = scmp.eq.s32.totalorder %s9, 24
    %p90 = por %p88, %p89
    %p91 = scmp.ne.s32.totalorder %s83, %s86
    %p92 = scmp.eq.s32.totalorder %s9, 0
    %p93 = por %p91, %p92
    %p94 = scmp.ne.s32.totalorder %s83, %s86
    %p95 = scmp.eq.s32.totalorder %s14, 24
    %p96 = por %p94, %p95
    %p97 = scmp.ne.s32.totalorder %s86, %s87
    %p98 = scmp.eq.s32.totalorder %s14, 0
    %p99 = por %p97, %p98
    %p100 = scmp.ne.s32.totalorder %s86, %s87
    %p101 = scmp.eq.s32.totalorder %s15, 24
    %p102 = por %p100, %p101
    %p104 = scmp.ne.s32.totalorder %s87, %s103
    %p105 = scmp.eq.s32.totalorder %s15, 0
    %p106 = por %p104, %p105
    %s107 = ssub.s32 %s16, %s28
    %s108 = ssub.s32 %s17, %s24
    %s109 = sor.u32 %s107, %s108
    %p110 = scmp.eq.s32.totalorder %s109, 0
    %s112 = sadd.s32 %s111, 1
    %s113 = scalar_select %p110, %s111, %s112
    %p116 = pneg %p110
    %p117 = scmp.eq.s32.totalorder %s9, 24
    %p118 = por %p116, %p117
    %p119 = scmp.ne.s32.totalorder %s111, %s114
    %p120 = scmp.eq.s32.totalorder %s9, 0
    %p121 = por %p119, %p120
    %p122 = scmp.ne.s32.totalorder %s111, %s114
    %p123 = scmp.eq.s32.totalorder %s14, 24
    %p124 = por %p122, %p123
    %p125 = scmp.ne.s32.totalorder %s114, %s115
    %p126 = scmp.eq.s32.totalorder %s14, 0
    %p127 = por %p125, %p126
    %p128 = scmp.ne.s32.totalorder %s114, %s115
    %p129 = scmp.eq.s32.totalorder %s15, 24
    %p130 = por %p128, %p129
    %p132 = scmp.ne.s32.totalorder %s115, %s131
    %p133 = scmp.eq.s32.totalorder %s15, 0
    %p134 = por %p132, %p133
    %p135 = scmp.le.s32.totalorder 1, %s9
    %p136 = scmp.lt.s32.totalorder %s9, 26
    %p137 = pnand %p135, %p136
    %p138 = pneg %p137
    // Predicated region
    $region9: #{decoder_forward.5} parent=5 // pred_check
      _
    $region10: #{decoder_forward.5} parent=5 // pred_check_branch
      %140 = sbr.rel (%p137) target = $region12
    $region11: #{decoder_forward.5} parent=5 // pred_region
      %s141 = ssub.s32 %s9, 1
      // Predicated region
      $region13: #{decoder_forward.5} parent=11 // pred_check
        %p142 = pneg %p73
      $region14: #{decoder_forward.5} parent=11 // pred_check_branch
        %144 = sbr.rel (%p142) target = $region16
      $region15: #{decoder_forward.5} parent=11 // pred_region
        %p145 = scmp.lt.s32.totalorder %s19, 0
        %s146 = scalar_select %p145, %s19, 0
        %s147 = smul.addr %s146, 4
        %s148 = scalar_lea.vmem %s1, %s147
      $region16: #{decoder_forward.5} parent=11 // pred_fallthru
        _
      // Predicated region
      $region17: #{decoder_forward.5} parent=11 // pred_check
        %p149 = pneg %p99
      $region18: #{decoder_forward.5} parent=11 // pred_check_branch
        %151 = sbr.rel (%p149) target = $region20
      $region19: #{decoder_forward.5} parent=11 // pred_region
        %p152 = scmp.lt.s32.totalorder %s19, 0
        %s153 = scalar_select %p152, %s19, 0
        %s154 = scalar_lea.vmem %s2, %s153
      $region20: #{decoder_forward.5} parent=11 // pred_fallthru
        _
    $region12: #{decoder_forward.5} parent=5 // pred_fallthru
      _
    %p155 = scmp.lt.s32.totalorder %s9, 25
    // Predicated region
    $region21: #{decoder_forward.5} parent=5 // pred_check
      %p156 = pneg %p155
    $region22: #{decoder_forward.5} parent=5 // pred_check_branch
      %158 = sbr.rel (%p156) target = $region24
    $region23: #{decoder_forward.5} parent=5 // pred_region
      // Predicated region
      $region25: #{decoder_forward.5} parent=23 // pred_check
        %p159 = pneg %p41
      $region26: #{decoder_forward.5} parent=23 // pred_check_branch
        %161 = sbr.rel (%p159) target = $region28
      $region27: #{decoder_forward.5} parent=23 // pred_region
        %s162 = smul.u32 32, %s16
        %p163 = scmp.lt.s32.totalorder %s162, 799
        %s164 = scalar_select %p163, %s162, 799
        %s165 = smul.addr %s164, 9
        %s166 = smul.addr %s165, 4
        %s167 = scalar_lea.vmem %s0, %s166
        %s168 = smul.u32 32, %s16
      $region28: #{decoder_forward.5} parent=23 // pred_fallthru
        _
    $region24: #{decoder_forward.5} parent=5 // pred_fallthru
      _
    %p169 = scmp.le.s32.totalorder 1, %s9
    %p170 = scmp.lt.s32.totalorder %s9, 26
    %p171 = pnand %p169, %p170
    %p172 = pneg %p171
    // Predicated region
    $region29: #{decoder_forward.5} parent=5 // pred_check
      _
    $region30: #{decoder_forward.5} parent=5 // pred_check_branch
      %174 = sbr.rel (%p171) target = $region32
    $region31: #{decoder_forward.5} parent=5 // pred_region
      %s175 = ssub.s32 %s9, 1
      %s176 = smul.u32 32, %s18
      %p177 = scmp.lt.s32.totalorder %s176, 799
      %s178 = scalar_select %p177, %s176, 799
      %s179 = smul.addr %s178, 9
      %s180 = smul.addr %s179, 4
      %s181 = scalar_lea.vmem %s0, %s180
      %p182 = pneg %p47
      %p183 = pneg %p44
      %p184 = scmp.lt.s32.totalorder %s19, 0
      %s185 = scalar_select %p184, %s19, 0
      %s186 = smul.addr %s185, 4
      %s187 = scalar_lea.vmem %s1, %s186
      %p188 = pneg %p73
      %p189 = pneg %p70
      %p190 = scmp.lt.s32.totalorder %s19, 0
      %s191 = scalar_select %p190, %s19, 0
      %s192 = scalar_lea.vmem %s2, %s191
      %p193 = pneg %p99
      %p194 = pneg %p96
      %p195 = pneg %p127
      %p196 = pneg %p124
      %s197 = smul.u32 32, %s18
      %p198 = scmp.lt.s32.totalorder %s197, 799
      %s199 = scalar_select %p198, %s197, 799
      %p200 = scmp.lt.s32.totalorder %s19, 0
      %s201 = scalar_select %p200, %s19, 0
      %s202 = sadd.s32 %s201, %s199
      %s203 = smul.addr %s202, 4
      %s204 = scalar_lea.vmem %s3, %s203
      %s205 = smul.u32 32, %s18
      %p206 = scmp.lt.s32.totalorder %s205, 799
      %s207 = scalar_select %p206, %s205, 799
      %s208 = smul.addr %s207, 9
      %s209 = smul.addr %s208, 4
      %s210 = scalar_lea.vmem %s0, %s209
      %s211 = smul.u32 32, %s18
      %p212 = scmp.lt.s32.totalorder %s19, 0
      %s213 = scalar_select %p212, %s19, 0
      %s214 = smul.addr %s213, 4
      %s215 = scalar_lea.vmem %s1, %s214
      %p216 = scmp.lt.s32.totalorder %s19, 0
      %s217 = scalar_select %p216, %s19, 0
      %s218 = scalar_lea.vmem %s2, %s217
      %s219 = smul.u32 32, %s18
      %p220 = scmp.lt.s32.totalorder %s219, 799
      %s221 = scalar_select %p220, %s219, 799
      %p222 = scmp.lt.s32.totalorder %s19, 0
      %s223 = scalar_select %p222, %s19, 0
      %s224 = sadd.s32 %s223, %s221
      %s225 = smul.addr %s224, 4
      %s226 = scalar_lea.vmem %s3, %s225
      %s227 = smul.u32 32, %s18
      %v228 = vld [vmem:[%s210] sm:$0xff]
      %v229 = vld [vmem:[%s210 + $0x8] sm:$0xff]
      %v230 = vld [vmem:[%s210 + $0x10] sm:$0xff]
      %v231 = vld [vmem:[%s210 + $0x18] sm:$0xff]
      %v232 = vld [vmem:[%s210 + $0x20] sm:$0xf]
      %v233 = vld [vmem:[%s210 + $0x24] sm:$0xff]
      %v234 = vld [vmem:[%s210 + $0x2c] sm:$0xff]
      %v235 = vld [vmem:[%s210 + $0x34] sm:$0xff]
      %v236 = vld [vmem:[%s210 + $0x3c] sm:$0xff]
      %v237 = vld [vmem:[%s210 + $0x44] sm:$0xf]
      %v238 = vld [vmem:[%s210 + $0x48] sm:$0xff]
      %v239 = vld [vmem:[%s210 + $0x50] sm:$0xff]
      %v240 = vld [vmem:[%s210 + $0x58] sm:$0xff]
      %v241 = vld [vmem:[%s210 + $0x60] sm:$0xff]
      %v242 = vld [vmem:[%s210 + $0x68] sm:$0xf]
      %v243 = vld [vmem:[%s210 + $0x6c] sm:$0xff]
      %v244 = vld [vmem:[%s210 + $0x74] sm:$0xff]
      %v245 = vld [vmem:[%s210 + $0x7c] sm:$0xff]
      %v246 = vld [vmem:[%s210 + $0x84] sm:$0xff]
      %v247 = vld [vmem:[%s210 + $0x8c] sm:$0xf]
      %v248 = vld [vmem:[%s210 + $0x90] sm:$0xff]
      %v249 = vld [vmem:[%s210 + $0x98] sm:$0xff]
      %v250 = vld [vmem:[%s210 + $0xa0] sm:$0xff]
      %v251 = vld [vmem:[%s210 + $0xa8] sm:$0xff]
      %v252 = vld [vmem:[%s210 + $0xb0] sm:$0xf]
      %v253 = vld [vmem:[%s210 + $0xb4] sm:$0xff]
      %v254 = vld [vmem:[%s210 + $0xbc] sm:$0xff]
      %v255 = vld [vmem:[%s210 + $0xc4] sm:$0xff]
      %v256 = vld [vmem:[%s210 + $0xcc] sm:$0xff]
      %v257 = vld [vmem:[%s210 + $0xd4] sm:$0xf]
      %v258 = vld [vmem:[%s210 + $0xd8] sm:$0xff]
      %v259 = vld [vmem:[%s210 + $0xe0] sm:$0xff]
      %v260 = vld [vmem:[%s210 + $0xe8] sm:$0xff]
      %v261 = vld [vmem:[%s210 + $0xf0] sm:$0xff]
      %v262 = vld [vmem:[%s210 + $0xf8] sm:$0xf]
      %v263 = vld [vmem:[%s210 + $0xfc] sm:$0xff]
      %v264 = vld [vmem:[%s210 + $0x104] sm:$0xff]
      %v265 = vld [vmem:[%s210 + $0x10c] sm:$0xff]
      %v266 = vld [vmem:[%s210 + $0x114] sm:$0xff]
      %v267 = vld [vmem:[%s210 + $0x11c] sm:$0xf]
      %v268 = vld [vmem:[%s210 + $0x120] sm:$0xff]
      %v269 = vld [vmem:[%s210 + $0x128] sm:$0xff]
      %v270 = vld [vmem:[%s210 + $0x130] sm:$0xff]
      %v271 = vld [vmem:[%s210 + $0x138] sm:$0xff]
      %v272 = vld [vmem:[%s210 + $0x140] sm:$0xf]
      %v273 = vld [vmem:[%s210 + $0x144] sm:$0xff]
      %v274 = vld [vmem:[%s210 + $0x14c] sm:$0xff]
      %v275 = vld [vmem:[%s210 + $0x154] sm:$0xff]
      %v276 = vld [vmem:[%s210 + $0x15c] sm:$0xff]
      %v277 = vld [vmem:[%s210 + $0x164] sm:$0xf]
      %v278 = vld [vmem:[%s210 + $0x168] sm:$0xff]
      %v279 = vld [vmem:[%s210 + $0x170] sm:$0xff]
      %v280 = vld [vmem:[%s210 + $0x178] sm:$0xff]
      %v281 = vld [vmem:[%s210 + $0x180] sm:$0xff]
      %v282 = vld [vmem:[%s210 + $0x188] sm:$0xf]
      %v283 = vld [vmem:[%s210 + $0x18c] sm:$0xff]
      %v284 = vld [vmem:[%s210 + $0x194] sm:$0xff]
      %v285 = vld [vmem:[%s210 + $0x19c] sm:$0xff]
      %v286 = vld [vmem:[%s210 + $0x1a4] sm:$0xff]
      %v287 = vld [vmem:[%s210 + $0x1ac] sm:$0xf]
      %v288 = vld [vmem:[%s210 + $0x1b0] sm:$0xff]
      %v289 = vld [vmem:[%s210 + $0x1b8] sm:$0xff]
      %v290 = vld [vmem:[%s210 + $0x1c0] sm:$0xff]
      %v291 = vld [vmem:[%s210 + $0x1c8] sm:$0xff]
      %v292 = vld [vmem:[%s210 + $0x1d0] sm:$0xf]
      %v293 = vld [vmem:[%s210 + $0x1d4] sm:$0xff]
      %v294 = vld [vmem:[%s210 + $0x1dc] sm:$0xff]
      %v295 = vld [vmem:[%s210 + $0x1e4] sm:$0xff]
      %v296 = vld [vmem:[%s210 + $0x1ec] sm:$0xff]
      %v297 = vld [vmem:[%s210 + $0x1f4] sm:$0xf]
      %v298 = vld [vmem:[%s210 + $0x1f8] sm:$0xff]
      %v299 = vld [vmem:[%s210 + $0x200] sm:$0xff]
      %v300 = vld [vmem:[%s210 + $0x208] sm:$0xff]
      %v301 = vld [vmem:[%s210 + $0x210] sm:$0xff]
      %v302 = vld [vmem:[%s210 + $0x218] sm:$0xf]
      %v303 = vld [vmem:[%s210 + $0x21c] sm:$0xff]
      %v304 = vld [vmem:[%s210 + $0x224] sm:$0xff]
      %v305 = vld [vmem:[%s210 + $0x22c] sm:$0xff]
      %v306 = vld [vmem:[%s210 + $0x234] sm:$0xff]
      %v307 = vld [vmem:[%s210 + $0x23c] sm:$0xf]
      %v308 = vld [vmem:[%s210 + $0x240] sm:$0xff]
      %v309 = vld [vmem:[%s210 + $0x248] sm:$0xff]
      %v310 = vld [vmem:[%s210 + $0x250] sm:$0xff]
      %v311 = vld [vmem:[%s210 + $0x258] sm:$0xff]
      %v312 = vld [vmem:[%s210 + $0x260] sm:$0xf]
      %v313 = vld [vmem:[%s210 + $0x264] sm:$0xff]
      %v314 = vld [vmem:[%s210 + $0x26c] sm:$0xff]
      %v315 = vld [vmem:[%s210 + $0x274] sm:$0xff]
      %v316 = vld [vmem:[%s210 + $0x27c] sm:$0xff]
      %v317 = vld [vmem:[%s210 + $0x284] sm:$0xf]
      %v318 = vld [vmem:[%s210 + $0x288] sm:$0xff]
      %v319 = vld [vmem:[%s210 + $0x290] sm:$0xff]
      %v320 = vld [vmem:[%s210 + $0x298] sm:$0xff]
      %v321 = vld [vmem:[%s210 + $0x2a0] sm:$0xff]
      %v322 = vld [vmem:[%s210 + $0x2a8] sm:$0xf]
      %v323 = vld [vmem:[%s210 + $0x2ac] sm:$0xff]
      %v324 = vld [vmem:[%s210 + $0x2b4] sm:$0xff]
      %v325 = vld [vmem:[%s210 + $0x2bc] sm:$0xff]
      %v326 = vld [vmem:[%s210 + $0x2c4] sm:$0xff]
      %v327 = vld [vmem:[%s210 + $0x2cc] sm:$0xf]
      %v328 = vld [vmem:[%s210 + $0x2d0] sm:$0xff]
      %v329 = vld [vmem:[%s210 + $0x2d8] sm:$0xff]
      %v330 = vld [vmem:[%s210 + $0x2e0] sm:$0xff]
      %v331 = vld [vmem:[%s210 + $0x2e8] sm:$0xff]
      %v332 = vld [vmem:[%s210 + $0x2f0] sm:$0xf]
      %v333 = vld [vmem:[%s210 + $0x2f4] sm:$0xff]
      %v334 = vld [vmem:[%s210 + $0x2fc] sm:$0xff]
      %v335 = vld [vmem:[%s210 + $0x304] sm:$0xff]
      %v336 = vld [vmem:[%s210 + $0x30c] sm:$0xff]
      %v337 = vld [vmem:[%s210 + $0x314] sm:$0xf]
      %v338 = vld [vmem:[%s210 + $0x318] sm:$0xff]
      %v339 = vld [vmem:[%s210 + $0x320] sm:$0xff]
      %v340 = vld [vmem:[%s210 + $0x328] sm:$0xff]
      %v341 = vld [vmem:[%s210 + $0x330] sm:$0xff]
      %v342 = vld [vmem:[%s210 + $0x338] sm:$0xf]
      %v343 = vld [vmem:[%s210 + $0x33c] sm:$0xff]
      %v344 = vld [vmem:[%s210 + $0x344] sm:$0xff]
      %v345 = vld [vmem:[%s210 + $0x34c] sm:$0xff]
      %v346 = vld [vmem:[%s210 + $0x354] sm:$0xff]
      %v347 = vld [vmem:[%s210 + $0x35c] sm:$0xf]
      %v348 = vld [vmem:[%s210 + $0x360] sm:$0xff]
      %v349 = vld [vmem:[%s210 + $0x368] sm:$0xff]
      %v350 = vld [vmem:[%s210 + $0x370] sm:$0xff]
      %v351 = vld [vmem:[%s210 + $0x378] sm:$0xff]
      %v352 = vld [vmem:[%s210 + $0x380] sm:$0xf]
      %v353 = vld [vmem:[%s210 + $0x384] sm:$0xff]
      %v354 = vld [vmem:[%s210 + $0x38c] sm:$0xff]
      %v355 = vld [vmem:[%s210 + $0x394] sm:$0xff]
      %v356 = vld [vmem:[%s210 + $0x39c] sm:$0xff]
      %v357 = vld [vmem:[%s210 + $0x3a4] sm:$0xf]
      %v358 = vld [vmem:[%s210 + $0x3a8] sm:$0xff]
      %v359 = vld [vmem:[%s210 + $0x3b0] sm:$0xff]
      %v360 = vld [vmem:[%s210 + $0x3b8] sm:$0xff]
      %v361 = vld [vmem:[%s210 + $0x3c0] sm:$0xff]
      %v362 = vld [vmem:[%s210 + $0x3c8] sm:$0xf]
      %v363 = vld [vmem:[%s210 + $0x3cc] sm:$0xff]
      %v364 = vld [vmem:[%s210 + $0x3d4] sm:$0xff]
      %v365 = vld [vmem:[%s210 + $0x3dc] sm:$0xff]
      %v366 = vld [vmem:[%s210 + $0x3e4] sm:$0xff]
      %v367 = vld [vmem:[%s210 + $0x3ec] sm:$0xf]
      %v368 = vld [vmem:[%s210 + $0x3f0] sm:$0xff]
      %v369 = vld [vmem:[%s210 + $0x3f8] sm:$0xff]
      %v370 = vld [vmem:[%s210 + $0x400] sm:$0xff]
      %v371 = vld [vmem:[%s210 + $0x408] sm:$0xff]
      %v372 = vld [vmem:[%s210 + $0x410] sm:$0xf]
      %v373 = vld [vmem:[%s210 + $0x414] sm:$0xff]
      %v374 = vld [vmem:[%s210 + $0x41c] sm:$0xff]
      %v375 = vld [vmem:[%s210 + $0x424] sm:$0xff]
      %v376 = vld [vmem:[%s210 + $0x42c] sm:$0xff]
      %v377 = vld [vmem:[%s210 + $0x434] sm:$0xf]
      %v378 = vld [vmem:[%s210 + $0x438] sm:$0xff]
      %v379 = vld [vmem:[%s210 + $0x440] sm:$0xff]
      %v380 = vld [vmem:[%s210 + $0x448] sm:$0xff]
      %v381 = vld [vmem:[%s210 + $0x450] sm:$0xff]
      %v382 = vld [vmem:[%s210 + $0x458] sm:$0xf]
      %v383 = vld [vmem:[%s210 + $0x45c] sm:$0xff]
      %v384 = vld [vmem:[%s210 + $0x464] sm:$0xff]
      %v385 = vld [vmem:[%s210 + $0x46c] sm:$0xff]
      %v386 = vld [vmem:[%s210 + $0x474] sm:$0xff]
      %v387 = vld [vmem:[%s210 + $0x47c] sm:$0xf]
      %v388 = vld [vmem:[%s215] sm:$0xf]
      %v389 = vld [vmem:[%s215 + $0x4] sm:$0xf]
      %v390 = vld [vmem:[%s215 + $0x8] sm:$0xf]
      %v391 = vld [vmem:[%s215 + $0xc] sm:$0xf]
      %v392 = vld [vmem:[%s215 + $0x10] sm:$0xf]
      %v393 = vld [vmem:[%s215 + $0x14] sm:$0xf]
      %v394 = vld [vmem:[%s215 + $0x18] sm:$0xf]
      %v395 = vld [vmem:[%s215 + $0x1c] sm:$0xf]
      %v396 = vld [vmem:[%s215 + $0x20] sm:$0xf]
      %v397 = vld [vmem:[%s215 + $0x24] sm:$0xf]
      %v398 = vld [vmem:[%s215 + $0x28] sm:$0xf]
      %v399 = vld [vmem:[%s215 + $0x2c] sm:$0xf]
      %v400 = vld [vmem:[%s215 + $0x30] sm:$0xf]
      %v401 = vld [vmem:[%s215 + $0x34] sm:$0xf]
      %v402 = vld [vmem:[%s215 + $0x38] sm:$0xf]
      %v403 = vld [vmem:[%s215 + $0x3c] sm:$0xf]
      %v404 = vld [vmem:[%s215 + $0x40] sm:$0xf]
      %v405 = vld [vmem:[%s215 + $0x44] sm:$0xf]
      %v406 = vld [vmem:[%s215 + $0x48] sm:$0xf]
      %v407 = vld [vmem:[%s215 + $0x4c] sm:$0xf]
      %v408 = vld [vmem:[%s215 + $0x50] sm:$0xf]
      %v409 = vld [vmem:[%s215 + $0x54] sm:$0xf]
      %v410 = vld [vmem:[%s215 + $0x58] sm:$0xf]
      %v411 = vld [vmem:[%s215 + $0x5c] sm:$0xf]
      %v412 = vld [vmem:[%s215 + $0x60] sm:$0xf]
      %v413 = vld [vmem:[%s215 + $0x64] sm:$0xf]
      %v414 = vld [vmem:[%s215 + $0x68] sm:$0xf]
      %v415 = vld [vmem:[%s215 + $0x6c] sm:$0xf]
      %v416 = vld [vmem:[%s215 + $0x70] sm:$0xf]
      %v417 = vld [vmem:[%s215 + $0x74] sm:$0xf]
      %v418 = vld [vmem:[%s215 + $0x78] sm:$0xf]
      %v419 = vld [vmem:[%s215 + $0x7c] sm:$0xf]
      %v420 = vld [vmem:[%s215 + $0x80] sm:$0xf]
      %v421 = vld [vmem:[%s215 + $0x84] sm:$0xf]
      %v422 = vld [vmem:[%s215 + $0x88] sm:$0xf]
      %v423 = vld [vmem:[%s215 + $0x8c] sm:$0xf]
      %v424 = vld [vmem:[%s215 + $0x90] sm:$0xf]
      %v425 = vld [vmem:[%s215 + $0x94] sm:$0xf]
      %v426 = vld [vmem:[%s215 + $0x98] sm:$0xf]
      %v427 = vld [vmem:[%s215 + $0x9c] sm:$0xf]
      %v428 = vld [vmem:[%s215 + $0xa0] sm:$0xf]
      %v429 = vld [vmem:[%s215 + $0xa4] sm:$0xf]
      %v430 = vld [vmem:[%s215 + $0xa8] sm:$0xf]
      %v431 = vld [vmem:[%s215 + $0xac] sm:$0xf]
      %v432 = vld [vmem:[%s215 + $0xb0] sm:$0xf]
      %v433 = vld [vmem:[%s215 + $0xb4] sm:$0xf]
      %v434 = vld [vmem:[%s215 + $0xb8] sm:$0xf]
      %v435 = vld [vmem:[%s215 + $0xbc] sm:$0xf]
      %v436 = vld [vmem:[%s215 + $0xc0] sm:$0xf]
      %v437 = vld [vmem:[%s215 + $0xc4] sm:$0xf]
      %v438 = vld [vmem:[%s215 + $0xc8] sm:$0xf]
      %v439 = vld [vmem:[%s215 + $0xcc] sm:$0xf]
      %v440 = vld [vmem:[%s215 + $0xd0] sm:$0xf]
      %v441 = vld [vmem:[%s215 + $0xd4] sm:$0xf]
      %v442 = vld [vmem:[%s215 + $0xd8] sm:$0xf]
      %v443 = vld [vmem:[%s215 + $0xdc] sm:$0xf]
      %v444 = vld [vmem:[%s215 + $0xe0] sm:$0xf]
      %v445 = vld [vmem:[%s215 + $0xe4] sm:$0xf]
      %v446 = vld [vmem:[%s215 + $0xe8] sm:$0xf]
      %v447 = vld [vmem:[%s215 + $0xec] sm:$0xf]
      %v448 = vld [vmem:[%s215 + $0xf0] sm:$0xf]
      %v449 = vld [vmem:[%s215 + $0xf4] sm:$0xf]
      %v450 = vld [vmem:[%s215 + $0xf8] sm:$0xf]
      %v451 = vld [vmem:[%s215 + $0xfc] sm:$0xf]
      %v452 = vld [vmem:[%s215 + $0x100] sm:$0xf]
      %v453 = vld [vmem:[%s215 + $0x104] sm:$0xf]
      %v454 = vld [vmem:[%s215 + $0x108] sm:$0xf]
      %v455 = vld [vmem:[%s215 + $0x10c] sm:$0xf]
      %v456 = vld [vmem:[%s215 + $0x110] sm:$0xf]
      %v457 = vld [vmem:[%s215 + $0x114] sm:$0xf]
      %v458 = vld [vmem:[%s215 + $0x118] sm:$0xf]
      %v459 = vld [vmem:[%s215 + $0x11c] sm:$0xf]
      %v460 = vld [vmem:[%s215 + $0x120] sm:$0xf]
      %v461 = vld [vmem:[%s215 + $0x124] sm:$0xf]
      %v462 = vld [vmem:[%s215 + $0x128] sm:$0xf]
      %v463 = vld [vmem:[%s215 + $0x12c] sm:$0xf]
      %v464 = vld [vmem:[%s215 + $0x130] sm:$0xf]
      %v465 = vld [vmem:[%s215 + $0x134] sm:$0xf]
      %v466 = vld [vmem:[%s215 + $0x138] sm:$0xf]
      %v467 = vld [vmem:[%s215 + $0x13c] sm:$0xf]
      %v468 = vld [vmem:[%s215 + $0x140] sm:$0xf]
      %v469 = vld [vmem:[%s215 + $0x144] sm:$0xf]
      %v470 = vld [vmem:[%s215 + $0x148] sm:$0xf]
      %v471 = vld [vmem:[%s215 + $0x14c] sm:$0xf]
      %v472 = vld [vmem:[%s215 + $0x150] sm:$0xf]
      %v473 = vld [vmem:[%s215 + $0x154] sm:$0xf]
      %v474 = vld [vmem:[%s215 + $0x158] sm:$0xf]
      %v475 = vld [vmem:[%s215 + $0x15c] sm:$0xf]
      %v476 = vld [vmem:[%s215 + $0x160] sm:$0xf]
      %v477 = vld [vmem:[%s215 + $0x164] sm:$0xf]
      %v478 = vld [vmem:[%s215 + $0x168] sm:$0xf]
      %v479 = vld [vmem:[%s215 + $0x16c] sm:$0xf]
      %v480 = vld [vmem:[%s215 + $0x170] sm:$0xf]
      %v481 = vld [vmem:[%s215 + $0x174] sm:$0xf]
      %v482 = vld [vmem:[%s215 + $0x178] sm:$0xf]
      %v483 = vld [vmem:[%s215 + $0x17c] sm:$0xf]
      %v484 = vld [vmem:[%s215 + $0x180] sm:$0xf]
      %v485 = vld [vmem:[%s215 + $0x184] sm:$0xf]
      %v486 = vld [vmem:[%s215 + $0x188] sm:$0xf]
      %v487 = vld [vmem:[%s215 + $0x18c] sm:$0xf]
      %v488 = vld [vmem:[%s215 + $0x190] sm:$0xf]
      %v489 = vld [vmem:[%s215 + $0x194] sm:$0xf]
      %v490 = vld [vmem:[%s215 + $0x198] sm:$0xf]
      %v491 = vld [vmem:[%s215 + $0x19c] sm:$0xf]
      %v492 = vld [vmem:[%s215 + $0x1a0] sm:$0xf]
      %v493 = vld [vmem:[%s215 + $0x1a4] sm:$0xf]
      %v494 = vld [vmem:[%s215 + $0x1a8] sm:$0xf]
      %v495 = vld [vmem:[%s215 + $0x1ac] sm:$0xf]
      %v496 = vld [vmem:[%s215 + $0x1b0] sm:$0xf]
      %v497 = vld [vmem:[%s215 + $0x1b4] sm:$0xf]
      %v498 = vld [vmem:[%s215 + $0x1b8] sm:$0xf]
      %v499 = vld [vmem:[%s215 + $0x1bc] sm:$0xf]
      %v500 = vld [vmem:[%s215 + $0x1c0] sm:$0xf]
      %v501 = vld [vmem:[%s215 + $0x1c4] sm:$0xf]
      %v502 = vld [vmem:[%s215 + $0x1c8] sm:$0xf]
      %v503 = vld [vmem:[%s215 + $0x1cc] sm:$0xf]
      %v504 = vld [vmem:[%s215 + $0x1d0] sm:$0xf]
      %v505 = vld [vmem:[%s215 + $0x1d4] sm:$0xf]
      %v506 = vld [vmem:[%s215 + $0x1d8] sm:$0xf]
      %v507 = vld [vmem:[%s215 + $0x1dc] sm:$0xf]
      %v508 = vld [vmem:[%s215 + $0x1e0] sm:$0xf]
      %v509 = vld [vmem:[%s215 + $0x1e4] sm:$0xf]
      %v510 = vld [vmem:[%s215 + $0x1e8] sm:$0xf]
      %v511 = vld [vmem:[%s215 + $0x1ec] sm:$0xf]
      %v512 = vld [vmem:[%s215 + $0x1f0] sm:$0xf]
      %v513 = vld [vmem:[%s215 + $0x1f4] sm:$0xf]
      %v514 = vld [vmem:[%s215 + $0x1f8] sm:$0xf]
      %v515 = vld [vmem:[%s215 + $0x1fc] sm:$0xf]
      %v516 = vld [vmem:[%s215 + $0x200] sm:$0xf]
      %v517 = vld [vmem:[%s215 + $0x204] sm:$0xf]
      %v518 = vld [vmem:[%s215 + $0x208] sm:$0xf]
      %v519 = vld [vmem:[%s215 + $0x20c] sm:$0xf]
      %v520 = vld [vmem:[%s215 + $0x210] sm:$0xf]
      %v521 = vld [vmem:[%s215 + $0x214] sm:$0xf]
      %v522 = vld [vmem:[%s215 + $0x218] sm:$0xf]
      %v523 = vld [vmem:[%s215 + $0x21c] sm:$0xf]
      %v524 = vld [vmem:[%s215 + $0x220] sm:$0xf]
      %v525 = vld [vmem:[%s215 + $0x224] sm:$0xf]
      %v526 = vld [vmem:[%s215 + $0x228] sm:$0xf]
      %v527 = vld [vmem:[%s215 + $0x22c] sm:$0xf]
      %v528 = vld [vmem:[%s215 + $0x230] sm:$0xf]
      %v529 = vld [vmem:[%s215 + $0x234] sm:$0xf]
      %v530 = vld [vmem:[%s215 + $0x238] sm:$0xf]
      %v531 = vld [vmem:[%s215 + $0x23c] sm:$0xf]
      %v532 = vld [vmem:[%s218] sm:$0x1]
      %v534 = vperm.slane %v532, 0
      %v696 = vunpack.c.l.b16 %v228
      %v697 = vunpack.c.h.b16 %v228
      %v698 = vunpack.c.l.b16 %v229
      %v699 = vunpack.c.h.b16 %v229
      %v700 = vunpack.c.l.b16 %v230
      %v701 = vunpack.c.h.b16 %v230
      %v702 = vunpack.c.l.b16 %v231
      %v703 = vunpack.c.h.b16 %v231
      %v704 = vunpack.c.l.b16 %v232
      %v705 = vunpack.c.l.b16 %v233
      %v706 = vunpack.c.h.b16 %v233
      %v707 = vunpack.c.l.b16 %v234
      %v708 = vunpack.c.h.b16 %v234
      %v709 = vunpack.c.l.b16 %v235
      %v710 = vunpack.c.h.b16 %v235
      %v711 = vunpack.c.l.b16 %v236
      %v712 = vunpack.c.h.b16 %v236
      %v713 = vunpack.c.l.b16 %v237
      %v714 = vunpack.c.l.b16 %v238
      %v715 = vunpack.c.h.b16 %v238
      %v716 = vunpack.c.l.b16 %v239
      %v717 = vunpack.c.h.b16 %v239
      %v718 = vunpack.c.l.b16 %v240
      %v719 = vunpack.c.h.b16 %v240
      %v720 = vunpack.c.l.b16 %v241
      %v721 = vunpack.c.h.b16 %v241
      %v722 = vunpack.c.l.b16 %v242
      %v723 = vunpack.c.l.b16 %v243
      %v724 = vunpack.c.h.b16 %v243
      %v725 = vunpack.c.l.b16 %v244
      %v726 = vunpack.c.h.b16 %v244
      %v727 = vunpack.c.l.b16 %v245
      %v728 = vunpack.c.h.b16 %v245
      %v729 = vunpack.c.l.b16 %v246
      %v730 = vunpack.c.h.b16 %v246
      %v731 = vunpack.c.l.b16 %v247
      %v732 = vunpack.c.l.b16 %v248
      %v733 = vunpack.c.h.b16 %v248
      %v734 = vunpack.c.l.b16 %v249
      %v735 = vunpack.c.h.b16 %v249
      %v736 = vunpack.c.l.b16 %v250
      %v737 = vunpack.c.h.b16 %v250
      %v738 = vunpack.c.l.b16 %v251
      %v739 = vunpack.c.h.b16 %v251
      %v740 = vunpack.c.l.b16 %v252
      %v741 = vunpack.c.l.b16 %v253
      %v742 = vunpack.c.h.b16 %v253
      %v743 = vunpack.c.l.b16 %v254
      %v744 = vunpack.c.h.b16 %v254
      %v745 = vunpack.c.l.b16 %v255
      %v746 = vunpack.c.h.b16 %v255
      %v747 = vunpack.c.l.b16 %v256
      %v748 = vunpack.c.h.b16 %v256
      %v749 = vunpack.c.l.b16 %v257
      %v750 = vunpack.c.l.b16 %v258
      %v751 = vunpack.c.h.b16 %v258
      %v752 = vunpack.c.l.b16 %v259
      %v753 = vunpack.c.h.b16 %v259
      %v754 = vunpack.c.l.b16 %v260
      %v755 = vunpack.c.h.b16 %v260
      %v756 = vunpack.c.l.b16 %v261
      %v757 = vunpack.c.h.b16 %v261
      %v758 = vunpack.c.l.b16 %v262
      %v759 = vunpack.c.l.b16 %v263
      %v760 = vunpack.c.h.b16 %v263
      %v761 = vunpack.c.l.b16 %v264
      %v762 = vunpack.c.h.b16 %v264
      %v763 = vunpack.c.l.b16 %v265
      %v764 = vunpack.c.h.b16 %v265
      %v765 = vunpack.c.l.b16 %v266
      %v766 = vunpack.c.h.b16 %v266
      %v767 = vunpack.c.l.b16 %v267
      %v768 = vunpack.c.l.b16 %v268
      %v769 = vunpack.c.h.b16 %v268
      %v770 = vunpack.c.l.b16 %v269
      %v771 = vunpack.c.h.b16 %v269
      %v772 = vunpack.c.l.b16 %v270
      %v773 = vunpack.c.h.b16 %v270
      %v774 = vunpack.c.l.b16 %v271
      %v775 = vunpack.c.h.b16 %v271
      %v776 = vunpack.c.l.b16 %v272
      %v777 = vunpack.c.l.b16 %v273
      %v778 = vunpack.c.h.b16 %v273
      %v779 = vunpack.c.l.b16 %v274
      %v780 = vunpack.c.h.b16 %v274
      %v781 = vunpack.c.l.b16 %v275
      %v782 = vunpack.c.h.b16 %v275
      %v783 = vunpack.c.l.b16 %v276
      %v784 = vunpack.c.h.b16 %v276
      %v785 = vunpack.c.l.b16 %v277
      %v786 = vunpack.c.l.b16 %v278
      %v787 = vunpack.c.h.b16 %v278
      %v788 = vunpack.c.l.b16 %v279
      %v789 = vunpack.c.h.b16 %v279
      %v790 = vunpack.c.l.b16 %v280
      %v791 = vunpack.c.h.b16 %v280
      %v792 = vunpack.c.l.b16 %v281
      %v793 = vunpack.c.h.b16 %v281
      %v794 = vunpack.c.l.b16 %v282
      %v795 = vunpack.c.l.b16 %v283
      %v796 = vunpack.c.h.b16 %v283
      %v797 = vunpack.c.l.b16 %v284
      %v798 = vunpack.c.h.b16 %v284
      %v799 = vunpack.c.l.b16 %v285
      %v800 = vunpack.c.h.b16 %v285
      %v801 = vunpack.c.l.b16 %v286
      %v802 = vunpack.c.h.b16 %v286
      %v803 = vunpack.c.l.b16 %v287
      %v804 = vunpack.c.l.b16 %v288
      %v805 = vunpack.c.h.b16 %v288
      %v806 = vunpack.c.l.b16 %v289
      %v807 = vunpack.c.h.b16 %v289
      %v808 = vunpack.c.l.b16 %v290
      %v809 = vunpack.c.h.b16 %v290
      %v810 = vunpack.c.l.b16 %v291
      %v811 = vunpack.c.h.b16 %v291
      %v812 = vunpack.c.l.b16 %v292
      %v813 = vunpack.c.l.b16 %v293
      %v814 = vunpack.c.h.b16 %v293
      %v815 = vunpack.c.l.b16 %v294
      %v816 = vunpack.c.h.b16 %v294
      %v817 = vunpack.c.l.b16 %v295
      %v818 = vunpack.c.h.b16 %v295
      %v819 = vunpack.c.l.b16 %v296
      %v820 = vunpack.c.h.b16 %v296
      %v821 = vunpack.c.l.b16 %v297
      %v822 = vunpack.c.l.b16 %v298
      %v823 = vunpack.c.h.b16 %v298
      %v824 = vunpack.c.l.b16 %v299
      %v825 = vunpack.c.h.b16 %v299
      %v826 = vunpack.c.l.b16 %v300
      %v827 = vunpack.c.h.b16 %v300
      %v828 = vunpack.c.l.b16 %v301
      %v829 = vunpack.c.h.b16 %v301
      %v830 = vunpack.c.l.b16 %v302
      %v831 = vunpack.c.l.b16 %v303
      %v832 = vunpack.c.h.b16 %v303
      %v833 = vunpack.c.l.b16 %v304
      %v834 = vunpack.c.h.b16 %v304
      %v835 = vunpack.c.l.b16 %v305
      %v836 = vunpack.c.h.b16 %v305
      %v837 = vunpack.c.l.b16 %v306
      %v838 = vunpack.c.h.b16 %v306
      %v839 = vunpack.c.l.b16 %v307
      %v840 = vunpack.c.l.b16 %v308
      %v841 = vunpack.c.h.b16 %v308
      %v842 = vunpack.c.l.b16 %v309
      %v843 = vunpack.c.h.b16 %v309
      %v844 = vunpack.c.l.b16 %v310
      %v845 = vunpack.c.h.b16 %v310
      %v846 = vunpack.c.l.b16 %v311
      %v847 = vunpack.c.h.b16 %v311
      %v848 = vunpack.c.l.b16 %v312
      %v849 = vunpack.c.l.b16 %v313
      %v850 = vunpack.c.h.b16 %v313
      %v851 = vunpack.c.l.b16 %v314
      %v852 = vunpack.c.h.b16 %v314
      %v853 = vunpack.c.l.b16 %v315
      %v854 = vunpack.c.h.b16 %v315
      %v855 = vunpack.c.l.b16 %v316
      %v856 = vunpack.c.h.b16 %v316
      %v857 = vunpack.c.l.b16 %v317
      %v858 = vunpack.c.l.b16 %v318
      %v859 = vunpack.c.h.b16 %v318
      %v860 = vunpack.c.l.b16 %v319
      %v861 = vunpack.c.h.b16 %v319
      %v862 = vunpack.c.l.b16 %v320
      %v863 = vunpack.c.h.b16 %v320
      %v864 = vunpack.c.l.b16 %v321
      %v865 = vunpack.c.h.b16 %v321
      %v866 = vunpack.c.l.b16 %v322
      %v867 = vunpack.c.l.b16 %v323
      %v868 = vunpack.c.h.b16 %v323
      %v869 = vunpack.c.l.b16 %v324
      %v870 = vunpack.c.h.b16 %v324
      %v871 = vunpack.c.l.b16 %v325
      %v872 = vunpack.c.h.b16 %v325
      %v873 = vunpack.c.l.b16 %v326
      %v874 = vunpack.c.h.b16 %v326
      %v875 = vunpack.c.l.b16 %v327
      %v876 = vunpack.c.l.b16 %v328
      %v877 = vunpack.c.h.b16 %v328
      %v878 = vunpack.c.l.b16 %v329
      %v879 = vunpack.c.h.b16 %v329
      %v880 = vunpack.c.l.b16 %v330
      %v881 = vunpack.c.h.b16 %v330
      %v882 = vunpack.c.l.b16 %v331
      %v883 = vunpack.c.h.b16 %v331
      %v884 = vunpack.c.l.b16 %v332
      %v885 = vunpack.c.l.b16 %v333
      %v886 = vunpack.c.h.b16 %v333
      %v887 = vunpack.c.l.b16 %v334
      %v888 = vunpack.c.h.b16 %v334
      %v889 = vunpack.c.l.b16 %v335
      %v890 = vunpack.c.h.b16 %v335
      %v891 = vunpack.c.l.b16 %v336
      %v892 = vunpack.c.h.b16 %v336
      %v893 = vunpack.c.l.b16 %v337
      %v894 = vunpack.c.l.b16 %v338
      %v895 = vunpack.c.h.b16 %v338
      %v896 = vunpack.c.l.b16 %v339
      %v897 = vunpack.c.h.b16 %v339
      %v898 = vunpack.c.l.b16 %v340
      %v899 = vunpack.c.h.b16 %v340
      %v900 = vunpack.c.l.b16 %v341
      %v901 = vunpack.c.h.b16 %v341
      %v902 = vunpack.c.l.b16 %v342
      %v903 = vunpack.c.l.b16 %v343
      %v904 = vunpack.c.h.b16 %v343
      %v905 = vunpack.c.l.b16 %v344
      %v906 = vunpack.c.h.b16 %v344
      %v907 = vunpack.c.l.b16 %v345
      %v908 = vunpack.c.h.b16 %v345
      %v909 = vunpack.c.l.b16 %v346
      %v910 = vunpack.c.h.b16 %v346
      %v911 = vunpack.c.l.b16 %v347
      %v912 = vunpack.c.l.b16 %v348
      %v913 = vunpack.c.h.b16 %v348
      %v914 = vunpack.c.l.b16 %v349
      %v915 = vunpack.c.h.b16 %v349
      %v916 = vunpack.c.l.b16 %v350
      %v917 = vunpack.c.h.b16 %v350
      %v918 = vunpack.c.l.b16 %v351
      %v919 = vunpack.c.h.b16 %v351
      %v920 = vunpack.c.l.b16 %v352
      %v921 = vunpack.c.l.b16 %v353
      %v922 = vunpack.c.h.b16 %v353
      %v923 = vunpack.c.l.b16 %v354
      %v924 = vunpack.c.h.b16 %v354
      %v925 = vunpack.c.l.b16 %v355
      %v926 = vunpack.c.h.b16 %v355
      %v927 = vunpack.c.l.b16 %v356
      %v928 = vunpack.c.h.b16 %v356
      %v929 = vunpack.c.l.b16 %v357
      %v930 = vunpack.c.l.b16 %v358
      %v931 = vunpack.c.h.b16 %v358
      %v932 = vunpack.c.l.b16 %v359
      %v933 = vunpack.c.h.b16 %v359
      %v934 = vunpack.c.l.b16 %v360
      %v935 = vunpack.c.h.b16 %v360
      %v936 = vunpack.c.l.b16 %v361
      %v937 = vunpack.c.h.b16 %v361
      %v938 = vunpack.c.l.b16 %v362
      %v939 = vunpack.c.l.b16 %v363
      %v940 = vunpack.c.h.b16 %v363
      %v941 = vunpack.c.l.b16 %v364
      %v942 = vunpack.c.h.b16 %v364
      %v943 = vunpack.c.l.b16 %v365
      %v944 = vunpack.c.h.b16 %v365
      %v945 = vunpack.c.l.b16 %v366
      %v946 = vunpack.c.h.b16 %v366
      %v947 = vunpack.c.l.b16 %v367
      %v948 = vunpack.c.l.b16 %v368
      %v949 = vunpack.c.h.b16 %v368
      %v950 = vunpack.c.l.b16 %v369
      %v951 = vunpack.c.h.b16 %v369
      %v952 = vunpack.c.l.b16 %v370
      %v953 = vunpack.c.h.b16 %v370
      %v954 = vunpack.c.l.b16 %v371
      %v955 = vunpack.c.h.b16 %v371
      %v956 = vunpack.c.l.b16 %v372
      %v957 = vunpack.c.l.b16 %v373
      %v958 = vunpack.c.h.b16 %v373
      %v959 = vunpack.c.l.b16 %v374
      %v960 = vunpack.c.h.b16 %v374
      %v961 = vunpack.c.l.b16 %v375
      %v962 = vunpack.c.h.b16 %v375
      %v963 = vunpack.c.l.b16 %v376
      %v964 = vunpack.c.h.b16 %v376
      %v965 = vunpack.c.l.b16 %v377
      %v966 = vunpack.c.l.b16 %v378
      %v967 = vunpack.c.h.b16 %v378
      %v968 = vunpack.c.l.b16 %v379
      %v969 = vunpack.c.h.b16 %v379
      %v970 = vunpack.c.l.b16 %v380
      %v971 = vunpack.c.h.b16 %v380
      %v972 = vunpack.c.l.b16 %v381
      %v973 = vunpack.c.h.b16 %v381
      %v974 = vunpack.c.l.b16 %v382
      %v975 = vunpack.c.l.b16 %v383
      %v976 = vunpack.c.h.b16 %v383
      %v977 = vunpack.c.l.b16 %v384
      %v978 = vunpack.c.h.b16 %v384
      %v979 = vunpack.c.l.b16 %v385
      %v980 = vunpack.c.h.b16 %v385
      %v981 = vunpack.c.l.b16 %v386
      %v982 = vunpack.c.h.b16 %v386
      %v983 = vunpack.c.l.b16 %v387
      %v984 = vpack.c.b16 %v705, %v696
      %v985 = vpack.c.b16 %v706, %v697
      %v986 = vpack.c.b16 %v707, %v698
      %v987 = vpack.c.b16 %v708, %v699
      %v988 = vpack.c.b16 %v709, %v700
      %v989 = vpack.c.b16 %v710, %v701
      %v990 = vpack.c.b16 %v711, %v702
      %v991 = vpack.c.b16 %v712, %v703
      %v992 = vpack.c.b16 %v713, %v704
      %v993 = vpack.c.b16 %v723, %v714
      %v994 = vpack.c.b16 %v724, %v715
      %v995 = vpack.c.b16 %v725, %v716
      %v996 = vpack.c.b16 %v726, %v717
      %v997 = vpack.c.b16 %v727, %v718
      %v998 = vpack.c.b16 %v728, %v719
      %v999 = vpack.c.b16 %v729, %v720
      %v1000 = vpack.c.b16 %v730, %v721
      %v1001 = vpack.c.b16 %v731, %v722
      %v1002 = vpack.c.b16 %v741, %v732
      %v1003 = vpack.c.b16 %v742, %v733
      %v1004 = vpack.c.b16 %v743, %v734
      %v1005 = vpack.c.b16 %v744, %v735
      %v1006 = vpack.c.b16 %v745, %v736
      %v1007 = vpack.c.b16 %v746, %v737
      %v1008 = vpack.c.b16 %v747, %v738
      %v1009 = vpack.c.b16 %v748, %v739
      %v1010 = vpack.c.b16 %v749, %v740
      %v1011 = vpack.c.b16 %v759, %v750
      %v1012 = vpack.c.b16 %v760, %v751
      %v1013 = vpack.c.b16 %v761, %v752
      %v1014 = vpack.c.b16 %v762, %v753
      %v1015 = vpack.c.b16 %v763, %v754
      %v1016 = vpack.c.b16 %v764, %v755
      %v1017 = vpack.c.b16 %v765, %v756
      %v1018 = vpack.c.b16 %v766, %v757
      %v1019 = vpack.c.b16 %v767, %v758
      %v1020 = vpack.c.b16 %v777, %v768
      %v1021 = vpack.c.b16 %v778, %v769
      %v1022 = vpack.c.b16 %v779, %v770
      %v1023 = vpack.c.b16 %v780, %v771
      %v1024 = vpack.c.b16 %v781, %v772
      %v1025 = vpack.c.b16 %v782, %v773
      %v1026 = vpack.c.b16 %v783, %v774
      %v1027 = vpack.c.b16 %v784, %v775
      %v1028 = vpack.c.b16 %v785, %v776
      %v1029 = vpack.c.b16 %v795, %v786
      %v1030 = vpack.c.b16 %v796, %v787
      %v1031 = vpack.c.b16 %v797, %v788
      %v1032 = vpack.c.b16 %v798, %v789
      %v1033 = vpack.c.b16 %v799, %v790
      %v1034 = vpack.c.b16 %v800, %v791
      %v1035 = vpack.c.b16 %v801, %v792
      %v1036 = vpack.c.b16 %v802, %v793
      %v1037 = vpack.c.b16 %v803, %v794
      %v1038 = vpack.c.b16 %v813, %v804
      %v1039 = vpack.c.b16 %v814, %v805
      %v1040 = vpack.c.b16 %v815, %v806
      %v1041 = vpack.c.b16 %v816, %v807
      %v1042 = vpack.c.b16 %v817, %v808
      %v1043 = vpack.c.b16 %v818, %v809
      %v1044 = vpack.c.b16 %v819, %v810
      %v1045 = vpack.c.b16 %v820, %v811
      %v1046 = vpack.c.b16 %v821, %v812
      %v1047 = vpack.c.b16 %v831, %v822
      %v1048 = vpack.c.b16 %v832, %v823
      %v1049 = vpack.c.b16 %v833, %v824
      %v1050 = vpack.c.b16 %v834, %v825
      %v1051 = vpack.c.b16 %v835, %v826
      %v1052 = vpack.c.b16 %v836, %v827
      %v1053 = vpack.c.b16 %v837, %v828
      %v1054 = vpack.c.b16 %v838, %v829
      %v1055 = vpack.c.b16 %v839, %v830
      %v1056 = vpack.c.b16 %v849, %v840
      %v1057 = vpack.c.b16 %v850, %v841
      %v1058 = vpack.c.b16 %v851, %v842
      %v1059 = vpack.c.b16 %v852, %v843
      %v1060 = vpack.c.b16 %v853, %v844
      %v1061 = vpack.c.b16 %v854, %v845
      %v1062 = vpack.c.b16 %v855, %v846
      %v1063 = vpack.c.b16 %v856, %v847
      %v1064 = vpack.c.b16 %v857, %v848
      %v1065 = vpack.c.b16 %v867, %v858
      %v1066 = vpack.c.b16 %v868, %v859
      %v1067 = vpack.c.b16 %v869, %v860
      %v1068 = vpack.c.b16 %v870, %v861
      %v1069 = vpack.c.b16 %v871, %v862
      %v1070 = vpack.c.b16 %v872, %v863
      %v1071 = vpack.c.b16 %v873, %v864
      %v1072 = vpack.c.b16 %v874, %v865
      %v1073 = vpack.c.b16 %v875, %v866
      %v1074 = vpack.c.b16 %v885, %v876
      %v1075 = vpack.c.b16 %v886, %v877
      %v1076 = vpack.c.b16 %v887, %v878
      %v1077 = vpack.c.b16 %v888, %v879
      %v1078 = vpack.c.b16 %v889, %v880
      %v1079 = vpack.c.b16 %v890, %v881
      %v1080 = vpack.c.b16 %v891, %v882
      %v1081 = vpack.c.b16 %v892, %v883
      %v1082 = vpack.c.b16 %v893, %v884
      %v1083 = vpack.c.b16 %v903, %v894
      %v1084 = vpack.c.b16 %v904, %v895
      %v1085 = vpack.c.b16 %v905, %v896
      %v1086 = vpack.c.b16 %v906, %v897
      %v1087 = vpack.c.b16 %v907, %v898
      %v1088 = vpack.c.b16 %v908, %v899
      %v1089 = vpack.c.b16 %v909, %v900
      %v1090 = vpack.c.b16 %v910, %v901
      %v1091 = vpack.c.b16 %v911, %v902
      %v1092 = vpack.c.b16 %v921, %v912
      %v1093 = vpack.c.b16 %v922, %v913
      %v1094 = vpack.c.b16 %v923, %v914
      %v1095 = vpack.c.b16 %v924, %v915
      %v1096 = vpack.c.b16 %v925, %v916
      %v1097 = vpack.c.b16 %v926, %v917
      %v1098 = vpack.c.b16 %v927, %v918
      %v1099 = vpack.c.b16 %v928, %v919
      %v1100 = vpack.c.b16 %v929, %v920
      %v1101 = vpack.c.b16 %v939, %v930
      %v1102 = vpack.c.b16 %v940, %v931
      %v1103 = vpack.c.b16 %v941, %v932
      %v1104 = vpack.c.b16 %v942, %v933
      %v1105 = vpack.c.b16 %v943, %v934
      %v1106 = vpack.c.b16 %v944, %v935
      %v1107 = vpack.c.b16 %v945, %v936
      %v1108 = vpack.c.b16 %v946, %v937
      %v1109 = vpack.c.b16 %v947, %v938
      %v1110 = vpack.c.b16 %v957, %v948
      %v1111 = vpack.c.b16 %v958, %v949
      %v1112 = vpack.c.b16 %v959, %v950
      %v1113 = vpack.c.b16 %v960, %v951
      %v1114 = vpack.c.b16 %v961, %v952
      %v1115 = vpack.c.b16 %v962, %v953
      %v1116 = vpack.c.b16 %v963, %v954
      %v1117 = vpack.c.b16 %v964, %v955
      %v1118 = vpack.c.b16 %v965, %v956
      %v1119 = vpack.c.b16 %v975, %v966
      %v1120 = vpack.c.b16 %v976, %v967
      %v1121 = vpack.c.b16 %v977, %v968
      %v1122 = vpack.c.b16 %v978, %v969
      %v1123 = vpack.c.b16 %v979, %v970
      %v1124 = vpack.c.b16 %v980, %v971
      %v1125 = vpack.c.b16 %v981, %v972
      %v1126 = vpack.c.b16 %v982, %v973
      %v1127 = vpack.c.b16 %v983, %v974
      %v1416 = vunpack.c.l.b16 %v388
      %v1417 = vunpack.c.l.b16 %v389
      %v1418 = vunpack.c.l.b16 %v390
      %v1419 = vunpack.c.l.b16 %v391
      %v1420 = vunpack.c.l.b16 %v392
      %v1421 = vunpack.c.l.b16 %v393
      %v1422 = vunpack.c.l.b16 %v394
      %v1423 = vunpack.c.l.b16 %v395
      %v1424 = vunpack.c.l.b16 %v396
      %v1425 = vunpack.c.l.b16 %v397
      %v1426 = vunpack.c.l.b16 %v398
      %v1427 = vunpack.c.l.b16 %v399
      %v1428 = vunpack.c.l.b16 %v400
      %v1429 = vunpack.c.l.b16 %v401
      %v1430 = vunpack.c.l.b16 %v402
      %v1431 = vunpack.c.l.b16 %v403
      %v1432 = vunpack.c.l.b16 %v404
      %v1433 = vunpack.c.l.b16 %v405
      %v1434 = vunpack.c.l.b16 %v406
      %v1435 = vunpack.c.l.b16 %v407
      %v1436 = vunpack.c.l.b16 %v408
      %v1437 = vunpack.c.l.b16 %v409
      %v1438 = vunpack.c.l.b16 %v410
      %v1439 = vunpack.c.l.b16 %v411
      %v1440 = vunpack.c.l.b16 %v412
      %v1441 = vunpack.c.l.b16 %v413
      %v1442 = vunpack.c.l.b16 %v414
      %v1443 = vunpack.c.l.b16 %v415
      %v1444 = vunpack.c.l.b16 %v416
      %v1445 = vunpack.c.l.b16 %v417
      %v1446 = vunpack.c.l.b16 %v418
      %v1447 = vunpack.c.l.b16 %v419
      %v1448 = vunpack.c.l.b16 %v420
      %v1449 = vunpack.c.l.b16 %v421
      %v1450 = vunpack.c.l.b16 %v422
      %v1451 = vunpack.c.l.b16 %v423
      %v1452 = vunpack.c.l.b16 %v424
      %v1453 = vunpack.c.l.b16 %v425
      %v1454 = vunpack.c.l.b16 %v426
      %v1455 = vunpack.c.l.b16 %v427
      %v1456 = vunpack.c.l.b16 %v428
      %v1457 = vunpack.c.l.b16 %v429
      %v1458 = vunpack.c.l.b16 %v430
      %v1459 = vunpack.c.l.b16 %v431
      %v1460 = vunpack.c.l.b16 %v432
      %v1461 = vunpack.c.l.b16 %v433
      %v1462 = vunpack.c.l.b16 %v434
      %v1463 = vunpack.c.l.b16 %v435
      %v1464 = vunpack.c.l.b16 %v436
      %v1465 = vunpack.c.l.b16 %v437
      %v1466 = vunpack.c.l.b16 %v438
      %v1467 = vunpack.c.l.b16 %v439
      %v1468 = vunpack.c.l.b16 %v440
      %v1469 = vunpack.c.l.b16 %v441
      %v1470 = vunpack.c.l.b16 %v442
      %v1471 = vunpack.c.l.b16 %v443
      %v1472 = vunpack.c.l.b16 %v444
      %v1473 = vunpack.c.l.b16 %v445
      %v1474 = vunpack.c.l.b16 %v446
      %v1475 = vunpack.c.l.b16 %v447
      %v1476 = vunpack.c.l.b16 %v448
      %v1477 = vunpack.c.l.b16 %v449
      %v1478 = vunpack.c.l.b16 %v450
      %v1479 = vunpack.c.l.b16 %v451
      %v1480 = vunpack.c.l.b16 %v452
      %v1481 = vunpack.c.l.b16 %v453
      %v1482 = vunpack.c.l.b16 %v454
      %v1483 = vunpack.c.l.b16 %v455
      %v1484 = vunpack.c.l.b16 %v456
      %v1485 = vunpack.c.l.b16 %v457
      %v1486 = vunpack.c.l.b16 %v458
      %v1487 = vunpack.c.l.b16 %v459
      %v1488 = vunpack.c.l.b16 %v460
      %v1489 = vunpack.c.l.b16 %v461
      %v1490 = vunpack.c.l.b16 %v462
      %v1491 = vunpack.c.l.b16 %v463
      %v1492 = vunpack.c.l.b16 %v464
      %v1493 = vunpack.c.l.b16 %v465
      %v1494 = vunpack.c.l.b16 %v466
      %v1495 = vunpack.c.l.b16 %v467
      %v1496 = vunpack.c.l.b16 %v468
      %v1497 = vunpack.c.l.b16 %v469
      %v1498 = vunpack.c.l.b16 %v470
      %v1499 = vunpack.c.l.b16 %v471
      %v1500 = vunpack.c.l.b16 %v472
      %v1501 = vunpack.c.l.b16 %v473
      %v1502 = vunpack.c.l.b16 %v474
      %v1503 = vunpack.c.l.b16 %v475
      %v1504 = vunpack.c.l.b16 %v476
      %v1505 = vunpack.c.l.b16 %v477
      %v1506 = vunpack.c.l.b16 %v478
      %v1507 = vunpack.c.l.b16 %v479
      %v1508 = vunpack.c.l.b16 %v480
      %v1509 = vunpack.c.l.b16 %v481
      %v1510 = vunpack.c.l.b16 %v482
      %v1511 = vunpack.c.l.b16 %v483
      %v1512 = vunpack.c.l.b16 %v484
      %v1513 = vunpack.c.l.b16 %v485
      %v1514 = vunpack.c.l.b16 %v486
      %v1515 = vunpack.c.l.b16 %v487
      %v1516 = vunpack.c.l.b16 %v488
      %v1517 = vunpack.c.l.b16 %v489
      %v1518 = vunpack.c.l.b16 %v490
      %v1519 = vunpack.c.l.b16 %v491
      %v1520 = vunpack.c.l.b16 %v492
      %v1521 = vunpack.c.l.b16 %v493
      %v1522 = vunpack.c.l.b16 %v494
      %v1523 = vunpack.c.l.b16 %v495
      %v1524 = vunpack.c.l.b16 %v496
      %v1525 = vunpack.c.l.b16 %v497
      %v1526 = vunpack.c.l.b16 %v498
      %v1527 = vunpack.c.l.b16 %v499
      %v1528 = vunpack.c.l.b16 %v500
      %v1529 = vunpack.c.l.b16 %v501
      %v1530 = vunpack.c.l.b16 %v502
      %v1531 = vunpack.c.l.b16 %v503
      %v1532 = vunpack.c.l.b16 %v504
      %v1533 = vunpack.c.l.b16 %v505
      %v1534 = vunpack.c.l.b16 %v506
      %v1535 = vunpack.c.l.b16 %v507
      %v1536 = vunpack.c.l.b16 %v508
      %v1537 = vunpack.c.l.b16 %v509
      %v1538 = vunpack.c.l.b16 %v510
      %v1539 = vunpack.c.l.b16 %v511
      %v1540 = vunpack.c.l.b16 %v512
      %v1541 = vunpack.c.l.b16 %v513
      %v1542 = vunpack.c.l.b16 %v514
      %v1543 = vunpack.c.l.b16 %v515
      %v1544 = vunpack.c.l.b16 %v516
      %v1545 = vunpack.c.l.b16 %v517
      %v1546 = vunpack.c.l.b16 %v518
      %v1547 = vunpack.c.l.b16 %v519
      %v1548 = vunpack.c.l.b16 %v520
      %v1549 = vunpack.c.l.b16 %v521
      %v1550 = vunpack.c.l.b16 %v522
      %v1551 = vunpack.c.l.b16 %v523
      %v1552 = vunpack.c.l.b16 %v524
      %v1553 = vunpack.c.l.b16 %v525
      %v1554 = vunpack.c.l.b16 %v526
      %v1555 = vunpack.c.l.b16 %v527
      %v1556 = vunpack.c.l.b16 %v528
      %v1557 = vunpack.c.l.b16 %v529
      %v1558 = vunpack.c.l.b16 %v530
      %v1559 = vunpack.c.l.b16 %v531
      %v1560 = vpack.c.b16 %v1417, %v1416
      %v1561 = vpack.c.b16 %v1419, %v1418
      %v1562 = vpack.c.b16 %v1421, %v1420
      %v1563 = vpack.c.b16 %v1423, %v1422
      %v1564 = vpack.c.b16 %v1425, %v1424
      %v1565 = vpack.c.b16 %v1427, %v1426
      %v1566 = vpack.c.b16 %v1429, %v1428
      %v1567 = vpack.c.b16 %v1431, %v1430
      %v1568 = vpack.c.b16 %v1433, %v1432
      %v1569 = vpack.c.b16 %v1435, %v1434
      %v1570 = vpack.c.b16 %v1437, %v1436
      %v1571 = vpack.c.b16 %v1439, %v1438
      %v1572 = vpack.c.b16 %v1441, %v1440
      %v1573 = vpack.c.b16 %v1443, %v1442
      %v1574 = vpack.c.b16 %v1445, %v1444
      %v1575 = vpack.c.b16 %v1447, %v1446
      %v1576 = vpack.c.b16 %v1449, %v1448
      %v1577 = vpack.c.b16 %v1451, %v1450
      %v1578 = vpack.c.b16 %v1453, %v1452
      %v1579 = vpack.c.b16 %v1455, %v1454
      %v1580 = vpack.c.b16 %v1457, %v1456
      %v1581 = vpack.c.b16 %v1459, %v1458
      %v1582 = vpack.c.b16 %v1461, %v1460
      %v1583 = vpack.c.b16 %v1463, %v1462
      %v1584 = vpack.c.b16 %v1465, %v1464
      %v1585 = vpack.c.b16 %v1467, %v1466
      %v1586 = vpack.c.b16 %v1469, %v1468
      %v1587 = vpack.c.b16 %v1471, %v1470
      %v1588 = vpack.c.b16 %v1473, %v1472
      %v1589 = vpack.c.b16 %v1475, %v1474
      %v1590 = vpack.c.b16 %v1477, %v1476
      %v1591 = vpack.c.b16 %v1479, %v1478
      %v1592 = vpack.c.b16 %v1481, %v1480
      %v1593 = vpack.c.b16 %v1483, %v1482
      %v1594 = vpack.c.b16 %v1485, %v1484
      %v1595 = vpack.c.b16 %v1487, %v1486
      %v1596 = vpack.c.b16 %v1489, %v1488
      %v1597 = vpack.c.b16 %v1491, %v1490
      %v1598 = vpack.c.b16 %v1493, %v1492
      %v1599 = vpack.c.b16 %v1495, %v1494
      %v1600 = vpack.c.b16 %v1497, %v1496
      %v1601 = vpack.c.b16 %v1499, %v1498
      %v1602 = vpack.c.b16 %v1501, %v1500
      %v1603 = vpack.c.b16 %v1503, %v1502
      %v1604 = vpack.c.b16 %v1505, %v1504
      %v1605 = vpack.c.b16 %v1507, %v1506
      %v1606 = vpack.c.b16 %v1509, %v1508
      %v1607 = vpack.c.b16 %v1511, %v1510
      %v1608 = vpack.c.b16 %v1513, %v1512
      %v1609 = vpack.c.b16 %v1515, %v1514
      %v1610 = vpack.c.b16 %v1517, %v1516
      %v1611 = vpack.c.b16 %v1519, %v1518
      %v1612 = vpack.c.b16 %v1521, %v1520
      %v1613 = vpack.c.b16 %v1523, %v1522
      %v1614 = vpack.c.b16 %v1525, %v1524
      %v1615 = vpack.c.b16 %v1527, %v1526
      %v1616 = vpack.c.b16 %v1529, %v1528
      %v1617 = vpack.c.b16 %v1531, %v1530
      %v1618 = vpack.c.b16 %v1533, %v1532
      %v1619 = vpack.c.b16 %v1535, %v1534
      %v1620 = vpack.c.b16 %v1537, %v1536
      %v1621 = vpack.c.b16 %v1539, %v1538
      %v1622 = vpack.c.b16 %v1541, %v1540
      %v1623 = vpack.c.b16 %v1543, %v1542
      %v1624 = vpack.c.b16 %v1545, %v1544
      %v1625 = vpack.c.b16 %v1547, %v1546
      %v1626 = vpack.c.b16 %v1549, %v1548
      %v1627 = vpack.c.b16 %v1551, %v1550
      %v1628 = vpack.c.b16 %v1553, %v1552
      %v1629 = vpack.c.b16 %v1555, %v1554
      %v1630 = vpack.c.b16 %v1557, %v1556
      %v1631 = vpack.c.b16 %v1559, %v1558
      %1704 = vmatpush.bf16.msra.mxu0 %v1567
      %1705 = vmatpush.bf16.msra.mxu0 %v1566
      %1706 = vmatpush.bf16.msra.mxu0 %v1565
      %1707 = vmatpush.bf16.msra.mxu0 %v1564
      %1708 = vmatpush.bf16.msra.mxu0 %v1563
      %1709 = vmatpush.bf16.msra.mxu0 %v1562
      %1710 = vmatpush.bf16.msra.mxu0 %v1561
      %1711 = vmatpush.bf16.msra.mxu0 %v1560
      %1712 = vmatmul.bf16.gmra.mxu0 %v984
      %v1713 = vpop.f32.mrf.mxu0
      %v1714 = vadd.f32 %v534, %v1713
      %v1715 = vpop.f32.mrf.mxu0
      %v1716 = vadd.f32 %v534, %v1715
      %1717 = vmatmul.bf16.gmra.mxu0 %v993
      %v1718 = vpop.f32.mrf.mxu0
      %v1719 = vadd.f32 %v534, %v1718
      %v1720 = vpop.f32.mrf.mxu0
      %v1721 = vadd.f32 %v534, %v1720
      %1722 = vmatmul.bf16.gmra.mxu0 %v1002
      %v1723 = vpop.f32.mrf.mxu0
      %v1724 = vadd.f32 %v534, %v1723
      %v1725 = vpop.f32.mrf.mxu0
      %v1726 = vadd.f32 %v534, %v1725
      %1727 = vmatmul.bf16.gmra.mxu0 %v1011
      %v1728 = vpop.f32.mrf.mxu0
      %v1729 = vadd.f32 %v534, %v1728
      %v1730 = vpop.f32.mrf.mxu0
      %v1731 = vadd.f32 %v534, %v1730
      %1732 = vmatmul.bf16.gmra.mxu0 %v1020
      %v1733 = vpop.f32.mrf.mxu0
      %v1734 = vadd.f32 %v534, %v1733
      %v1735 = vpop.f32.mrf.mxu0
      %v1736 = vadd.f32 %v534, %v1735
      %1737 = vmatmul.bf16.gmra.mxu0 %v1029
      %v1738 = vpop.f32.mrf.mxu0
      %v1739 = vadd.f32 %v534, %v1738
      %v1740 = vpop.f32.mrf.mxu0
      %v1741 = vadd.f32 %v534, %v1740
      %1742 = vmatmul.bf16.gmra.mxu0 %v1038
      %v1743 = vpop.f32.mrf.mxu0
      %v1744 = vadd.f32 %v534, %v1743
      %v1745 = vpop.f32.mrf.mxu0
      %v1746 = vadd.f32 %v534, %v1745
      %1747 = vmatmul.bf16.gmra.mxu0 %v1047
      %v1748 = vpop.f32.mrf.mxu0
      %v1749 = vadd.f32 %v534, %v1748
      %v1750 = vpop.f32.mrf.mxu0
      %v1751 = vadd.f32 %v534, %v1750
      %1752 = vmatmul.bf16.gmra.mxu0 %v1056
      %v1753 = vpop.f32.mrf.mxu0
      %v1754 = vadd.f32 %v534, %v1753
      %v1755 = vpop.f32.mrf.mxu0
      %v1756 = vadd.f32 %v534, %v1755
      %1757 = vmatmul.bf16.gmra.mxu0 %v1065
      %v1758 = vpop.f32.mrf.mxu0
      %v1759 = vadd.f32 %v534, %v1758
      %v1760 = vpop.f32.mrf.mxu0
      %v1761 = vadd.f32 %v534, %v1760
      %1762 = vmatmul.bf16.gmra.mxu0 %v1074
      %v1763 = vpop.f32.mrf.mxu0
      %v1764 = vadd.f32 %v534, %v1763
      %v1765 = vpop.f32.mrf.mxu0
      %v1766 = vadd.f32 %v534, %v1765
      %1767 = vmatmul.bf16.gmra.mxu0 %v1083
      %v1768 = vpop.f32.mrf.mxu0
      %v1769 = vadd.f32 %v534, %v1768
      %v1770 = vpop.f32.mrf.mxu0
      %v1771 = vadd.f32 %v534, %v1770
      %1772 = vmatmul.bf16.gmra.mxu0 %v1092
      %v1773 = vpop.f32.mrf.mxu0
      %v1774 = vadd.f32 %v534, %v1773
      %v1775 = vpop.f32.mrf.mxu0
      %v1776 = vadd.f32 %v534, %v1775
      %1777 = vmatmul.bf16.gmra.mxu0 %v1101
      %v1778 = vpop.f32.mrf.mxu0
      %v1779 = vadd.f32 %v534, %v1778
      %v1780 = vpop.f32.mrf.mxu0
      %v1781 = vadd.f32 %v534, %v1780
      %1782 = vmatmul.bf16.gmra.mxu0 %v1110
      %v1783 = vpop.f32.mrf.mxu0
      %v1784 = vadd.f32 %v534, %v1783
      %v1785 = vpop.f32.mrf.mxu0
      %v1786 = vadd.f32 %v534, %v1785
      %1787 = vmatmul.bf16.gmra.mxu0 %v1119
      %v1788 = vpop.f32.mrf.mxu0
      %v1789 = vadd.f32 %v534, %v1788
      %v1790 = vpop.f32.mrf.mxu0
      %v1791 = vadd.f32 %v534, %v1790
      %1792 = vdwg.mxu0
      %1793 = vmatpush.bf16.msra.mxu0 %v1575
      %1794 = vmatpush.bf16.msra.mxu0 %v1574
      %1795 = vmatpush.bf16.msra.mxu0 %v1573
      %1796 = vmatpush.bf16.msra.mxu0 %v1572
      %1797 = vmatpush.bf16.msra.mxu0 %v1571
      %1798 = vmatpush.bf16.msra.mxu0 %v1570
      %1799 = vmatpush.bf16.msra.mxu0 %v1569
      %1800 = vmatpush.bf16.msra.mxu0 %v1568
      %1801 = vmatmul.bf16.gmra.mxu0 %v985
      %v1802 = vpop.f32.mrf.mxu0
      %v1803 = vadd.f32 %v1714, %v1802
      %v1804 = vpop.f32.mrf.mxu0
      %v1805 = vadd.f32 %v1716, %v1804
      %1806 = vmatmul.bf16.gmra.mxu0 %v994
      %v1807 = vpop.f32.mrf.mxu0
      %v1808 = vadd.f32 %v1719, %v1807
      %v1809 = vpop.f32.mrf.mxu0
      %v1810 = vadd.f32 %v1721, %v1809
      %1811 = vmatmul.bf16.gmra.mxu0 %v1003
      %v1812 = vpop.f32.mrf.mxu0
      %v1813 = vadd.f32 %v1724, %v1812
      %v1814 = vpop.f32.mrf.mxu0
      %v1815 = vadd.f32 %v1726, %v1814
      %1816 = vmatmul.bf16.gmra.mxu0 %v1012
      %v1817 = vpop.f32.mrf.mxu0
      %v1818 = vadd.f32 %v1729, %v1817
      %v1819 = vpop.f32.mrf.mxu0
      %v1820 = vadd.f32 %v1731, %v1819
      %1821 = vmatmul.bf16.gmra.mxu0 %v1021
      %v1822 = vpop.f32.mrf.mxu0
      %v1823 = vadd.f32 %v1734, %v1822
      %v1824 = vpop.f32.mrf.mxu0
      %v1825 = vadd.f32 %v1736, %v1824
      %1826 = vmatmul.bf16.gmra.mxu0 %v1030
      %v1827 = vpop.f32.mrf.mxu0
      %v1828 = vadd.f32 %v1739, %v1827
      %v1829 = vpop.f32.mrf.mxu0
      %v1830 = vadd.f32 %v1741, %v1829
      %1831 = vmatmul.bf16.gmra.mxu0 %v1039
      %v1832 = vpop.f32.mrf.mxu0
      %v1833 = vadd.f32 %v1744, %v1832
      %v1834 = vpop.f32.mrf.mxu0
      %v1835 = vadd.f32 %v1746, %v1834
      %1836 = vmatmul.bf16.gmra.mxu0 %v1048
      %v1837 = vpop.f32.mrf.mxu0
      %v1838 = vadd.f32 %v1749, %v1837
      %v1839 = vpop.f32.mrf.mxu0
      %v1840 = vadd.f32 %v1751, %v1839
      %1841 = vmatmul.bf16.gmra.mxu0 %v1057
      %v1842 = vpop.f32.mrf.mxu0
      %v1843 = vadd.f32 %v1754, %v1842
      %v1844 = vpop.f32.mrf.mxu0
      %v1845 = vadd.f32 %v1756, %v1844
      %1846 = vmatmul.bf16.gmra.mxu0 %v1066
      %v1847 = vpop.f32.mrf.mxu0
      %v1848 = vadd.f32 %v1759, %v1847
      %v1849 = vpop.f32.mrf.mxu0
      %v1850 = vadd.f32 %v1761, %v1849
      %1851 = vmatmul.bf16.gmra.mxu0 %v1075
      %v1852 = vpop.f32.mrf.mxu0
      %v1853 = vadd.f32 %v1764, %v1852
      %v1854 = vpop.f32.mrf.mxu0
      %v1855 = vadd.f32 %v1766, %v1854
      %1856 = vmatmul.bf16.gmra.mxu0 %v1084
      %v1857 = vpop.f32.mrf.mxu0
      %v1858 = vadd.f32 %v1769, %v1857
      %v1859 = vpop.f32.mrf.mxu0
      %v1860 = vadd.f32 %v1771, %v1859
      %1861 = vmatmul.bf16.gmra.mxu0 %v1093
      %v1862 = vpop.f32.mrf.mxu0
      %v1863 = vadd.f32 %v1774, %v1862
      %v1864 = vpop.f32.mrf.mxu0
      %v1865 = vadd.f32 %v1776, %v1864
      %1866 = vmatmul.bf16.gmra.mxu0 %v1102
      %v1867 = vpop.f32.mrf.mxu0
      %v1868 = vadd.f32 %v1779, %v1867
      %v1869 = vpop.f32.mrf.mxu0
      %v1870 = vadd.f32 %v1781, %v1869
      %1871 = vmatmul.bf16.gmra.mxu0 %v1111
      %v1872 = vpop.f32.mrf.mxu0
      %v1873 = vadd.f32 %v1784, %v1872
      %v1874 = vpop.f32.mrf.mxu0
      %v1875 = vadd.f32 %v1786, %v1874
      %1876 = vmatmul.bf16.gmra.mxu0 %v1120
      %v1877 = vpop.f32.mrf.mxu0
      %v1878 = vadd.f32 %v1789, %v1877
      %v1879 = vpop.f32.mrf.mxu0
      %v1880 = vadd.f32 %v1791, %v1879
      %1881 = vdwg.mxu0
      %1882 = vmatpush.bf16.msra.mxu0 %v1583
      %1883 = vmatpush.bf16.msra.mxu0 %v1582
      %1884 = vmatpush.bf16.msra.mxu0 %v1581
      %1885 = vmatpush.bf16.msra.mxu0 %v1580
      %1886 = vmatpush.bf16.msra.mxu0 %v1579
      %1887 = vmatpush.bf16.msra.mxu0 %v1578
      %1888 = vmatpush.bf16.msra.mxu0 %v1577
      %1889 = vmatpush.bf16.msra.mxu0 %v1576
      %1890 = vmatmul.bf16.gmra.mxu0 %v986
      %v1891 = vpop.f32.mrf.mxu0
      %v1892 = vadd.f32 %v1803, %v1891
      %v1893 = vpop.f32.mrf.mxu0
      %v1894 = vadd.f32 %v1805, %v1893
      %1895 = vmatmul.bf16.gmra.mxu0 %v995
      %v1896 = vpop.f32.mrf.mxu0
      %v1897 = vadd.f32 %v1808, %v1896
      %v1898 = vpop.f32.mrf.mxu0
      %v1899 = vadd.f32 %v1810, %v1898
      %1900 = vmatmul.bf16.gmra.mxu0 %v1004
      %v1901 = vpop.f32.mrf.mxu0
      %v1902 = vadd.f32 %v1813, %v1901
      %v1903 = vpop.f32.mrf.mxu0
      %v1904 = vadd.f32 %v1815, %v1903
      %1905 = vmatmul.bf16.gmra.mxu0 %v1013
      %v1906 = vpop.f32.mrf.mxu0
      %v1907 = vadd.f32 %v1818, %v1906
      %v1908 = vpop.f32.mrf.mxu0
      %v1909 = vadd.f32 %v1820, %v1908
      %1910 = vmatmul.bf16.gmra.mxu0 %v1022
      %v1911 = vpop.f32.mrf.mxu0
      %v1912 = vadd.f32 %v1823, %v1911
      %v1913 = vpop.f32.mrf.mxu0
      %v1914 = vadd.f32 %v1825, %v1913
      %1915 = vmatmul.bf16.gmra.mxu0 %v1031
      %v1916 = vpop.f32.mrf.mxu0
      %v1917 = vadd.f32 %v1828, %v1916
      %v1918 = vpop.f32.mrf.mxu0
      %v1919 = vadd.f32 %v1830, %v1918
      %1920 = vmatmul.bf16.gmra.mxu0 %v1040
      %v1921 = vpop.f32.mrf.mxu0
      %v1922 = vadd.f32 %v1833, %v1921
      %v1923 = vpop.f32.mrf.mxu0
      %v1924 = vadd.f32 %v1835, %v1923
      %1925 = vmatmul.bf16.gmra.mxu0 %v1049
      %v1926 = vpop.f32.mrf.mxu0
      %v1927 = vadd.f32 %v1838, %v1926
      %v1928 = vpop.f32.mrf.mxu0
      %v1929 = vadd.f32 %v1840, %v1928
      %1930 = vmatmul.bf16.gmra.mxu0 %v1058
      %v1931 = vpop.f32.mrf.mxu0
      %v1932 = vadd.f32 %v1843, %v1931
      %v1933 = vpop.f32.mrf.mxu0
      %v1934 = vadd.f32 %v1845, %v1933
      %1935 = vmatmul.bf16.gmra.mxu0 %v1067
      %v1936 = vpop.f32.mrf.mxu0
      %v1937 = vadd.f32 %v1848, %v1936
      %v1938 = vpop.f32.mrf.mxu0
      %v1939 = vadd.f32 %v1850, %v1938
      %1940 = vmatmul.bf16.gmra.mxu0 %v1076
      %v1941 = vpop.f32.mrf.mxu0
      %v1942 = vadd.f32 %v1853, %v1941
      %v1943 = vpop.f32.mrf.mxu0
      %v1944 = vadd.f32 %v1855, %v1943
      %1945 = vmatmul.bf16.gmra.mxu0 %v1085
      %v1946 = vpop.f32.mrf.mxu0
      %v1947 = vadd.f32 %v1858, %v1946
      %v1948 = vpop.f32.mrf.mxu0
      %v1949 = vadd.f32 %v1860, %v1948
      %1950 = vmatmul.bf16.gmra.mxu0 %v1094
      %v1951 = vpop.f32.mrf.mxu0
      %v1952 = vadd.f32 %v1863, %v1951
      %v1953 = vpop.f32.mrf.mxu0
      %v1954 = vadd.f32 %v1865, %v1953
      %1955 = vmatmul.bf16.gmra.mxu0 %v1103
      %v1956 = vpop.f32.mrf.mxu0
      %v1957 = vadd.f32 %v1868, %v1956
      %v1958 = vpop.f32.mrf.mxu0
      %v1959 = vadd.f32 %v1870, %v1958
      %1960 = vmatmul.bf16.gmra.mxu0 %v1112
      %v1961 = vpop.f32.mrf.mxu0
      %v1962 = vadd.f32 %v1873, %v1961
      %v1963 = vpop.f32.mrf.mxu0
      %v1964 = vadd.f32 %v1875, %v1963
      %1965 = vmatmul.bf16.gmra.mxu0 %v1121
      %v1966 = vpop.f32.mrf.mxu0
      %v1967 = vadd.f32 %v1878, %v1966
      %v1968 = vpop.f32.mrf.mxu0
      %v1969 = vadd.f32 %v1880, %v1968
      %1970 = vdwg.mxu0
      %1971 = vmatpush.bf16.msra.mxu0 %v1591
      %1972 = vmatpush.bf16.msra.mxu0 %v1590
      %1973 = vmatpush.bf16.msra.mxu0 %v1589
      %1974 = vmatpush.bf16.msra.mxu0 %v1588
      %1975 = vmatpush.bf16.msra.mxu0 %v1587
      %1976 = vmatpush.bf16.msra.mxu0 %v1586
      %1977 = vmatpush.bf16.msra.mxu0 %v1585
      %1978 = vmatpush.bf16.msra.mxu0 %v1584
      %1979 = vmatmul.bf16.gmra.mxu0 %v987
      %v1980 = vpop.f32.mrf.mxu0
      %v1981 = vadd.f32 %v1892, %v1980
      %v1982 = vpop.f32.mrf.mxu0
      %v1983 = vadd.f32 %v1894, %v1982
      %1984 = vmatmul.bf16.gmra.mxu0 %v996
      %v1985 = vpop.f32.mrf.mxu0
      %v1986 = vadd.f32 %v1897, %v1985
      %v1987 = vpop.f32.mrf.mxu0
      %v1988 = vadd.f32 %v1899, %v1987
      %1989 = vmatmul.bf16.gmra.mxu0 %v1005
      %v1990 = vpop.f32.mrf.mxu0
      %v1991 = vadd.f32 %v1902, %v1990
      %v1992 = vpop.f32.mrf.mxu0
      %v1993 = vadd.f32 %v1904, %v1992
      %1994 = vmatmul.bf16.gmra.mxu0 %v1014
      %v1995 = vpop.f32.mrf.mxu0
      %v1996 = vadd.f32 %v1907, %v1995
      %v1997 = vpop.f32.mrf.mxu0
      %v1998 = vadd.f32 %v1909, %v1997
      %1999 = vmatmul.bf16.gmra.mxu0 %v1023
      %v2000 = vpop.f32.mrf.mxu0
      %v2001 = vadd.f32 %v1912, %v2000
      %v2002 = vpop.f32.mrf.mxu0
      %v2003 = vadd.f32 %v1914, %v2002
      %2004 = vmatmul.bf16.gmra.mxu0 %v1032
      %v2005 = vpop.f32.mrf.mxu0
      %v2006 = vadd.f32 %v1917, %v2005
      %v2007 = vpop.f32.mrf.mxu0
      %v2008 = vadd.f32 %v1919, %v2007
      %2009 = vmatmul.bf16.gmra.mxu0 %v1041
      %v2010 = vpop.f32.mrf.mxu0
      %v2011 = vadd.f32 %v1922, %v2010
      %v2012 = vpop.f32.mrf.mxu0
      %v2013 = vadd.f32 %v1924, %v2012
      %2014 = vmatmul.bf16.gmra.mxu0 %v1050
      %v2015 = vpop.f32.mrf.mxu0
      %v2016 = vadd.f32 %v1927, %v2015
      %v2017 = vpop.f32.mrf.mxu0
      %v2018 = vadd.f32 %v1929, %v2017
      %2019 = vmatmul.bf16.gmra.mxu0 %v1059
      %v2020 = vpop.f32.mrf.mxu0
      %v2021 = vadd.f32 %v1932, %v2020
      %v2022 = vpop.f32.mrf.mxu0
      %v2023 = vadd.f32 %v1934, %v2022
      %2024 = vmatmul.bf16.gmra.mxu0 %v1068
      %v2025 = vpop.f32.mrf.mxu0
      %v2026 = vadd.f32 %v1937, %v2025
      %v2027 = vpop.f32.mrf.mxu0
      %v2028 = vadd.f32 %v1939, %v2027
      %2029 = vmatmul.bf16.gmra.mxu0 %v1077
      %v2030 = vpop.f32.mrf.mxu0
      %v2031 = vadd.f32 %v1942, %v2030
      %v2032 = vpop.f32.mrf.mxu0
      %v2033 = vadd.f32 %v1944, %v2032
      %2034 = vmatmul.bf16.gmra.mxu0 %v1086
      %v2035 = vpop.f32.mrf.mxu0
      %v2036 = vadd.f32 %v1947, %v2035
      %v2037 = vpop.f32.mrf.mxu0
      %v2038 = vadd.f32 %v1949, %v2037
      %2039 = vmatmul.bf16.gmra.mxu0 %v1095
      %v2040 = vpop.f32.mrf.mxu0
      %v2041 = vadd.f32 %v1952, %v2040
      %v2042 = vpop.f32.mrf.mxu0
      %v2043 = vadd.f32 %v1954, %v2042
      %2044 = vmatmul.bf16.gmra.mxu0 %v1104
      %v2045 = vpop.f32.mrf.mxu0
      %v2046 = vadd.f32 %v1957, %v2045
      %v2047 = vpop.f32.mrf.mxu0
      %v2048 = vadd.f32 %v1959, %v2047
      %2049 = vmatmul.bf16.gmra.mxu0 %v1113
      %v2050 = vpop.f32.mrf.mxu0
      %v2051 = vadd.f32 %v1962, %v2050
      %v2052 = vpop.f32.mrf.mxu0
      %v2053 = vadd.f32 %v1964, %v2052
      %2054 = vmatmul.bf16.gmra.mxu0 %v1122
      %v2055 = vpop.f32.mrf.mxu0
      %v2056 = vadd.f32 %v1967, %v2055
      %v2057 = vpop.f32.mrf.mxu0
      %v2058 = vadd.f32 %v1969, %v2057
      %2059 = vdwg.mxu0
      %2060 = vmatpush.bf16.msra.mxu0 %v1599
      %2061 = vmatpush.bf16.msra.mxu0 %v1598
      %2062 = vmatpush.bf16.msra.mxu0 %v1597
      %2063 = vmatpush.bf16.msra.mxu0 %v1596
      %2064 = vmatpush.bf16.msra.mxu0 %v1595
      %2065 = vmatpush.bf16.msra.mxu0 %v1594
      %2066 = vmatpush.bf16.msra.mxu0 %v1593
      %2067 = vmatpush.bf16.msra.mxu0 %v1592
      %2068 = vmatmul.bf16.gmra.mxu0 %v988
      %v2069 = vpop.f32.mrf.mxu0
      %v2070 = vadd.f32 %v1981, %v2069
      %v2071 = vpop.f32.mrf.mxu0
      %v2072 = vadd.f32 %v1983, %v2071
      %2073 = vmatmul.bf16.gmra.mxu0 %v997
      %v2074 = vpop.f32.mrf.mxu0
      %v2075 = vadd.f32 %v1986, %v2074
      %v2076 = vpop.f32.mrf.mxu0
      %v2077 = vadd.f32 %v1988, %v2076
      %2078 = vmatmul.bf16.gmra.mxu0 %v1006
      %v2079 = vpop.f32.mrf.mxu0
      %v2080 = vadd.f32 %v1991, %v2079
      %v2081 = vpop.f32.mrf.mxu0
      %v2082 = vadd.f32 %v1993, %v2081
      %2083 = vmatmul.bf16.gmra.mxu0 %v1015
      %v2084 = vpop.f32.mrf.mxu0
      %v2085 = vadd.f32 %v1996, %v2084
      %v2086 = vpop.f32.mrf.mxu0
      %v2087 = vadd.f32 %v1998, %v2086
      %2088 = vmatmul.bf16.gmra.mxu0 %v1024
      %v2089 = vpop.f32.mrf.mxu0
      %v2090 = vadd.f32 %v2001, %v2089
      %v2091 = vpop.f32.mrf.mxu0
      %v2092 = vadd.f32 %v2003, %v2091
      %2093 = vmatmul.bf16.gmra.mxu0 %v1033
      %v2094 = vpop.f32.mrf.mxu0
      %v2095 = vadd.f32 %v2006, %v2094
      %v2096 = vpop.f32.mrf.mxu0
      %v2097 = vadd.f32 %v2008, %v2096
      %2098 = vmatmul.bf16.gmra.mxu0 %v1042
      %v2099 = vpop.f32.mrf.mxu0
      %v2100 = vadd.f32 %v2011, %v2099
      %v2101 = vpop.f32.mrf.mxu0
      %v2102 = vadd.f32 %v2013, %v2101
      %2103 = vmatmul.bf16.gmra.mxu0 %v1051
      %v2104 = vpop.f32.mrf.mxu0
      %v2105 = vadd.f32 %v2016, %v2104
      %v2106 = vpop.f32.mrf.mxu0
      %v2107 = vadd.f32 %v2018, %v2106
      %2108 = vmatmul.bf16.gmra.mxu0 %v1060
      %v2109 = vpop.f32.mrf.mxu0
      %v2110 = vadd.f32 %v2021, %v2109
      %v2111 = vpop.f32.mrf.mxu0
      %v2112 = vadd.f32 %v2023, %v2111
      %2113 = vmatmul.bf16.gmra.mxu0 %v1069
      %v2114 = vpop.f32.mrf.mxu0
      %v2115 = vadd.f32 %v2026, %v2114
      %v2116 = vpop.f32.mrf.mxu0
      %v2117 = vadd.f32 %v2028, %v2116
      %2118 = vmatmul.bf16.gmra.mxu0 %v1078
      %v2119 = vpop.f32.mrf.mxu0
      %v2120 = vadd.f32 %v2031, %v2119
      %v2121 = vpop.f32.mrf.mxu0
      %v2122 = vadd.f32 %v2033, %v2121
      %2123 = vmatmul.bf16.gmra.mxu0 %v1087
      %v2124 = vpop.f32.mrf.mxu0
      %v2125 = vadd.f32 %v2036, %v2124
      %v2126 = vpop.f32.mrf.mxu0
      %v2127 = vadd.f32 %v2038, %v2126
      %2128 = vmatmul.bf16.gmra.mxu0 %v1096
      %v2129 = vpop.f32.mrf.mxu0
      %v2130 = vadd.f32 %v2041, %v2129
      %v2131 = vpop.f32.mrf.mxu0
      %v2132 = vadd.f32 %v2043, %v2131
      %2133 = vmatmul.bf16.gmra.mxu0 %v1105
      %v2134 = vpop.f32.mrf.mxu0
      %v2135 = vadd.f32 %v2046, %v2134
      %v2136 = vpop.f32.mrf.mxu0
      %v2137 = vadd.f32 %v2048, %v2136
      %2138 = vmatmul.bf16.gmra.mxu0 %v1114
      %v2139 = vpop.f32.mrf.mxu0
      %v2140 = vadd.f32 %v2051, %v2139
      %v2141 = vpop.f32.mrf.mxu0
      %v2142 = vadd.f32 %v2053, %v2141
      %2143 = vmatmul.bf16.gmra.mxu0 %v1123
      %v2144 = vpop.f32.mrf.mxu0
      %v2145 = vadd.f32 %v2056, %v2144
      %v2146 = vpop.f32.mrf.mxu0
      %v2147 = vadd.f32 %v2058, %v2146
      %2148 = vdwg.mxu0
      %2149 = vmatpush.bf16.msra.mxu0 %v1607
      %2150 = vmatpush.bf16.msra.mxu0 %v1606
      %2151 = vmatpush.bf16.msra.mxu0 %v1605
      %2152 = vmatpush.bf16.msra.mxu0 %v1604
      %2153 = vmatpush.bf16.msra.mxu0 %v1603
      %2154 = vmatpush.bf16.msra.mxu0 %v1602
      %2155 = vmatpush.bf16.msra.mxu0 %v1601
      %2156 = vmatpush.bf16.msra.mxu0 %v1600
      %2157 = vmatmul.bf16.gmra.mxu0 %v989
      %v2158 = vpop.f32.mrf.mxu0
      %v2159 = vadd.f32 %v2070, %v2158
      %v2160 = vpop.f32.mrf.mxu0
      %v2161 = vadd.f32 %v2072, %v2160
      %2162 = vmatmul.bf16.gmra.mxu0 %v998
      %v2163 = vpop.f32.mrf.mxu0
      %v2164 = vadd.f32 %v2075, %v2163
      %v2165 = vpop.f32.mrf.mxu0
      %v2166 = vadd.f32 %v2077, %v2165
      %2167 = vmatmul.bf16.gmra.mxu0 %v1007
      %v2168 = vpop.f32.mrf.mxu0
      %v2169 = vadd.f32 %v2080, %v2168
      %v2170 = vpop.f32.mrf.mxu0
      %v2171 = vadd.f32 %v2082, %v2170
      %2172 = vmatmul.bf16.gmra.mxu0 %v1016
      %v2173 = vpop.f32.mrf.mxu0
      %v2174 = vadd.f32 %v2085, %v2173
      %v2175 = vpop.f32.mrf.mxu0
      %v2176 = vadd.f32 %v2087, %v2175
      %2177 = vmatmul.bf16.gmra.mxu0 %v1025
      %v2178 = vpop.f32.mrf.mxu0
      %v2179 = vadd.f32 %v2090, %v2178
      %v2180 = vpop.f32.mrf.mxu0
      %v2181 = vadd.f32 %v2092, %v2180
      %2182 = vmatmul.bf16.gmra.mxu0 %v1034
      %v2183 = vpop.f32.mrf.mxu0
      %v2184 = vadd.f32 %v2095, %v2183
      %v2185 = vpop.f32.mrf.mxu0
      %v2186 = vadd.f32 %v2097, %v2185
      %2187 = vmatmul.bf16.gmra.mxu0 %v1043
      %v2188 = vpop.f32.mrf.mxu0
      %v2189 = vadd.f32 %v2100, %v2188
      %v2190 = vpop.f32.mrf.mxu0
      %v2191 = vadd.f32 %v2102, %v2190
      %2192 = vmatmul.bf16.gmra.mxu0 %v1052
      %v2193 = vpop.f32.mrf.mxu0
      %v2194 = vadd.f32 %v2105, %v2193
      %v2195 = vpop.f32.mrf.mxu0
      %v2196 = vadd.f32 %v2107, %v2195
      %2197 = vmatmul.bf16.gmra.mxu0 %v1061
      %v2198 = vpop.f32.mrf.mxu0
      %v2199 = vadd.f32 %v2110, %v2198
      %v2200 = vpop.f32.mrf.mxu0
      %v2201 = vadd.f32 %v2112, %v2200
      %2202 = vmatmul.bf16.gmra.mxu0 %v1070
      %v2203 = vpop.f32.mrf.mxu0
      %v2204 = vadd.f32 %v2115, %v2203
      %v2205 = vpop.f32.mrf.mxu0
      %v2206 = vadd.f32 %v2117, %v2205
      %2207 = vmatmul.bf16.gmra.mxu0 %v1079
      %v2208 = vpop.f32.mrf.mxu0
      %v2209 = vadd.f32 %v2120, %v2208
      %v2210 = vpop.f32.mrf.mxu0
      %v2211 = vadd.f32 %v2122, %v2210
      %2212 = vmatmul.bf16.gmra.mxu0 %v1088
      %v2213 = vpop.f32.mrf.mxu0
      %v2214 = vadd.f32 %v2125, %v2213
      %v2215 = vpop.f32.mrf.mxu0
      %v2216 = vadd.f32 %v2127, %v2215
      %2217 = vmatmul.bf16.gmra.mxu0 %v1097
      %v2218 = vpop.f32.mrf.mxu0
      %v2219 = vadd.f32 %v2130, %v2218
      %v2220 = vpop.f32.mrf.mxu0
      %v2221 = vadd.f32 %v2132, %v2220
      %2222 = vmatmul.bf16.gmra.mxu0 %v1106
      %v2223 = vpop.f32.mrf.mxu0
      %v2224 = vadd.f32 %v2135, %v2223
      %v2225 = vpop.f32.mrf.mxu0
      %v2226 = vadd.f32 %v2137, %v2225
      %2227 = vmatmul.bf16.gmra.mxu0 %v1115
      %v2228 = vpop.f32.mrf.mxu0
      %v2229 = vadd.f32 %v2140, %v2228
      %v2230 = vpop.f32.mrf.mxu0
      %v2231 = vadd.f32 %v2142, %v2230
      %2232 = vmatmul.bf16.gmra.mxu0 %v1124
      %v2233 = vpop.f32.mrf.mxu0
      %v2234 = vadd.f32 %v2145, %v2233
      %v2235 = vpop.f32.mrf.mxu0
      %v2236 = vadd.f32 %v2147, %v2235
      %2237 = vdwg.mxu0
      %2238 = vmatpush.bf16.msra.mxu0 %v1615
      %2239 = vmatpush.bf16.msra.mxu0 %v1614
      %2240 = vmatpush.bf16.msra.mxu0 %v1613
      %2241 = vmatpush.bf16.msra.mxu0 %v1612
      %2242 = vmatpush.bf16.msra.mxu0 %v1611
      %2243 = vmatpush.bf16.msra.mxu0 %v1610
      %2244 = vmatpush.bf16.msra.mxu0 %v1609
      %2245 = vmatpush.bf16.msra.mxu0 %v1608
      %2246 = vmatmul.bf16.gmra.mxu0 %v990
      %v2247 = vpop.f32.mrf.mxu0
      %v2248 = vadd.f32 %v2159, %v2247
      %v2249 = vpop.f32.mrf.mxu0
      %v2250 = vadd.f32 %v2161, %v2249
      %2251 = vmatmul.bf16.gmra.mxu0 %v999
      %v2252 = vpop.f32.mrf.mxu0
      %v2253 = vadd.f32 %v2164, %v2252
      %v2254 = vpop.f32.mrf.mxu0
      %v2255 = vadd.f32 %v2166, %v2254
      %2256 = vmatmul.bf16.gmra.mxu0 %v1008
      %v2257 = vpop.f32.mrf.mxu0
      %v2258 = vadd.f32 %v2169, %v2257
      %v2259 = vpop.f32.mrf.mxu0
      %v2260 = vadd.f32 %v2171, %v2259
      %2261 = vmatmul.bf16.gmra.mxu0 %v1017
      %v2262 = vpop.f32.mrf.mxu0
      %v2263 = vadd.f32 %v2174, %v2262
      %v2264 = vpop.f32.mrf.mxu0
      %v2265 = vadd.f32 %v2176, %v2264
      %2266 = vmatmul.bf16.gmra.mxu0 %v1026
      %v2267 = vpop.f32.mrf.mxu0
      %v2268 = vadd.f32 %v2179, %v2267
      %v2269 = vpop.f32.mrf.mxu0
      %v2270 = vadd.f32 %v2181, %v2269
      %2271 = vmatmul.bf16.gmra.mxu0 %v1035
      %v2272 = vpop.f32.mrf.mxu0
      %v2273 = vadd.f32 %v2184, %v2272
      %v2274 = vpop.f32.mrf.mxu0
      %v2275 = vadd.f32 %v2186, %v2274
      %2276 = vmatmul.bf16.gmra.mxu0 %v1044
      %v2277 = vpop.f32.mrf.mxu0
      %v2278 = vadd.f32 %v2189, %v2277
      %v2279 = vpop.f32.mrf.mxu0
      %v2280 = vadd.f32 %v2191, %v2279
      %2281 = vmatmul.bf16.gmra.mxu0 %v1053
      %v2282 = vpop.f32.mrf.mxu0
      %v2283 = vadd.f32 %v2194, %v2282
      %v2284 = vpop.f32.mrf.mxu0
      %v2285 = vadd.f32 %v2196, %v2284
      %2286 = vmatmul.bf16.gmra.mxu0 %v1062
      %v2287 = vpop.f32.mrf.mxu0
      %v2288 = vadd.f32 %v2199, %v2287
      %v2289 = vpop.f32.mrf.mxu0
      %v2290 = vadd.f32 %v2201, %v2289
      %2291 = vmatmul.bf16.gmra.mxu0 %v1071
      %v2292 = vpop.f32.mrf.mxu0
      %v2293 = vadd.f32 %v2204, %v2292
      %v2294 = vpop.f32.mrf.mxu0
      %v2295 = vadd.f32 %v2206, %v2294
      %2296 = vmatmul.bf16.gmra.mxu0 %v1080
      %v2297 = vpop.f32.mrf.mxu0
      %v2298 = vadd.f32 %v2209, %v2297
      %v2299 = vpop.f32.mrf.mxu0
      %v2300 = vadd.f32 %v2211, %v2299
      %2301 = vmatmul.bf16.gmra.mxu0 %v1089
      %v2302 = vpop.f32.mrf.mxu0
      %v2303 = vadd.f32 %v2214, %v2302
      %v2304 = vpop.f32.mrf.mxu0
      %v2305 = vadd.f32 %v2216, %v2304
      %2306 = vmatmul.bf16.gmra.mxu0 %v1098
      %v2307 = vpop.f32.mrf.mxu0
      %v2308 = vadd.f32 %v2219, %v2307
      %v2309 = vpop.f32.mrf.mxu0
      %v2310 = vadd.f32 %v2221, %v2309
      %2311 = vmatmul.bf16.gmra.mxu0 %v1107
      %v2312 = vpop.f32.mrf.mxu0
      %v2313 = vadd.f32 %v2224, %v2312
      %v2314 = vpop.f32.mrf.mxu0
      %v2315 = vadd.f32 %v2226, %v2314
      %2316 = vmatmul.bf16.gmra.mxu0 %v1116
      %v2317 = vpop.f32.mrf.mxu0
      %v2318 = vadd.f32 %v2229, %v2317
      %v2319 = vpop.f32.mrf.mxu0
      %v2320 = vadd.f32 %v2231, %v2319
      %2321 = vmatmul.bf16.gmra.mxu0 %v1125
      %v2322 = vpop.f32.mrf.mxu0
      %v2323 = vadd.f32 %v2234, %v2322
      %v2324 = vpop.f32.mrf.mxu0
      %v2325 = vadd.f32 %v2236, %v2324
      %2326 = vdwg.mxu0
      %2327 = vmatpush.bf16.msra.mxu0 %v1623
      %2328 = vmatpush.bf16.msra.mxu0 %v1622
      %2329 = vmatpush.bf16.msra.mxu0 %v1621
      %2330 = vmatpush.bf16.msra.mxu0 %v1620
      %2331 = vmatpush.bf16.msra.mxu0 %v1619
      %2332 = vmatpush.bf16.msra.mxu0 %v1618
      %2333 = vmatpush.bf16.msra.mxu0 %v1617
      %2334 = vmatpush.bf16.msra.mxu0 %v1616
      %2335 = vmatmul.bf16.gmra.mxu0 %v991
      %v2336 = vpop.f32.mrf.mxu0
      %v2337 = vadd.f32 %v2248, %v2336
      %v2338 = vpop.f32.mrf.mxu0
      %v2339 = vadd.f32 %v2250, %v2338
      %2340 = vmatmul.bf16.gmra.mxu0 %v1000
      %v2341 = vpop.f32.mrf.mxu0
      %v2342 = vadd.f32 %v2253, %v2341
      %v2343 = vpop.f32.mrf.mxu0
      %v2344 = vadd.f32 %v2255, %v2343
      %2345 = vmatmul.bf16.gmra.mxu0 %v1009
      %v2346 = vpop.f32.mrf.mxu0
      %v2347 = vadd.f32 %v2258, %v2346
      %v2348 = vpop.f32.mrf.mxu0
      %v2349 = vadd.f32 %v2260, %v2348
      %2350 = vmatmul.bf16.gmra.mxu0 %v1018
      %v2351 = vpop.f32.mrf.mxu0
      %v2352 = vadd.f32 %v2263, %v2351
      %v2353 = vpop.f32.mrf.mxu0
      %v2354 = vadd.f32 %v2265, %v2353
      %2355 = vmatmul.bf16.gmra.mxu0 %v1027
      %v2356 = vpop.f32.mrf.mxu0
      %v2357 = vadd.f32 %v2268, %v2356
      %v2358 = vpop.f32.mrf.mxu0
      %v2359 = vadd.f32 %v2270, %v2358
      %2360 = vmatmul.bf16.gmra.mxu0 %v1036
      %v2361 = vpop.f32.mrf.mxu0
      %v2362 = vadd.f32 %v2273, %v2361
      %v2363 = vpop.f32.mrf.mxu0
      %v2364 = vadd.f32 %v2275, %v2363
      %2365 = vmatmul.bf16.gmra.mxu0 %v1045
      %v2366 = vpop.f32.mrf.mxu0
      %v2367 = vadd.f32 %v2278, %v2366
      %v2368 = vpop.f32.mrf.mxu0
      %v2369 = vadd.f32 %v2280, %v2368
      %2370 = vmatmul.bf16.gmra.mxu0 %v1054
      %v2371 = vpop.f32.mrf.mxu0
      %v2372 = vadd.f32 %v2283, %v2371
      %v2373 = vpop.f32.mrf.mxu0
      %v2374 = vadd.f32 %v2285, %v2373
      %2375 = vmatmul.bf16.gmra.mxu0 %v1063
      %v2376 = vpop.f32.mrf.mxu0
      %v2377 = vadd.f32 %v2288, %v2376
      %v2378 = vpop.f32.mrf.mxu0
      %v2379 = vadd.f32 %v2290, %v2378
      %2380 = vmatmul.bf16.gmra.mxu0 %v1072
      %v2381 = vpop.f32.mrf.mxu0
      %v2382 = vadd.f32 %v2293, %v2381
      %v2383 = vpop.f32.mrf.mxu0
      %v2384 = vadd.f32 %v2295, %v2383
      %2385 = vmatmul.bf16.gmra.mxu0 %v1081
      %v2386 = vpop.f32.mrf.mxu0
      %v2387 = vadd.f32 %v2298, %v2386
      %v2388 = vpop.f32.mrf.mxu0
      %v2389 = vadd.f32 %v2300, %v2388
      %2390 = vmatmul.bf16.gmra.mxu0 %v1090
      %v2391 = vpop.f32.mrf.mxu0
      %v2392 = vadd.f32 %v2303, %v2391
      %v2393 = vpop.f32.mrf.mxu0
      %v2394 = vadd.f32 %v2305, %v2393
      %2395 = vmatmul.bf16.gmra.mxu0 %v1099
      %v2396 = vpop.f32.mrf.mxu0
      %v2397 = vadd.f32 %v2308, %v2396
      %v2398 = vpop.f32.mrf.mxu0
      %v2399 = vadd.f32 %v2310, %v2398
      %2400 = vmatmul.bf16.gmra.mxu0 %v1108
      %v2401 = vpop.f32.mrf.mxu0
      %v2402 = vadd.f32 %v2313, %v2401
      %v2403 = vpop.f32.mrf.mxu0
      %v2404 = vadd.f32 %v2315, %v2403
      %2405 = vmatmul.bf16.gmra.mxu0 %v1117
      %v2406 = vpop.f32.mrf.mxu0
      %v2407 = vadd.f32 %v2318, %v2406
      %v2408 = vpop.f32.mrf.mxu0
      %v2409 = vadd.f32 %v2320, %v2408
      %2410 = vmatmul.bf16.gmra.mxu0 %v1126
      %v2411 = vpop.f32.mrf.mxu0
      %v2412 = vadd.f32 %v2323, %v2411
      %v2413 = vpop.f32.mrf.mxu0
      %v2414 = vadd.f32 %v2325, %v2413
      %2415 = vdwg.mxu0
      %2416 = vmatpush.bf16.msra.mxu0 %v1631
      %2417 = vmatpush.bf16.msra.mxu0 %v1630
      %2418 = vmatpush.bf16.msra.mxu0 %v1629
      %2419 = vmatpush.bf16.msra.mxu0 %v1628
      %2420 = vmatpush.bf16.msra.mxu0 %v1627
      %2421 = vmatpush.bf16.msra.mxu0 %v1626
      %2422 = vmatpush.bf16.msra.mxu0 %v1625
      %2423 = vmatpush.bf16.msra.mxu0 %v1624
      %2424 = vmatmul.bf16.gmra.mxu0 %v992
      %v2425 = vpop.f32.mrf.mxu0
      %v2426 = vadd.f32 %v2337, %v2425
      %v2427 = vpop.f32.mrf.mxu0
      %v2428 = vadd.f32 %v2339, %v2427
      %2429 = vmatmul.bf16.gmra.mxu0 %v1001
      %v2430 = vpop.f32.mrf.mxu0
      %v2431 = vadd.f32 %v2342, %v2430
      %v2432 = vpop.f32.mrf.mxu0
      %v2433 = vadd.f32 %v2344, %v2432
      %2434 = vmatmul.bf16.gmra.mxu0 %v1010
      %v2435 = vpop.f32.mrf.mxu0
      %v2436 = vadd.f32 %v2347, %v2435
      %v2437 = vpop.f32.mrf.mxu0
      %v2438 = vadd.f32 %v2349, %v2437
      %2439 = vmatmul.bf16.gmra.mxu0 %v1019
      %v2440 = vpop.f32.mrf.mxu0
      %v2441 = vadd.f32 %v2352, %v2440
      %v2442 = vpop.f32.mrf.mxu0
      %v2443 = vadd.f32 %v2354, %v2442
      %2444 = vmatmul.bf16.gmra.mxu0 %v1028
      %v2445 = vpop.f32.mrf.mxu0
      %v2446 = vadd.f32 %v2357, %v2445
      %v2447 = vpop.f32.mrf.mxu0
      %v2448 = vadd.f32 %v2359, %v2447
      %2449 = vmatmul.bf16.gmra.mxu0 %v1037
      %v2450 = vpop.f32.mrf.mxu0
      %v2451 = vadd.f32 %v2362, %v2450
      %v2452 = vpop.f32.mrf.mxu0
      %v2453 = vadd.f32 %v2364, %v2452
      %2454 = vmatmul.bf16.gmra.mxu0 %v1046
      %v2455 = vpop.f32.mrf.mxu0
      %v2456 = vadd.f32 %v2367, %v2455
      %v2457 = vpop.f32.mrf.mxu0
      %v2458 = vadd.f32 %v2369, %v2457
      %2459 = vmatmul.bf16.gmra.mxu0 %v1055
      %v2460 = vpop.f32.mrf.mxu0
      %v2461 = vadd.f32 %v2372, %v2460
      %v2462 = vpop.f32.mrf.mxu0
      %v2463 = vadd.f32 %v2374, %v2462
      %2464 = vmatmul.bf16.gmra.mxu0 %v1064
      %v2465 = vpop.f32.mrf.mxu0
      %v2466 = vadd.f32 %v2377, %v2465
      %v2467 = vpop.f32.mrf.mxu0
      %v2468 = vadd.f32 %v2379, %v2467
      %2469 = vmatmul.bf16.gmra.mxu0 %v1073
      %v2470 = vpop.f32.mrf.mxu0
      %v2471 = vadd.f32 %v2382, %v2470
      %v2472 = vpop.f32.mrf.mxu0
      %v2473 = vadd.f32 %v2384, %v2472
      %2474 = vmatmul.bf16.gmra.mxu0 %v1082
      %v2475 = vpop.f32.mrf.mxu0
      %v2476 = vadd.f32 %v2387, %v2475
      %v2477 = vpop.f32.mrf.mxu0
      %v2478 = vadd.f32 %v2389, %v2477
      %2479 = vmatmul.bf16.gmra.mxu0 %v1091
      %v2480 = vpop.f32.mrf.mxu0
      %v2481 = vadd.f32 %v2392, %v2480
      %v2482 = vpop.f32.mrf.mxu0
      %v2483 = vadd.f32 %v2394, %v2482
      %2484 = vmatmul.bf16.gmra.mxu0 %v1100
      %v2485 = vpop.f32.mrf.mxu0
      %v2486 = vadd.f32 %v2397, %v2485
      %v2487 = vpop.f32.mrf.mxu0
      %v2488 = vadd.f32 %v2399, %v2487
      %2489 = vmatmul.bf16.gmra.mxu0 %v1109
      %v2490 = vpop.f32.mrf.mxu0
      %v2491 = vadd.f32 %v2402, %v2490
      %v2492 = vpop.f32.mrf.mxu0
      %v2493 = vadd.f32 %v2404, %v2492
      %2494 = vmatmul.bf16.gmra.mxu0 %v1118
      %v2495 = vpop.f32.mrf.mxu0
      %v2496 = vadd.f32 %v2407, %v2495
      %v2497 = vpop.f32.mrf.mxu0
      %v2498 = vadd.f32 %v2409, %v2497
      %2499 = vmatmul.bf16.gmra.mxu0 %v1127
      %v2500 = vpop.f32.mrf.mxu0
      %v2501 = vadd.f32 %v2412, %v2500
      %v2502 = vpop.f32.mrf.mxu0
      %v2503 = vadd.f32 %v2414, %v2502
      %2504 = vdwg.mxu0
      %v2505 = vmax.f32 %v2426, 0.0
      %v2506 = vmax.f32 %v2428, 0.0
      %v2507 = vmax.f32 %v2431, 0.0
      %v2508 = vmax.f32 %v2433, 0.0
      %v2509 = vmax.f32 %v2436, 0.0
      %v2510 = vmax.f32 %v2438, 0.0
      %v2511 = vmax.f32 %v2441, 0.0
      %v2512 = vmax.f32 %v2443, 0.0
      %v2513 = vmax.f32 %v2446, 0.0
      %v2514 = vmax.f32 %v2448, 0.0
      %v2515 = vmax.f32 %v2451, 0.0
      %v2516 = vmax.f32 %v2453, 0.0
      %v2517 = vmax.f32 %v2456, 0.0
      %v2518 = vmax.f32 %v2458, 0.0
      %v2519 = vmax.f32 %v2461, 0.0
      %v2520 = vmax.f32 %v2463, 0.0
      %v2521 = vmax.f32 %v2466, 0.0
      %v2522 = vmax.f32 %v2468, 0.0
      %v2523 = vmax.f32 %v2471, 0.0
      %v2524 = vmax.f32 %v2473, 0.0
      %v2525 = vmax.f32 %v2476, 0.0
      %v2526 = vmax.f32 %v2478, 0.0
      %v2527 = vmax.f32 %v2481, 0.0
      %v2528 = vmax.f32 %v2483, 0.0
      %v2529 = vmax.f32 %v2486, 0.0
      %v2530 = vmax.f32 %v2488, 0.0
      %v2531 = vmax.f32 %v2491, 0.0
      %v2532 = vmax.f32 %v2493, 0.0
      %v2533 = vmax.f32 %v2496, 0.0
      %v2534 = vmax.f32 %v2498, 0.0
      %v2535 = vmax.f32 %v2501, 0.0
      %v2536 = vmax.f32 %v2503, 0.0
      %v2537 = vpack.c.bf16 %v2505, %v2505
      %v2538 = vpack.c.bf16 %v2506, %v2506
      %v2539 = vpack.c.bf16 %v2507, %v2507
      %v2540 = vpack.c.bf16 %v2508, %v2508
      %v2541 = vpack.c.bf16 %v2509, %v2509
      %v2542 = vpack.c.bf16 %v2510, %v2510
      %v2543 = vpack.c.bf16 %v2511, %v2511
      %v2544 = vpack.c.bf16 %v2512, %v2512
      %v2545 = vpack.c.bf16 %v2513, %v2513
      %v2546 = vpack.c.bf16 %v2514, %v2514
      %v2547 = vpack.c.bf16 %v2515, %v2515
      %v2548 = vpack.c.bf16 %v2516, %v2516
      %v2549 = vpack.c.bf16 %v2517, %v2517
      %v2550 = vpack.c.bf16 %v2518, %v2518
      %v2551 = vpack.c.bf16 %v2519, %v2519
      %v2552 = vpack.c.bf16 %v2520, %v2520
      %v2553 = vpack.c.bf16 %v2521, %v2521
      %v2554 = vpack.c.bf16 %v2522, %v2522
      %v2555 = vpack.c.bf16 %v2523, %v2523
      %v2556 = vpack.c.bf16 %v2524, %v2524
      %v2557 = vpack.c.bf16 %v2525, %v2525
      %v2558 = vpack.c.bf16 %v2526, %v2526
      %v2559 = vpack.c.bf16 %v2527, %v2527
      %v2560 = vpack.c.bf16 %v2528, %v2528
      %v2561 = vpack.c.bf16 %v2529, %v2529
      %v2562 = vpack.c.bf16 %v2530, %v2530
      %v2563 = vpack.c.bf16 %v2531, %v2531
      %v2564 = vpack.c.bf16 %v2532, %v2532
      %v2565 = vpack.c.bf16 %v2533, %v2533
      %v2566 = vpack.c.bf16 %v2534, %v2534
      %v2567 = vpack.c.bf16 %v2535, %v2535
      %v2568 = vpack.c.bf16 %v2536, %v2536
      %2569 = vst [vmem:[%s226] sm:$0xf] %v2537
      %2570 = vst [vmem:[%s226 + $0x4] sm:$0xf] %v2538
      %2571 = vst [vmem:[%s226 + $0x8] sm:$0xf] %v2539
      %2572 = vst [vmem:[%s226 + $0xc] sm:$0xf] %v2540
      %2573 = vst [vmem:[%s226 + $0x10] sm:$0xf] %v2541
      %2574 = vst [vmem:[%s226 + $0x14] sm:$0xf] %v2542
      %2575 = vst [vmem:[%s226 + $0x18] sm:$0xf] %v2543
      %2576 = vst [vmem:[%s226 + $0x1c] sm:$0xf] %v2544
      %2577 = vst [vmem:[%s226 + $0x20] sm:$0xf] %v2545
      %2578 = vst [vmem:[%s226 + $0x24] sm:$0xf] %v2546
      %2579 = vst [vmem:[%s226 + $0x28] sm:$0xf] %v2547
      %2580 = vst [vmem:[%s226 + $0x2c] sm:$0xf] %v2548
      %2581 = vst [vmem:[%s226 + $0x30] sm:$0xf] %v2549
      %2582 = vst [vmem:[%s226 + $0x34] sm:$0xf] %v2550
      %2583 = vst [vmem:[%s226 + $0x38] sm:$0xf] %v2551
      %2584 = vst [vmem:[%s226 + $0x3c] sm:$0xf] %v2552
      %2585 = vst [vmem:[%s226 + $0x40] sm:$0xf] %v2553
      %2586 = vst [vmem:[%s226 + $0x44] sm:$0xf] %v2554
      %2587 = vst [vmem:[%s226 + $0x48] sm:$0xf] %v2555
      %2588 = vst [vmem:[%s226 + $0x4c] sm:$0xf] %v2556
      %2589 = vst [vmem:[%s226 + $0x50] sm:$0xf] %v2557
      %2590 = vst [vmem:[%s226 + $0x54] sm:$0xf] %v2558
      %2591 = vst [vmem:[%s226 + $0x58] sm:$0xf] %v2559
      %2592 = vst [vmem:[%s226 + $0x5c] sm:$0xf] %v2560
      %2593 = vst [vmem:[%s226 + $0x60] sm:$0xf] %v2561
      %2594 = vst [vmem:[%s226 + $0x64] sm:$0xf] %v2562
      %2595 = vst [vmem:[%s226 + $0x68] sm:$0xf] %v2563
      %2596 = vst [vmem:[%s226 + $0x6c] sm:$0xf] %v2564
      %2597 = vst [vmem:[%s226 + $0x70] sm:$0xf] %v2565
      %2598 = vst [vmem:[%s226 + $0x74] sm:$0xf] %v2566
      %2599 = vst [vmem:[%s226 + $0x78] sm:$0xf] %v2567
      %2600 = vst [vmem:[%s226 + $0x7c] sm:$0xf] %v2568
      %s2601 = smul.u32 32, %s18
      %p2602 = scmp.lt.s32.totalorder %s2601, 799
      %s2603 = scalar_select %p2602, %s2601, 799
      %p2604 = scmp.lt.s32.totalorder %s19, 0
      %s2605 = scalar_select %p2604, %s19, 0
      %s2606 = sadd.s32 %s2605, %s2603
      %s2607 = smul.addr %s2606, 4
      %s2608 = scalar_lea.vmem %s3, %s2607
      // Predicated region
      $region33: #{decoder_forward.5} parent=31 // pred_check
        %p2609 = pneg %p124
      $region34: #{decoder_forward.5} parent=31 // pred_check_branch
        %2611 = sbr.rel (%p2609) target = $region36
      $region35: #{decoder_forward.5} parent=31 // pred_region
        %s2612 = smul.u32 32, %s18
      $region36: #{decoder_forward.5} parent=31 // pred_fallthru
        _
    $region32: #{decoder_forward.5} parent=5 // pred_fallthru
      _
    %p2613 = scmp.le.s32.totalorder 2, %s9
    // Predicated region
    $region37: #{decoder_forward.5} parent=5 // pred_check
      %p2614 = pneg %p2613
    $region38: #{decoder_forward.5} parent=5 // pred_check_branch
      %2616 = sbr.rel (%p2614) target = $region40
    $region39: #{decoder_forward.5} parent=5 // pred_region
      %s2617 = ssub.s32 %s9, 2
      // Predicated region
      $region41: #{decoder_forward.5} parent=39 // pred_check
        %p2618 = pneg %p130
      $region42: #{decoder_forward.5} parent=39 // pred_check_branch
        %2620 = sbr.rel (%p2618) target = $region44
      $region43: #{decoder_forward.5} parent=39 // pred_region
        %s2621 = smul.u32 32, %s20
        %p2622 = scmp.lt.s32.totalorder %s2621, 799
        %s2623 = scalar_select %p2622, %s2621, 799
        %p2624 = scmp.lt.s32.totalorder %s21, 0
        %s2625 = scalar_select %p2624, %s21, 0
        %s2626 = sadd.s32 %s2625, %s2623
        %s2627 = smul.addr %s2626, 4
        %s2628 = scalar_lea.vmem %s3, %s2627
      $region44: #{decoder_forward.5} parent=39 // pred_fallthru
        _
    $region40: #{decoder_forward.5} parent=5 // pred_fallthru
      _
  $region6: #{decoder_forward.5} parent=0 // loop_footer
    %s13 = sadd.s32 1, %s9
  $region7: #{decoder_forward.5} parent=0 // loop_footer_branch
    %8 = sbr.rel target = $region3
  $region8: #{decoder_forward.5} parent=0 // loop_exit
    _

// kernel: decoder_forward.6
$region0: #{decoder_forward.6}
  #allocation0 [shape = 'u32[]', space=smem, size = 0x4, offset = 0x4, fixed_abs, tag = 'smem constant byte address 0x4 - core index']
  #allocation1 [shape = 'u32[72,128]{1,0:T(1,128)}', space=vmem, size = 0x9000, scoped, tag = 'internal scratch']
  %s0 = inlined_call_operand.vmem [shape: bf16[25088,384], index: 0, kind: input, shape index: {}]
  %s1 = inlined_call_operand.vmem [shape: bf16[384,128], index: 1, kind: input, shape index: {}]
  %s2 = inlined_call_operand.vmem [shape: f32[1,128], index: 2, kind: input, shape index: {}]
  %s3 = inlined_call_operand.vmem [shape: bf16[25088,128], index: 3, kind: output, shape index: {}]
  %s4 = sld [smem:[#allocation0]]
  $region45: #{decoder_forward.6} parent=0
    _
  %s6 = ssub.s32 1, %s4
  %s7 = scalar_select 0, %s6, %s4
  loop: start=0, step=1, limit=100
  $region2: #{decoder_forward.6} parent=0 // loop_pre_header
    _
  $region3: #{decoder_forward.6} parent=0 // loop_header
    %s9 = sphi 0, %s13
    %p10 = scmp.ge.s32.totalorder %s9, 100
    %s16 = sphi 0, %s28
    %s17 = sphi 0, %s24
    %s18 = sphi 0, %s16
    %s19 = sphi 0, %s17
    %s20 = sphi 0, %s18
    %s21 = sphi 0, %s19
    %s31 = sphi 0, %s33
    %s34 = sphi 0, %s31
    %s35 = sphi 0, %s34
    %s51 = sphi 0, %s35
    %s57 = sphi 0, %s59
    %s60 = sphi 0, %s57
    %s61 = sphi 0, %s60
    %s77 = sphi 0, %s61
    %s83 = sphi 0, %s85
    %s86 = sphi 0, %s83
    %s87 = sphi 0, %s86
    %s103 = sphi 0, %s87
    %s111 = sphi 0, %s113
    %s114 = sphi 0, %s111
    %s115 = sphi 0, %s114
    %s131 = sphi 0, %s115
  $region4: #{decoder_forward.6} parent=0 // loop_header_branch
    %12 = sbr.rel (%p10) target = $region8
  $region5: #{decoder_forward.6} parent=0 // loop_body
    %s14 = ssub.s32 %s9, 1
    %s15 = ssub.s32 %s9, 2
    %s22 = sadd.s32 1, %s17
    %p23 = scmp.ge.s32.totalorder %s22, 1
    %s24 = scalar_select %p23, 0, %s22
    %s25 = sadd.s32 1, %s16
    %s26 = scalar_select %p23, %s25, %s16
    %p27 = scmp.ge.s32.totalorder %s26, 98
    %s28 = scalar_select %p27, 0, %s26
    %s29 = ssub.s32 %s16, %s28
    %p30 = scmp.eq.s32.totalorder %s29, 0
    %s32 = sadd.s32 %s31, 1
    %s33 = scalar_select %p30, %s31, %s32
    %p36 = pneg %p30
    %p37 = scmp.eq.s32.totalorder %s9, 97
    %p38 = por %p36, %p37
    %p39 = scmp.ne.s32.totalorder %s31, %s34
    %p40 = scmp.eq.s32.totalorder %s9, 0
    %p41 = por %p39, %p40
    %p42 = scmp.ne.s32.totalorder %s31, %s34
    %p43 = scmp.eq.s32.totalorder %s14, 97
    %p44 = por %p42, %p43
    %p45 = scmp.ne.s32.totalorder %s34, %s35
    %p46 = scmp.eq.s32.totalorder %s14, 0
    %p47 = por %p45, %p46
    %p48 = scmp.ne.s32.totalorder %s34, %s35
    %p49 = scmp.eq.s32.totalorder %s15, 97
    %p50 = por %p48, %p49
    %p52 = scmp.ne.s32.totalorder %s35, %s51
    %p53 = scmp.eq.s32.totalorder %s15, 0
    %p54 = por %p52, %p53
    %s55 = ssub.s32 %s17, %s24
    %p56 = scmp.eq.s32.totalorder %s55, 0
    %s58 = sadd.s32 %s57, 1
    %s59 = scalar_select %p56, %s57, %s58
    %p62 = pneg %p56
    %p63 = scmp.eq.s32.totalorder %s9, 97
    %p64 = por %p62, %p63
    %p65 = scmp.ne.s32.totalorder %s57, %s60
    %p66 = scmp.eq.s32.totalorder %s9, 0
    %p67 = por %p65, %p66
    %p68 = scmp.ne.s32.totalorder %s57, %s60
    %p69 = scmp.eq.s32.totalorder %s14, 97
    %p70 = por %p68, %p69
    %p71 = scmp.ne.s32.totalorder %s60, %s61
    %p72 = scmp.eq.s32.totalorder %s14, 0
    %p73 = por %p71, %p72
    %p74 = scmp.ne.s32.totalorder %s60, %s61
    %p75 = scmp.eq.s32.totalorder %s15, 97
    %p76 = por %p74, %p75
    %p78 = scmp.ne.s32.totalorder %s61, %s77
    %p79 = scmp.eq.s32.totalorder %s15, 0
    %p80 = por %p78, %p79
    %s81 = ssub.s32 %s17, %s24
    %p82 = scmp.eq.s32.totalorder %s81, 0
    %s84 = sadd.s32 %s83, 1
    %s85 = scalar_select %p82, %s83, %s84
    %p88 = pneg %p82
    %p89 = scmp.eq.s32.totalorder %s9, 97
    %p90 = por %p88, %p89
    %p91 = scmp.ne.s32.totalorder %s83, %s86
    %p92 = scmp.eq.s32.totalorder %s9, 0
    %p93 = por %p91, %p92
    %p94 = scmp.ne.s32.totalorder %s83, %s86
    %p95 = scmp.eq.s32.totalorder %s14, 97
    %p96 = por %p94, %p95
    %p97 = scmp.ne.s32.totalorder %s86, %s87
    %p98 = scmp.eq.s32.totalorder %s14, 0
    %p99 = por %p97, %p98
    %p100 = scmp.ne.s32.totalorder %s86, %s87
    %p101 = scmp.eq.s32.totalorder %s15, 97
    %p102 = por %p100, %p101
    %p104 = scmp.ne.s32.totalorder %s87, %s103
    %p105 = scmp.eq.s32.totalorder %s15, 0
    %p106 = por %p104, %p105
    %s107 = ssub.s32 %s16, %s28
    %s108 = ssub.s32 %s17, %s24
    %s109 = sor.u32 %s107, %s108
    %p110 = scmp.eq.s32.totalorder %s109, 0
    %s112 = sadd.s32 %s111, 1
    %s113 = scalar_select %p110, %s111, %s112
    %p116 = pneg %p110
    %p117 = scmp.eq.s32.totalorder %s9, 97
    %p118 = por %p116, %p117
    %p119 = scmp.ne.s32.totalorder %s111, %s114
    %p120 = scmp.eq.s32.totalorder %s9, 0
    %p121 = por %p119, %p120
    %p122 = scmp.ne.s32.totalorder %s111, %s114
    %p123 = scmp.eq.s32.totalorder %s14, 97
    %p124 = por %p122, %p123
    %p125 = scmp.ne.s32.totalorder %s114, %s115
    %p126 = scmp.eq.s32.totalorder %s14, 0
    %p127 = por %p125, %p126
    %p128 = scmp.ne.s32.totalorder %s114, %s115
    %p129 = scmp.eq.s32.totalorder %s15, 97
    %p130 = por %p128, %p129
    %p132 = scmp.ne.s32.totalorder %s115, %s131
    %p133 = scmp.eq.s32.totalorder %s15, 0
    %p134 = por %p132, %p133
    %p135 = scmp.le.s32.totalorder 1, %s9
    %p136 = scmp.lt.s32.totalorder %s9, 99
    %p137 = pnand %p135, %p136
    %p138 = pneg %p137
    // Predicated region
    $region9: #{decoder_forward.6} parent=5 // pred_check
      _
    $region10: #{decoder_forward.6} parent=5 // pred_check_branch
      %140 = sbr.rel (%p137) target = $region12
    $region11: #{decoder_forward.6} parent=5 // pred_region
      %s141 = ssub.s32 %s9, 1
      // Predicated region
      $region13: #{decoder_forward.6} parent=11 // pred_check
        %p142 = pneg %p73
      $region14: #{decoder_forward.6} parent=11 // pred_check_branch
        %144 = sbr.rel (%p142) target = $region16
      $region15: #{decoder_forward.6} parent=11 // pred_region
        %p145 = scmp.lt.s32.totalorder %s19, 0
        %s146 = scalar_select %p145, %s19, 0
        %s147 = smul.addr %s146, 4
        %s148 = scalar_lea.vmem %s1, %s147
      $region16: #{decoder_forward.6} parent=11 // pred_fallthru
        _
      // Predicated region
      $region17: #{decoder_forward.6} parent=11 // pred_check
        %p149 = pneg %p99
      $region18: #{decoder_forward.6} parent=11 // pred_check_branch
        %151 = sbr.rel (%p149) target = $region20
      $region19: #{decoder_forward.6} parent=11 // pred_region
        %p152 = scmp.lt.s32.totalorder %s19, 0
        %s153 = scalar_select %p152, %s19, 0
        %s154 = scalar_lea.vmem %s2, %s153
      $region20: #{decoder_forward.6} parent=11 // pred_fallthru
        _
    $region12: #{decoder_forward.6} parent=5 // pred_fallthru
      _
    %p155 = scmp.lt.s32.totalorder %s9, 98
    // Predicated region
    $region21: #{decoder_forward.6} parent=5 // pred_check
      %p156 = pneg %p155
    $region22: #{decoder_forward.6} parent=5 // pred_check_branch
      %158 = sbr.rel (%p156) target = $region24
    $region23: #{decoder_forward.6} parent=5 // pred_region
      // Predicated region
      $region25: #{decoder_forward.6} parent=23 // pred_check
        %p159 = pneg %p41
      $region26: #{decoder_forward.6} parent=23 // pred_check_branch
        %161 = sbr.rel (%p159) target = $region28
      $region27: #{decoder_forward.6} parent=23 // pred_region
        %s162 = smul.u32 32, %s16
        %p163 = scmp.lt.s32.totalorder %s162, 3135
        %s164 = scalar_select %p163, %s162, 3135
        %s165 = smul.addr %s164, 3
        %s166 = smul.addr %s165, 4
        %s167 = scalar_lea.vmem %s0, %s166
        %s168 = smul.u32 32, %s16
      $region28: #{decoder_forward.6} parent=23 // pred_fallthru
        _
    $region24: #{decoder_forward.6} parent=5 // pred_fallthru
      _
    %p169 = scmp.le.s32.totalorder 1, %s9
    %p170 = scmp.lt.s32.totalorder %s9, 99
    %p171 = pnand %p169, %p170
    %p172 = pneg %p171
    // Predicated region
    $region29: #{decoder_forward.6} parent=5 // pred_check
      _
    $region30: #{decoder_forward.6} parent=5 // pred_check_branch
      %174 = sbr.rel (%p171) target = $region32
    $region31: #{decoder_forward.6} parent=5 // pred_region
      %s175 = ssub.s32 %s9, 1
      %s176 = smul.u32 32, %s18
      %p177 = scmp.lt.s32.totalorder %s176, 3135
      %s178 = scalar_select %p177, %s176, 3135
      %s179 = smul.addr %s178, 3
      %s180 = smul.addr %s179, 4
      %s181 = scalar_lea.vmem %s0, %s180
      %p182 = pneg %p47
      %p183 = pneg %p44
      %p184 = scmp.lt.s32.totalorder %s19, 0
      %s185 = scalar_select %p184, %s19, 0
      %s186 = smul.addr %s185, 4
      %s187 = scalar_lea.vmem %s1, %s186
      %p188 = pneg %p73
      %p189 = pneg %p70
      %p190 = scmp.lt.s32.totalorder %s19, 0
      %s191 = scalar_select %p190, %s19, 0
      %s192 = scalar_lea.vmem %s2, %s191
      %p193 = pneg %p99
      %p194 = pneg %p96
      %p195 = pneg %p127
      %p196 = pneg %p124
      %s197 = smul.u32 32, %s18
      %p198 = scmp.lt.s32.totalorder %s197, 3135
      %s199 = scalar_select %p198, %s197, 3135
      %p200 = scmp.lt.s32.totalorder %s19, 0
      %s201 = scalar_select %p200, %s19, 0
      %s202 = sadd.s32 %s201, %s199
      %s203 = smul.addr %s202, 4
      %s204 = scalar_lea.vmem %s3, %s203
      %s205 = smul.u32 32, %s18
      %p206 = scmp.lt.s32.totalorder %s205, 3135
      %s207 = scalar_select %p206, %s205, 3135
      %s208 = smul.addr %s207, 3
      %s209 = smul.addr %s208, 4
      %s210 = scalar_lea.vmem %s0, %s209
      %s211 = smul.u32 32, %s18
      %p212 = scmp.lt.s32.totalorder %s19, 0
      %s213 = scalar_select %p212, %s19, 0
      %s214 = smul.addr %s213, 4
      %s215 = scalar_lea.vmem %s1, %s214
      %p216 = scmp.lt.s32.totalorder %s19, 0
      %s217 = scalar_select %p216, %s19, 0
      %s218 = scalar_lea.vmem %s2, %s217
      %s219 = smul.u32 32, %s18
      %p220 = scmp.lt.s32.totalorder %s219, 3135
      %s221 = scalar_select %p220, %s219, 3135
      %p222 = scmp.lt.s32.totalorder %s19, 0
      %s223 = scalar_select %p222, %s19, 0
      %s224 = sadd.s32 %s223, %s221
      %s225 = smul.addr %s224, 4
      %s226 = scalar_lea.vmem %s3, %s225
      %s227 = smul.u32 32, %s18
      %v228 = vld [vmem:[%s210] sm:$0xff]
      %v229 = vld [vmem:[%s210 + $0x8] sm:$0xf]
      %v230 = vld [vmem:[%s210 + $0xc] sm:$0xff]
      %v231 = vld [vmem:[%s210 + $0x14] sm:$0xf]
      %v232 = vld [vmem:[%s210 + $0x18] sm:$0xff]
      %v233 = vld [vmem:[%s210 + $0x20] sm:$0xf]
      %v234 = vld [vmem:[%s210 + $0x24] sm:$0xff]
      %v235 = vld [vmem:[%s210 + $0x2c] sm:$0xf]
      %v236 = vld [vmem:[%s210 + $0x30] sm:$0xff]
      %v237 = vld [vmem:[%s210 + $0x38] sm:$0xf]
      %v238 = vld [vmem:[%s210 + $0x3c] sm:$0xff]
      %v239 = vld [vmem:[%s210 + $0x44] sm:$0xf]
      %v240 = vld [vmem:[%s210 + $0x48] sm:$0xff]
      %v241 = vld [vmem:[%s210 + $0x50] sm:$0xf]
      %v242 = vld [vmem:[%s210 + $0x54] sm:$0xff]
      %v243 = vld [vmem:[%s210 + $0x5c] sm:$0xf]
      %v244 = vld [vmem:[%s210 + $0x60] sm:$0xff]
      %v245 = vld [vmem:[%s210 + $0x68] sm:$0xf]
      %v246 = vld [vmem:[%s210 + $0x6c] sm:$0xff]
      %v247 = vld [vmem:[%s210 + $0x74] sm:$0xf]
      %v248 = vld [vmem:[%s210 + $0x78] sm:$0xff]
      %v249 = vld [vmem:[%s210 + $0x80] sm:$0xf]
      %v250 = vld [vmem:[%s210 + $0x84] sm:$0xff]
      %v251 = vld [vmem:[%s210 + $0x8c] sm:$0xf]
      %v252 = vld [vmem:[%s210 + $0x90] sm:$0xff]
      %v253 = vld [vmem:[%s210 + $0x98] sm:$0xf]
      %v254 = vld [vmem:[%s210 + $0x9c] sm:$0xff]
      %v255 = vld [vmem:[%s210 + $0xa4] sm:$0xf]
      %v256 = vld [vmem:[%s210 + $0xa8] sm:$0xff]
      %v257 = vld [vmem:[%s210 + $0xb0] sm:$0xf]
      %v258 = vld [vmem:[%s210 + $0xb4] sm:$0xff]
      %v259 = vld [vmem:[%s210 + $0xbc] sm:$0xf]
      %v260 = vld [vmem:[%s210 + $0xc0] sm:$0xff]
      %v261 = vld [vmem:[%s210 + $0xc8] sm:$0xf]
      %v262 = vld [vmem:[%s210 + $0xcc] sm:$0xff]
      %v263 = vld [vmem:[%s210 + $0xd4] sm:$0xf]
      %v264 = vld [vmem:[%s210 + $0xd8] sm:$0xff]
      %v265 = vld [vmem:[%s210 + $0xe0] sm:$0xf]
      %v266 = vld [vmem:[%s210 + $0xe4] sm:$0xff]
      %v267 = vld [vmem:[%s210 + $0xec] sm:$0xf]
      %v268 = vld [vmem:[%s210 + $0xf0] sm:$0xff]
      %v269 = vld [vmem:[%s210 + $0xf8] sm:$0xf]
      %v270 = vld [vmem:[%s210 + $0xfc] sm:$0xff]
      %v271 = vld [vmem:[%s210 + $0x104] sm:$0xf]
      %v272 = vld [vmem:[%s210 + $0x108] sm:$0xff]
      %v273 = vld [vmem:[%s210 + $0x110] sm:$0xf]
      %v274 = vld [vmem:[%s210 + $0x114] sm:$0xff]
      %v275 = vld [vmem:[%s210 + $0x11c] sm:$0xf]
      %v276 = vld [vmem:[%s210 + $0x120] sm:$0xff]
      %v277 = vld [vmem:[%s210 + $0x128] sm:$0xf]
      %v278 = vld [vmem:[%s210 + $0x12c] sm:$0xff]
      %v279 = vld [vmem:[%s210 + $0x134] sm:$0xf]
      %v280 = vld [vmem:[%s210 + $0x138] sm:$0xff]
      %v281 = vld [vmem:[%s210 + $0x140] sm:$0xf]
      %v282 = vld [vmem:[%s210 + $0x144] sm:$0xff]
      %v283 = vld [vmem:[%s210 + $0x14c] sm:$0xf]
      %v284 = vld [vmem:[%s210 + $0x150] sm:$0xff]
      %v285 = vld [vmem:[%s210 + $0x158] sm:$0xf]
      %v286 = vld [vmem:[%s210 + $0x15c] sm:$0xff]
      %v287 = vld [vmem:[%s210 + $0x164] sm:$0xf]
      %v288 = vld [vmem:[%s210 + $0x168] sm:$0xff]
      %v289 = vld [vmem:[%s210 + $0x170] sm:$0xf]
      %v290 = vld [vmem:[%s210 + $0x174] sm:$0xff]
      %v291 = vld [vmem:[%s210 + $0x17c] sm:$0xf]
      %v292 = vld [vmem:[%s215] sm:$0xf]
      %v293 = vld [vmem:[%s215 + $0x4] sm:$0xf]
      %v294 = vld [vmem:[%s215 + $0x8] sm:$0xf]
      %v295 = vld [vmem:[%s215 + $0xc] sm:$0xf]
      %v296 = vld [vmem:[%s215 + $0x10] sm:$0xf]
      %v297 = vld [vmem:[%s215 + $0x14] sm:$0xf]
      %v298 = vld [vmem:[%s215 + $0x18] sm:$0xf]
      %v299 = vld [vmem:[%s215 + $0x1c] sm:$0xf]
      %v300 = vld [vmem:[%s215 + $0x20] sm:$0xf]
      %v301 = vld [vmem:[%s215 + $0x24] sm:$0xf]
      %v302 = vld [vmem:[%s215 + $0x28] sm:$0xf]
      %v303 = vld [vmem:[%s215 + $0x2c] sm:$0xf]
      %v304 = vld [vmem:[%s215 + $0x30] sm:$0xf]
      %v305 = vld [vmem:[%s215 + $0x34] sm:$0xf]
      %v306 = vld [vmem:[%s215 + $0x38] sm:$0xf]
      %v307 = vld [vmem:[%s215 + $0x3c] sm:$0xf]
      %v308 = vld [vmem:[%s215 + $0x40] sm:$0xf]
      %v309 = vld [vmem:[%s215 + $0x44] sm:$0xf]
      %v310 = vld [vmem:[%s215 + $0x48] sm:$0xf]
      %v311 = vld [vmem:[%s215 + $0x4c] sm:$0xf]
      %v312 = vld [vmem:[%s215 + $0x50] sm:$0xf]
      %v313 = vld [vmem:[%s215 + $0x54] sm:$0xf]
      %v314 = vld [vmem:[%s215 + $0x58] sm:$0xf]
      %v315 = vld [vmem:[%s215 + $0x5c] sm:$0xf]
      %v316 = vld [vmem:[%s215 + $0x60] sm:$0xf]
      %v317 = vld [vmem:[%s215 + $0x64] sm:$0xf]
      %v318 = vld [vmem:[%s215 + $0x68] sm:$0xf]
      %v319 = vld [vmem:[%s215 + $0x6c] sm:$0xf]
      %v320 = vld [vmem:[%s215 + $0x70] sm:$0xf]
      %v321 = vld [vmem:[%s215 + $0x74] sm:$0xf]
      %v322 = vld [vmem:[%s215 + $0x78] sm:$0xf]
      %v323 = vld [vmem:[%s215 + $0x7c] sm:$0xf]
      %v324 = vld [vmem:[%s215 + $0x80] sm:$0xf]
      %v325 = vld [vmem:[%s215 + $0x84] sm:$0xf]
      %v326 = vld [vmem:[%s215 + $0x88] sm:$0xf]
      %v327 = vld [vmem:[%s215 + $0x8c] sm:$0xf]
      %v328 = vld [vmem:[%s215 + $0x90] sm:$0xf]
      %v329 = vld [vmem:[%s215 + $0x94] sm:$0xf]
      %v330 = vld [vmem:[%s215 + $0x98] sm:$0xf]
      %v331 = vld [vmem:[%s215 + $0x9c] sm:$0xf]
      %v332 = vld [vmem:[%s215 + $0xa0] sm:$0xf]
      %v333 = vld [vmem:[%s215 + $0xa4] sm:$0xf]
      %v334 = vld [vmem:[%s215 + $0xa8] sm:$0xf]
      %v335 = vld [vmem:[%s215 + $0xac] sm:$0xf]
      %v336 = vld [vmem:[%s215 + $0xb0] sm:$0xf]
      %v337 = vld [vmem:[%s215 + $0xb4] sm:$0xf]
      %v338 = vld [vmem:[%s215 + $0xb8] sm:$0xf]
      %v339 = vld [vmem:[%s215 + $0xbc] sm:$0xf]
      %v340 = vld [vmem:[%s218] sm:$0x1]
      %v342 = vperm.slane %v340, 0
      %v408 = vunpack.c.l.b16 %v228
      %v409 = vunpack.c.h.b16 %v228
      %v410 = vunpack.c.l.b16 %v229
      %v411 = vunpack.c.l.b16 %v230
      %v412 = vunpack.c.h.b16 %v230
      %v413 = vunpack.c.l.b16 %v231
      %v414 = vunpack.c.l.b16 %v232
      %v415 = vunpack.c.h.b16 %v232
      %v416 = vunpack.c.l.b16 %v233
      %v417 = vunpack.c.l.b16 %v234
      %v418 = vunpack.c.h.b16 %v234
      %v419 = vunpack.c.l.b16 %v235
      %v420 = vunpack.c.l.b16 %v236
      %v421 = vunpack.c.h.b16 %v236
      %v422 = vunpack.c.l.b16 %v237
      %v423 = vunpack.c.l.b16 %v238
      %v424 = vunpack.c.h.b16 %v238
      %v425 = vunpack.c.l.b16 %v239
      %v426 = vunpack.c.l.b16 %v240
      %v427 = vunpack.c.h.b16 %v240
      %v428 = vunpack.c.l.b16 %v241
      %v429 = vunpack.c.l.b16 %v242
      %v430 = vunpack.c.h.b16 %v242
      %v431 = vunpack.c.l.b16 %v243
      %v432 = vunpack.c.l.b16 %v244
      %v433 = vunpack.c.h.b16 %v244
      %v434 = vunpack.c.l.b16 %v245
      %v435 = vunpack.c.l.b16 %v246
      %v436 = vunpack.c.h.b16 %v246
      %v437 = vunpack.c.l.b16 %v247
      %v438 = vunpack.c.l.b16 %v248
      %v439 = vunpack.c.h.b16 %v248
      %v440 = vunpack.c.l.b16 %v249
      %v441 = vunpack.c.l.b16 %v250
      %v442 = vunpack.c.h.b16 %v250
      %v443 = vunpack.c.l.b16 %v251
      %v444 = vunpack.c.l.b16 %v252
      %v445 = vunpack.c.h.b16 %v252
      %v446 = vunpack.c.l.b16 %v253
      %v447 = vunpack.c.l.b16 %v254
      %v448 = vunpack.c.h.b16 %v254
      %v449 = vunpack.c.l.b16 %v255
      %v450 = vunpack.c.l.b16 %v256
      %v451 = vunpack.c.h.b16 %v256
      %v452 = vunpack.c.l.b16 %v257
      %v453 = vunpack.c.l.b16 %v258
      %v454 = vunpack.c.h.b16 %v258
      %v455 = vunpack.c.l.b16 %v259
      %v456 = vunpack.c.l.b16 %v260
      %v457 = vunpack.c.h.b16 %v260
      %v458 = vunpack.c.l.b16 %v261
      %v459 = vunpack.c.l.b16 %v262
      %v460 = vunpack.c.h.b16 %v262
      %v461 = vunpack.c.l.b16 %v263
      %v462 = vunpack.c.l.b16 %v264
      %v463 = vunpack.c.h.b16 %v264
      %v464 = vunpack.c.l.b16 %v265
      %v465 = vunpack.c.l.b16 %v266
      %v466 = vunpack.c.h.b16 %v266
      %v467 = vunpack.c.l.b16 %v267
      %v468 = vunpack.c.l.b16 %v268
      %v469 = vunpack.c.h.b16 %v268
      %v470 = vunpack.c.l.b16 %v269
      %v471 = vunpack.c.l.b16 %v270
      %v472 = vunpack.c.h.b16 %v270
      %v473 = vunpack.c.l.b16 %v271
      %v474 = vunpack.c.l.b16 %v272
      %v475 = vunpack.c.h.b16 %v272
      %v476 = vunpack.c.l.b16 %v273
      %v477 = vunpack.c.l.b16 %v274
      %v478 = vunpack.c.h.b16 %v274
      %v479 = vunpack.c.l.b16 %v275
      %v480 = vunpack.c.l.b16 %v276
      %v481 = vunpack.c.h.b16 %v276
      %v482 = vunpack.c.l.b16 %v277
      %v483 = vunpack.c.l.b16 %v278
      %v484 = vunpack.c.h.b16 %v278
      %v485 = vunpack.c.l.b16 %v279
      %v486 = vunpack.c.l.b16 %v280
      %v487 = vunpack.c.h.b16 %v280
      %v488 = vunpack.c.l.b16 %v281
      %v489 = vunpack.c.l.b16 %v282
      %v490 = vunpack.c.h.b16 %v282
      %v491 = vunpack.c.l.b16 %v283
      %v492 = vunpack.c.l.b16 %v284
      %v493 = vunpack.c.h.b16 %v284
      %v494 = vunpack.c.l.b16 %v285
      %v495 = vunpack.c.l.b16 %v286
      %v496 = vunpack.c.h.b16 %v286
      %v497 = vunpack.c.l.b16 %v287
      %v498 = vunpack.c.l.b16 %v288
      %v499 = vunpack.c.h.b16 %v288
      %v500 = vunpack.c.l.b16 %v289
      %v501 = vunpack.c.l.b16 %v290
      %v502 = vunpack.c.h.b16 %v290
      %v503 = vunpack.c.l.b16 %v291
      %v504 = vpack.c.b16 %v411, %v408
      %v505 = vpack.c.b16 %v412, %v409
      %v506 = vpack.c.b16 %v413, %v410
      %v507 = vpack.c.b16 %v417, %v414
      %v508 = vpack.c.b16 %v418, %v415
      %v509 = vpack.c.b16 %v419, %v416
      %v510 = vpack.c.b16 %v423, %v420
      %v511 = vpack.c.b16 %v424, %v421
      %v512 = vpack.c.b16 %v425, %v422
      %v513 = vpack.c.b16 %v429, %v426
      %v514 = vpack.c.b16 %v430, %v427
      %v515 = vpack.c.b16 %v431, %v428
      %v516 = vpack.c.b16 %v435, %v432
      %v517 = vpack.c.b16 %v436, %v433
      %v518 = vpack.c.b16 %v437, %v434
      %v519 = vpack.c.b16 %v441, %v438
      %v520 = vpack.c.b16 %v442, %v439
      %v521 = vpack.c.b16 %v443, %v440
      %v522 = vpack.c.b16 %v447, %v444
      %v523 = vpack.c.b16 %v448, %v445
      %v524 = vpack.c.b16 %v449, %v446
      %v525 = vpack.c.b16 %v453, %v450
      %v526 = vpack.c.b16 %v454, %v451
      %v527 = vpack.c.b16 %v455, %v452
      %v528 = vpack.c.b16 %v459, %v456
      %v529 = vpack.c.b16 %v460, %v457
      %v530 = vpack.c.b16 %v461, %v458
      %v531 = vpack.c.b16 %v465, %v462
      %v532 = vpack.c.b16 %v466, %v463
      %v533 = vpack.c.b16 %v467, %v464
      %v534 = vpack.c.b16 %v471, %v468
      %v535 = vpack.c.b16 %v472, %v469
      %v536 = vpack.c.b16 %v473, %v470
      %v537 = vpack.c.b16 %v477, %v474
      %v538 = vpack.c.b16 %v478, %v475
      %v539 = vpack.c.b16 %v479, %v476
      %v540 = vpack.c.b16 %v483, %v480
      %v541 = vpack.c.b16 %v484, %v481
      %v542 = vpack.c.b16 %v485, %v482
      %v543 = vpack.c.b16 %v489, %v486
      %v544 = vpack.c.b16 %v490, %v487
      %v545 = vpack.c.b16 %v491, %v488
      %v546 = vpack.c.b16 %v495, %v492
      %v547 = vpack.c.b16 %v496, %v493
      %v548 = vpack.c.b16 %v497, %v494
      %v549 = vpack.c.b16 %v501, %v498
      %v550 = vpack.c.b16 %v502, %v499
      %v551 = vpack.c.b16 %v503, %v500
      %v648 = vunpack.c.l.b16 %v292
      %v649 = vunpack.c.l.b16 %v293
      %v650 = vunpack.c.l.b16 %v294
      %v651 = vunpack.c.l.b16 %v295
      %v652 = vunpack.c.l.b16 %v296
      %v653 = vunpack.c.l.b16 %v297
      %v654 = vunpack.c.l.b16 %v298
      %v655 = vunpack.c.l.b16 %v299
      %v656 = vunpack.c.l.b16 %v300
      %v657 = vunpack.c.l.b16 %v301
      %v658 = vunpack.c.l.b16 %v302
      %v659 = vunpack.c.l.b16 %v303
      %v660 = vunpack.c.l.b16 %v304
      %v661 = vunpack.c.l.b16 %v305
      %v662 = vunpack.c.l.b16 %v306
      %v663 = vunpack.c.l.b16 %v307
      %v664 = vunpack.c.l.b16 %v308
      %v665 = vunpack.c.l.b16 %v309
      %v666 = vunpack.c.l.b16 %v310
      %v667 = vunpack.c.l.b16 %v311
      %v668 = vunpack.c.l.b16 %v312
      %v669 = vunpack.c.l.b16 %v313
      %v670 = vunpack.c.l.b16 %v314
      %v671 = vunpack.c.l.b16 %v315
      %v672 = vunpack.c.l.b16 %v316
      %v673 = vunpack.c.l.b16 %v317
      %v674 = vunpack.c.l.b16 %v318
      %v675 = vunpack.c.l.b16 %v319
      %v676 = vunpack.c.l.b16 %v320
      %v677 = vunpack.c.l.b16 %v321
      %v678 = vunpack.c.l.b16 %v322
      %v679 = vunpack.c.l.b16 %v323
      %v680 = vunpack.c.l.b16 %v324
      %v681 = vunpack.c.l.b16 %v325
      %v682 = vunpack.c.l.b16 %v326
      %v683 = vunpack.c.l.b16 %v327
      %v684 = vunpack.c.l.b16 %v328
      %v685 = vunpack.c.l.b16 %v329
      %v686 = vunpack.c.l.b16 %v330
      %v687 = vunpack.c.l.b16 %v331
      %v688 = vunpack.c.l.b16 %v332
      %v689 = vunpack.c.l.b16 %v333
      %v690 = vunpack.c.l.b16 %v334
      %v691 = vunpack.c.l.b16 %v335
      %v692 = vunpack.c.l.b16 %v336
      %v693 = vunpack.c.l.b16 %v337
      %v694 = vunpack.c.l.b16 %v338
      %v695 = vunpack.c.l.b16 %v339
      %v696 = vpack.c.b16 %v649, %v648
      %v697 = vpack.c.b16 %v651, %v650
      %v698 = vpack.c.b16 %v653, %v652
      %v699 = vpack.c.b16 %v655, %v654
      %v700 = vpack.c.b16 %v657, %v656
      %v701 = vpack.c.b16 %v659, %v658
      %v702 = vpack.c.b16 %v661, %v660
      %v703 = vpack.c.b16 %v663, %v662
      %v704 = vpack.c.b16 %v665, %v664
      %v705 = vpack.c.b16 %v667, %v666
      %v706 = vpack.c.b16 %v669, %v668
      %v707 = vpack.c.b16 %v671, %v670
      %v708 = vpack.c.b16 %v673, %v672
      %v709 = vpack.c.b16 %v675, %v674
      %v710 = vpack.c.b16 %v677, %v676
      %v711 = vpack.c.b16 %v679, %v678
      %v712 = vpack.c.b16 %v681, %v680
      %v713 = vpack.c.b16 %v683, %v682
      %v714 = vpack.c.b16 %v685, %v684
      %v715 = vpack.c.b16 %v687, %v686
      %v716 = vpack.c.b16 %v689, %v688
      %v717 = vpack.c.b16 %v691, %v690
      %v718 = vpack.c.b16 %v693, %v692
      %v719 = vpack.c.b16 %v695, %v694
      %744 = vmatpush.bf16.msra.mxu0 %v703
      %745 = vmatpush.bf16.msra.mxu0 %v702
      %746 = vmatpush.bf16.msra.mxu0 %v701
      %747 = vmatpush.bf16.msra.mxu0 %v700
      %748 = vmatpush.bf16.msra.mxu0 %v699
      %749 = vmatpush.bf16.msra.mxu0 %v698
      %750 = vmatpush.bf16.msra.mxu0 %v697
      %751 = vmatpush.bf16.msra.mxu0 %v696
      %752 = vmatmul.bf16.gmra.mxu0 %v504
      %v753 = vpop.f32.mrf.mxu0
      %v754 = vadd.f32 %v342, %v753
      %v755 = vpop.f32.mrf.mxu0
      %v756 = vadd.f32 %v342, %v755
      %757 = vmatmul.bf16.gmra.mxu0 %v507
      %v758 = vpop.f32.mrf.mxu0
      %v759 = vadd.f32 %v342, %v758
      %v760 = vpop.f32.mrf.mxu0
      %v761 = vadd.f32 %v342, %v760
      %762 = vmatmul.bf16.gmra.mxu0 %v510
      %v763 = vpop.f32.mrf.mxu0
      %v764 = vadd.f32 %v342, %v763
      %v765 = vpop.f32.mrf.mxu0
      %v766 = vadd.f32 %v342, %v765
      %767 = vmatmul.bf16.gmra.mxu0 %v513
      %v768 = vpop.f32.mrf.mxu0
      %v769 = vadd.f32 %v342, %v768
      %v770 = vpop.f32.mrf.mxu0
      %v771 = vadd.f32 %v342, %v770
      %772 = vmatmul.bf16.gmra.mxu0 %v516
      %v773 = vpop.f32.mrf.mxu0
      %v774 = vadd.f32 %v342, %v773
      %v775 = vpop.f32.mrf.mxu0
      %v776 = vadd.f32 %v342, %v775
      %777 = vmatmul.bf16.gmra.mxu0 %v519
      %v778 = vpop.f32.mrf.mxu0
      %v779 = vadd.f32 %v342, %v778
      %v780 = vpop.f32.mrf.mxu0
      %v781 = vadd.f32 %v342, %v780
      %782 = vmatmul.bf16.gmra.mxu0 %v522
      %v783 = vpop.f32.mrf.mxu0
      %v784 = vadd.f32 %v342, %v783
      %v785 = vpop.f32.mrf.mxu0
      %v786 = vadd.f32 %v342, %v785
      %787 = vmatmul.bf16.gmra.mxu0 %v525
      %v788 = vpop.f32.mrf.mxu0
      %v789 = vadd.f32 %v342, %v788
      %v790 = vpop.f32.mrf.mxu0
      %v791 = vadd.f32 %v342, %v790
      %792 = vmatmul.bf16.gmra.mxu0 %v528
      %v793 = vpop.f32.mrf.mxu0
      %v794 = vadd.f32 %v342, %v793
      %v795 = vpop.f32.mrf.mxu0
      %v796 = vadd.f32 %v342, %v795
      %797 = vmatmul.bf16.gmra.mxu0 %v531
      %v798 = vpop.f32.mrf.mxu0
      %v799 = vadd.f32 %v342, %v798
      %v800 = vpop.f32.mrf.mxu0
      %v801 = vadd.f32 %v342, %v800
      %802 = vmatmul.bf16.gmra.mxu0 %v534
      %v803 = vpop.f32.mrf.mxu0
      %v804 = vadd.f32 %v342, %v803
      %v805 = vpop.f32.mrf.mxu0
      %v806 = vadd.f32 %v342, %v805
      %807 = vmatmul.bf16.gmra.mxu0 %v537
      %v808 = vpop.f32.mrf.mxu0
      %v809 = vadd.f32 %v342, %v808
      %v810 = vpop.f32.mrf.mxu0
      %v811 = vadd.f32 %v342, %v810
      %812 = vmatmul.bf16.gmra.mxu0 %v540
      %v813 = vpop.f32.mrf.mxu0
      %v814 = vadd.f32 %v342, %v813
      %v815 = vpop.f32.mrf.mxu0
      %v816 = vadd.f32 %v342, %v815
      %817 = vmatmul.bf16.gmra.mxu0 %v543
      %v818 = vpop.f32.mrf.mxu0
      %v819 = vadd.f32 %v342, %v818
      %v820 = vpop.f32.mrf.mxu0
      %v821 = vadd.f32 %v342, %v820
      %822 = vmatmul.bf16.gmra.mxu0 %v546
      %v823 = vpop.f32.mrf.mxu0
      %v824 = vadd.f32 %v342, %v823
      %v825 = vpop.f32.mrf.mxu0
      %v826 = vadd.f32 %v342, %v825
      %827 = vmatmul.bf16.gmra.mxu0 %v549
      %v828 = vpop.f32.mrf.mxu0
      %v829 = vadd.f32 %v342, %v828
      %v830 = vpop.f32.mrf.mxu0
      %v831 = vadd.f32 %v342, %v830
      %832 = vdwg.mxu0
      %833 = vmatpush.bf16.msra.mxu0 %v711
      %834 = vmatpush.bf16.msra.mxu0 %v710
      %835 = vmatpush.bf16.msra.mxu0 %v709
      %836 = vmatpush.bf16.msra.mxu0 %v708
      %837 = vmatpush.bf16.msra.mxu0 %v707
      %838 = vmatpush.bf16.msra.mxu0 %v706
      %839 = vmatpush.bf16.msra.mxu0 %v705
      %840 = vmatpush.bf16.msra.mxu0 %v704
      %841 = vmatmul.bf16.gmra.mxu0 %v505
      %v842 = vpop.f32.mrf.mxu0
      %v843 = vadd.f32 %v754, %v842
      %v844 = vpop.f32.mrf.mxu0
      %v845 = vadd.f32 %v756, %v844
      %846 = vmatmul.bf16.gmra.mxu0 %v508
      %v847 = vpop.f32.mrf.mxu0
      %v848 = vadd.f32 %v759, %v847
      %v849 = vpop.f32.mrf.mxu0
      %v850 = vadd.f32 %v761, %v849
      %851 = vmatmul.bf16.gmra.mxu0 %v511
      %v852 = vpop.f32.mrf.mxu0
      %v853 = vadd.f32 %v764, %v852
      %v854 = vpop.f32.mrf.mxu0
      %v855 = vadd.f32 %v766, %v854
      %856 = vmatmul.bf16.gmra.mxu0 %v514
      %v857 = vpop.f32.mrf.mxu0
      %v858 = vadd.f32 %v769, %v857
      %v859 = vpop.f32.mrf.mxu0
      %v860 = vadd.f32 %v771, %v859
      %861 = vmatmul.bf16.gmra.mxu0 %v517
      %v862 = vpop.f32.mrf.mxu0
      %v863 = vadd.f32 %v774, %v862
      %v864 = vpop.f32.mrf.mxu0
      %v865 = vadd.f32 %v776, %v864
      %866 = vmatmul.bf16.gmra.mxu0 %v520
      %v867 = vpop.f32.mrf.mxu0
      %v868 = vadd.f32 %v779, %v867
      %v869 = vpop.f32.mrf.mxu0
      %v870 = vadd.f32 %v781, %v869
      %871 = vmatmul.bf16.gmra.mxu0 %v523
      %v872 = vpop.f32.mrf.mxu0
      %v873 = vadd.f32 %v784, %v872
      %v874 = vpop.f32.mrf.mxu0
      %v875 = vadd.f32 %v786, %v874
      %876 = vmatmul.bf16.gmra.mxu0 %v526
      %v877 = vpop.f32.mrf.mxu0
      %v878 = vadd.f32 %v789, %v877
      %v879 = vpop.f32.mrf.mxu0
      %v880 = vadd.f32 %v791, %v879
      %881 = vmatmul.bf16.gmra.mxu0 %v529
      %v882 = vpop.f32.mrf.mxu0
      %v883 = vadd.f32 %v794, %v882
      %v884 = vpop.f32.mrf.mxu0
      %v885 = vadd.f32 %v796, %v884
      %886 = vmatmul.bf16.gmra.mxu0 %v532
      %v887 = vpop.f32.mrf.mxu0
      %v888 = vadd.f32 %v799, %v887
      %v889 = vpop.f32.mrf.mxu0
      %v890 = vadd.f32 %v801, %v889
      %891 = vmatmul.bf16.gmra.mxu0 %v535
      %v892 = vpop.f32.mrf.mxu0
      %v893 = vadd.f32 %v804, %v892
      %v894 = vpop.f32.mrf.mxu0
      %v895 = vadd.f32 %v806, %v894
      %896 = vmatmul.bf16.gmra.mxu0 %v538
      %v897 = vpop.f32.mrf.mxu0
      %v898 = vadd.f32 %v809, %v897
      %v899 = vpop.f32.mrf.mxu0
      %v900 = vadd.f32 %v811, %v899
      %901 = vmatmul.bf16.gmra.mxu0 %v541
      %v902 = vpop.f32.mrf.mxu0
      %v903 = vadd.f32 %v814, %v902
      %v904 = vpop.f32.mrf.mxu0
      %v905 = vadd.f32 %v816, %v904
      %906 = vmatmul.bf16.gmra.mxu0 %v544
      %v907 = vpop.f32.mrf.mxu0
      %v908 = vadd.f32 %v819, %v907
      %v909 = vpop.f32.mrf.mxu0
      %v910 = vadd.f32 %v821, %v909
      %911 = vmatmul.bf16.gmra.mxu0 %v547
      %v912 = vpop.f32.mrf.mxu0
      %v913 = vadd.f32 %v824, %v912
      %v914 = vpop.f32.mrf.mxu0
      %v915 = vadd.f32 %v826, %v914
      %916 = vmatmul.bf16.gmra.mxu0 %v550
      %v917 = vpop.f32.mrf.mxu0
      %v918 = vadd.f32 %v829, %v917
      %v919 = vpop.f32.mrf.mxu0
      %v920 = vadd.f32 %v831, %v919
      %921 = vdwg.mxu0
      %922 = vmatpush.bf16.msra.mxu0 %v719
      %923 = vmatpush.bf16.msra.mxu0 %v718
      %924 = vmatpush.bf16.msra.mxu0 %v717
      %925 = vmatpush.bf16.msra.mxu0 %v716
      %926 = vmatpush.bf16.msra.mxu0 %v715
      %927 = vmatpush.bf16.msra.mxu0 %v714
      %928 = vmatpush.bf16.msra.mxu0 %v713
      %929 = vmatpush.bf16.msra.mxu0 %v712
      %930 = vmatmul.bf16.gmra.mxu0 %v506
      %v931 = vpop.f32.mrf.mxu0
      %v932 = vadd.f32 %v843, %v931
      %v933 = vpop.f32.mrf.mxu0
      %v934 = vadd.f32 %v845, %v933
      %935 = vmatmul.bf16.gmra.mxu0 %v509
      %v936 = vpop.f32.mrf.mxu0
      %v937 = vadd.f32 %v848, %v936
      %v938 = vpop.f32.mrf.mxu0
      %v939 = vadd.f32 %v850, %v938
      %940 = vmatmul.bf16.gmra.mxu0 %v512
      %v941 = vpop.f32.mrf.mxu0
      %v942 = vadd.f32 %v853, %v941
      %v943 = vpop.f32.mrf.mxu0
      %v944 = vadd.f32 %v855, %v943
      %945 = vmatmul.bf16.gmra.mxu0 %v515
      %v946 = vpop.f32.mrf.mxu0
      %v947 = vadd.f32 %v858, %v946
      %v948 = vpop.f32.mrf.mxu0
      %v949 = vadd.f32 %v860, %v948
      %950 = vmatmul.bf16.gmra.mxu0 %v518
      %v951 = vpop.f32.mrf.mxu0
      %v952 = vadd.f32 %v863, %v951
      %v953 = vpop.f32.mrf.mxu0
      %v954 = vadd.f32 %v865, %v953
      %955 = vmatmul.bf16.gmra.mxu0 %v521
      %v956 = vpop.f32.mrf.mxu0
      %v957 = vadd.f32 %v868, %v956
      %v958 = vpop.f32.mrf.mxu0
      %v959 = vadd.f32 %v870, %v958
      %960 = vmatmul.bf16.gmra.mxu0 %v524
      %v961 = vpop.f32.mrf.mxu0
      %v962 = vadd.f32 %v873, %v961
      %v963 = vpop.f32.mrf.mxu0
      %v964 = vadd.f32 %v875, %v963
      %965 = vmatmul.bf16.gmra.mxu0 %v527
      %v966 = vpop.f32.mrf.mxu0
      %v967 = vadd.f32 %v878, %v966
      %v968 = vpop.f32.mrf.mxu0
      %v969 = vadd.f32 %v880, %v968
      %970 = vmatmul.bf16.gmra.mxu0 %v530
      %v971 = vpop.f32.mrf.mxu0
      %v972 = vadd.f32 %v883, %v971
      %v973 = vpop.f32.mrf.mxu0
      %v974 = vadd.f32 %v885, %v973
      %975 = vmatmul.bf16.gmra.mxu0 %v533
      %v976 = vpop.f32.mrf.mxu0
      %v977 = vadd.f32 %v888, %v976
      %v978 = vpop.f32.mrf.mxu0
      %v979 = vadd.f32 %v890, %v978
      %980 = vmatmul.bf16.gmra.mxu0 %v536
      %v981 = vpop.f32.mrf.mxu0
      %v982 = vadd.f32 %v893, %v981
      %v983 = vpop.f32.mrf.mxu0
      %v984 = vadd.f32 %v895, %v983
      %985 = vmatmul.bf16.gmra.mxu0 %v539
      %v986 = vpop.f32.mrf.mxu0
      %v987 = vadd.f32 %v898, %v986
      %v988 = vpop.f32.mrf.mxu0
      %v989 = vadd.f32 %v900, %v988
      %990 = vmatmul.bf16.gmra.mxu0 %v542
      %v991 = vpop.f32.mrf.mxu0
      %v992 = vadd.f32 %v903, %v991
      %v993 = vpop.f32.mrf.mxu0
      %v994 = vadd.f32 %v905, %v993
      %995 = vmatmul.bf16.gmra.mxu0 %v545
      %v996 = vpop.f32.mrf.mxu0
      %v997 = vadd.f32 %v908, %v996
      %v998 = vpop.f32.mrf.mxu0
      %v999 = vadd.f32 %v910, %v998
      %1000 = vmatmul.bf16.gmra.mxu0 %v548
      %v1001 = vpop.f32.mrf.mxu0
      %v1002 = vadd.f32 %v913, %v1001
      %v1003 = vpop.f32.mrf.mxu0
      %v1004 = vadd.f32 %v915, %v1003
      %1005 = vmatmul.bf16.gmra.mxu0 %v551
      %v1006 = vpop.f32.mrf.mxu0
      %v1007 = vadd.f32 %v918, %v1006
      %v1008 = vpop.f32.mrf.mxu0
      %v1009 = vadd.f32 %v920, %v1008
      %1010 = vdwg.mxu0
      %v1011 = vmax.f32 %v932, 0.0
      %v1012 = vmax.f32 %v934, 0.0
      %v1013 = vmax.f32 %v937, 0.0
      %v1014 = vmax.f32 %v939, 0.0
      %v1015 = vmax.f32 %v942, 0.0
      %v1016 = vmax.f32 %v944, 0.0
      %v1017 = vmax.f32 %v947, 0.0
      %v1018 = vmax.f32 %v949, 0.0
      %v1019 = vmax.f32 %v952, 0.0
      %v1020 = vmax.f32 %v954, 0.0
      %v1021 = vmax.f32 %v957, 0.0
      %v1022 = vmax.f32 %v959, 0.0
      %v1023 = vmax.f32 %v962, 0.0
      %v1024 = vmax.f32 %v964, 0.0
      %v1025 = vmax.f32 %v967, 0.0
      %v1026 = vmax.f32 %v969, 0.0
      %v1027 = vmax.f32 %v972, 0.0
      %v1028 = vmax.f32 %v974, 0.0
      %v1029 = vmax.f32 %v977, 0.0
      %v1030 = vmax.f32 %v979, 0.0
      %v1031 = vmax.f32 %v982, 0.0
      %v1032 = vmax.f32 %v984, 0.0
      %v1033 = vmax.f32 %v987, 0.0
      %v1034 = vmax.f32 %v989, 0.0
      %v1035 = vmax.f32 %v992, 0.0
      %v1036 = vmax.f32 %v994, 0.0
      %v1037 = vmax.f32 %v997, 0.0
      %v1038 = vmax.f32 %v999, 0.0
      %v1039 = vmax.f32 %v1002, 0.0
      %v1040 = vmax.f32 %v1004, 0.0
      %v1041 = vmax.f32 %v1007, 0.0
      %v1042 = vmax.f32 %v1009, 0.0
      %v1043 = vpack.c.bf16 %v1011, %v1011
      %v1044 = vpack.c.bf16 %v1012, %v1012
      %v1045 = vpack.c.bf16 %v1013, %v1013
      %v1046 = vpack.c.bf16 %v1014, %v1014
      %v1047 = vpack.c.bf16 %v1015, %v1015
      %v1048 = vpack.c.bf16 %v1016, %v1016
      %v1049 = vpack.c.bf16 %v1017, %v1017
      %v1050 = vpack.c.bf16 %v1018, %v1018
      %v1051 = vpack.c.bf16 %v1019, %v1019
      %v1052 = vpack.c.bf16 %v1020, %v1020
      %v1053 = vpack.c.bf16 %v1021, %v1021
      %v1054 = vpack.c.bf16 %v1022, %v1022
      %v1055 = vpack.c.bf16 %v1023, %v1023
      %v1056 = vpack.c.bf16 %v1024, %v1024
      %v1057 = vpack.c.bf16 %v1025, %v1025
      %v1058 = vpack.c.bf16 %v1026, %v1026
      %v1059 = vpack.c.bf16 %v1027, %v1027
      %v1060 = vpack.c.bf16 %v1028, %v1028
      %v1061 = vpack.c.bf16 %v1029, %v1029
      %v1062 = vpack.c.bf16 %v1030, %v1030
      %v1063 = vpack.c.bf16 %v1031, %v1031
      %v1064 = vpack.c.bf16 %v1032, %v1032
      %v1065 = vpack.c.bf16 %v1033, %v1033
      %v1066 = vpack.c.bf16 %v1034, %v1034
      %v1067 = vpack.c.bf16 %v1035, %v1035
      %v1068 = vpack.c.bf16 %v1036, %v1036
      %v1069 = vpack.c.bf16 %v1037, %v1037
      %v1070 = vpack.c.bf16 %v1038, %v1038
      %v1071 = vpack.c.bf16 %v1039, %v1039
      %v1072 = vpack.c.bf16 %v1040, %v1040
      %v1073 = vpack.c.bf16 %v1041, %v1041
      %v1074 = vpack.c.bf16 %v1042, %v1042
      %1075 = vst [vmem:[%s226] sm:$0xf] %v1043
      %1076 = vst [vmem:[%s226 + $0x4] sm:$0xf] %v1044
      %1077 = vst [vmem:[%s226 + $0x8] sm:$0xf] %v1045
      %1078 = vst [vmem:[%s226 + $0xc] sm:$0xf] %v1046
      %1079 = vst [vmem:[%s226 + $0x10] sm:$0xf] %v1047
      %1080 = vst [vmem:[%s226 + $0x14] sm:$0xf] %v1048
      %1081 = vst [vmem:[%s226 + $0x18] sm:$0xf] %v1049
      %1082 = vst [vmem:[%s226 + $0x1c] sm:$0xf] %v1050
      %1083 = vst [vmem:[%s226 + $0x20] sm:$0xf] %v1051
      %1084 = vst [vmem:[%s226 + $0x24] sm:$0xf] %v1052
      %1085 = vst [vmem:[%s226 + $0x28] sm:$0xf] %v1053
      %1086 = vst [vmem:[%s226 + $0x2c] sm:$0xf] %v1054
      %1087 = vst [vmem:[%s226 + $0x30] sm:$0xf] %v1055
      %1088 = vst [vmem:[%s226 + $0x34] sm:$0xf] %v1056
      %1089 = vst [vmem:[%s226 + $0x38] sm:$0xf] %v1057
      %1090 = vst [vmem:[%s226 + $0x3c] sm:$0xf] %v1058
      %1091 = vst [vmem:[%s226 + $0x40] sm:$0xf] %v1059
      %1092 = vst [vmem:[%s226 + $0x44] sm:$0xf] %v1060
      %1093 = vst [vmem:[%s226 + $0x48] sm:$0xf] %v1061
      %1094 = vst [vmem:[%s226 + $0x4c] sm:$0xf] %v1062
      %1095 = vst [vmem:[%s226 + $0x50] sm:$0xf] %v1063
      %1096 = vst [vmem:[%s226 + $0x54] sm:$0xf] %v1064
      %1097 = vst [vmem:[%s226 + $0x58] sm:$0xf] %v1065
      %1098 = vst [vmem:[%s226 + $0x5c] sm:$0xf] %v1066
      %1099 = vst [vmem:[%s226 + $0x60] sm:$0xf] %v1067
      %1100 = vst [vmem:[%s226 + $0x64] sm:$0xf] %v1068
      %1101 = vst [vmem:[%s226 + $0x68] sm:$0xf] %v1069
      %1102 = vst [vmem:[%s226 + $0x6c] sm:$0xf] %v1070
      %1103 = vst [vmem:[%s226 + $0x70] sm:$0xf] %v1071
      %1104 = vst [vmem:[%s226 + $0x74] sm:$0xf] %v1072
      %1105 = vst [vmem:[%s226 + $0x78] sm:$0xf] %v1073
      %1106 = vst [vmem:[%s226 + $0x7c] sm:$0xf] %v1074
      %s1107 = smul.u32 32, %s18
      %p1108 = scmp.lt.s32.totalorder %s1107, 3135
      %s1109 = scalar_select %p1108, %s1107, 3135
      %p1110 = scmp.lt.s32.totalorder %s19, 0
      %s1111 = scalar_select %p1110, %s19, 0
      %s1112 = sadd.s32 %s1111, %s1109
      %s1113 = smul.addr %s1112, 4
      %s1114 = scalar_lea.vmem %s3, %s1113
      // Predicated region
      $region33: #{decoder_forward.6} parent=31 // pred_check
        %p1115 = pneg %p124
      $region34: #{decoder_forward.6} parent=31 // pred_check_branch
        %1117 = sbr.rel (%p1115) target = $region36
      $region35: #{decoder_forward.6} parent=31 // pred_region
        %s1118 = smul.u32 32, %s18
      $region36: #{decoder_forward.6} parent=31 // pred_fallthru
        _
    $region32: #{decoder_forward.6} parent=5 // pred_fallthru
      _
    %p1119 = scmp.le.s32.totalorder 2, %s9
    // Predicated region
    $region37: #{decoder_forward.6} parent=5 // pred_check
      %p1120 = pneg %p1119
    $region38: #{decoder_forward.6} parent=5 // pred_check_branch
      %1122 = sbr.rel (%p1120) target = $region40
    $region39: #{decoder_forward.6} parent=5 // pred_region
      %s1123 = ssub.s32 %s9, 2
      // Predicated region
      $region41: #{decoder_forward.6} parent=39 // pred_check
        %p1124 = pneg %p130
      $region42: #{decoder_forward.6} parent=39 // pred_check_branch
        %1126 = sbr.rel (%p1124) target = $region44
      $region43: #{decoder_forward.6} parent=39 // pred_region
        %s1127 = smul.u32 32, %s20
        %p1128 = scmp.lt.s32.totalorder %s1127, 3135
        %s1129 = scalar_select %p1128, %s1127, 3135
        %p1130 = scmp.lt.s32.totalorder %s21, 0
        %s1131 = scalar_select %p1130, %s21, 0
        %s1132 = sadd.s32 %s1131, %s1129
        %s1133 = smul.addr %s1132, 4
        %s1134 = scalar_lea.vmem %s3, %s1133
      $region44: #{decoder_forward.6} parent=39 // pred_fallthru
        _
    $region40: #{decoder_forward.6} parent=5 // pred_fallthru
      _
  $region6: #{decoder_forward.6} parent=0 // loop_footer
    %s13 = sadd.s32 1, %s9
  $region7: #{decoder_forward.6} parent=0 // loop_footer_branch
    %8 = sbr.rel target = $region3
  $region8: #{decoder_forward.6} parent=0 // loop_exit
    _

// kernel: decoder_forward.7
$region0: #{decoder_forward.7}
  #allocation0 [shape = 'u32[]', space=smem, size = 0x4, offset = 0x4, fixed_abs, tag = 'smem constant byte address 0x4 - core index']
  #allocation1 [shape = 'u32[72,128]{1,0:T(1,128)}', space=vmem, size = 0x9000, scoped, tag = 'internal scratch']
  %s0 = inlined_call_operand.vmem [shape: bf16[100352,128], index: 0, kind: input, shape index: {}]
  %s1 = inlined_call_operand.vmem [shape: bf16[128,128], index: 1, kind: input, shape index: {}]
  %s2 = inlined_call_operand.vmem [shape: f32[1,128], index: 2, kind: input, shape index: {}]
  %s3 = inlined_call_operand.vmem [shape: f32[100352,128], index: 3, kind: output, shape index: {}]
  %s4 = sld [smem:[#allocation0]]
  $region45: #{decoder_forward.7} parent=0
    _
  %s6 = ssub.s32 1, %s4
  %s7 = scalar_select 0, %s6, %s4
  loop: start=0, step=1, limit=394
  $region2: #{decoder_forward.7} parent=0 // loop_pre_header
    _
  $region3: #{decoder_forward.7} parent=0 // loop_header
    %s9 = sphi 0, %s13
    %p10 = scmp.ge.s32.totalorder %s9, 394
    %s16 = sphi 0, %s28
    %s17 = sphi 0, %s24
    %s18 = sphi 0, %s16
    %s19 = sphi 0, %s17
    %s20 = sphi 0, %s18
    %s21 = sphi 0, %s19
    %s31 = sphi 0, %s33
    %s34 = sphi 0, %s31
    %s35 = sphi 0, %s34
    %s51 = sphi 0, %s35
    %s57 = sphi 0, %s59
    %s60 = sphi 0, %s57
    %s61 = sphi 0, %s60
    %s77 = sphi 0, %s61
    %s83 = sphi 0, %s85
    %s86 = sphi 0, %s83
    %s87 = sphi 0, %s86
    %s103 = sphi 0, %s87
    %s111 = sphi 0, %s113
    %s114 = sphi 0, %s111
    %s115 = sphi 0, %s114
    %s131 = sphi 0, %s115
  $region4: #{decoder_forward.7} parent=0 // loop_header_branch
    %12 = sbr.rel (%p10) target = $region8
  $region5: #{decoder_forward.7} parent=0 // loop_body
    %s14 = ssub.s32 %s9, 1
    %s15 = ssub.s32 %s9, 2
    %s22 = sadd.s32 1, %s17
    %p23 = scmp.ge.s32.totalorder %s22, 1
    %s24 = scalar_select %p23, 0, %s22
    %s25 = sadd.s32 1, %s16
    %s26 = scalar_select %p23, %s25, %s16
    %p27 = scmp.ge.s32.totalorder %s26, 392
    %s28 = scalar_select %p27, 0, %s26
    %s29 = ssub.s32 %s16, %s28
    %p30 = scmp.eq.s32.totalorder %s29, 0
    %s32 = sadd.s32 %s31, 1
    %s33 = scalar_select %p30, %s31, %s32
    %p36 = pneg %p30
    %p37 = scmp.eq.s32.totalorder %s9, 391
    %p38 = por %p36, %p37
    %p39 = scmp.ne.s32.totalorder %s31, %s34
    %p40 = scmp.eq.s32.totalorder %s9, 0
    %p41 = por %p39, %p40
    %p42 = scmp.ne.s32.totalorder %s31, %s34
    %p43 = scmp.eq.s32.totalorder %s14, 391
    %p44 = por %p42, %p43
    %p45 = scmp.ne.s32.totalorder %s34, %s35
    %p46 = scmp.eq.s32.totalorder %s14, 0
    %p47 = por %p45, %p46
    %p48 = scmp.ne.s32.totalorder %s34, %s35
    %p49 = scmp.eq.s32.totalorder %s15, 391
    %p50 = por %p48, %p49
    %p52 = scmp.ne.s32.totalorder %s35, %s51
    %p53 = scmp.eq.s32.totalorder %s15, 0
    %p54 = por %p52, %p53
    %s55 = ssub.s32 %s17, %s24
    %p56 = scmp.eq.s32.totalorder %s55, 0
    %s58 = sadd.s32 %s57, 1
    %s59 = scalar_select %p56, %s57, %s58
    %p62 = pneg %p56
    %p63 = scmp.eq.s32.totalorder %s9, 391
    %p64 = por %p62, %p63
    %p65 = scmp.ne.s32.totalorder %s57, %s60
    %p66 = scmp.eq.s32.totalorder %s9, 0
    %p67 = por %p65, %p66
    %p68 = scmp.ne.s32.totalorder %s57, %s60
    %p69 = scmp.eq.s32.totalorder %s14, 391
    %p70 = por %p68, %p69
    %p71 = scmp.ne.s32.totalorder %s60, %s61
    %p72 = scmp.eq.s32.totalorder %s14, 0
    %p73 = por %p71, %p72
    %p74 = scmp.ne.s32.totalorder %s60, %s61
    %p75 = scmp.eq.s32.totalorder %s15, 391
    %p76 = por %p74, %p75
    %p78 = scmp.ne.s32.totalorder %s61, %s77
    %p79 = scmp.eq.s32.totalorder %s15, 0
    %p80 = por %p78, %p79
    %s81 = ssub.s32 %s17, %s24
    %p82 = scmp.eq.s32.totalorder %s81, 0
    %s84 = sadd.s32 %s83, 1
    %s85 = scalar_select %p82, %s83, %s84
    %p88 = pneg %p82
    %p89 = scmp.eq.s32.totalorder %s9, 391
    %p90 = por %p88, %p89
    %p91 = scmp.ne.s32.totalorder %s83, %s86
    %p92 = scmp.eq.s32.totalorder %s9, 0
    %p93 = por %p91, %p92
    %p94 = scmp.ne.s32.totalorder %s83, %s86
    %p95 = scmp.eq.s32.totalorder %s14, 391
    %p96 = por %p94, %p95
    %p97 = scmp.ne.s32.totalorder %s86, %s87
    %p98 = scmp.eq.s32.totalorder %s14, 0
    %p99 = por %p97, %p98
    %p100 = scmp.ne.s32.totalorder %s86, %s87
    %p101 = scmp.eq.s32.totalorder %s15, 391
    %p102 = por %p100, %p101
    %p104 = scmp.ne.s32.totalorder %s87, %s103
    %p105 = scmp.eq.s32.totalorder %s15, 0
    %p106 = por %p104, %p105
    %s107 = ssub.s32 %s16, %s28
    %s108 = ssub.s32 %s17, %s24
    %s109 = sor.u32 %s107, %s108
    %p110 = scmp.eq.s32.totalorder %s109, 0
    %s112 = sadd.s32 %s111, 1
    %s113 = scalar_select %p110, %s111, %s112
    %p116 = pneg %p110
    %p117 = scmp.eq.s32.totalorder %s9, 391
    %p118 = por %p116, %p117
    %p119 = scmp.ne.s32.totalorder %s111, %s114
    %p120 = scmp.eq.s32.totalorder %s9, 0
    %p121 = por %p119, %p120
    %p122 = scmp.ne.s32.totalorder %s111, %s114
    %p123 = scmp.eq.s32.totalorder %s14, 391
    %p124 = por %p122, %p123
    %p125 = scmp.ne.s32.totalorder %s114, %s115
    %p126 = scmp.eq.s32.totalorder %s14, 0
    %p127 = por %p125, %p126
    %p128 = scmp.ne.s32.totalorder %s114, %s115
    %p129 = scmp.eq.s32.totalorder %s15, 391
    %p130 = por %p128, %p129
    %p132 = scmp.ne.s32.totalorder %s115, %s131
    %p133 = scmp.eq.s32.totalorder %s15, 0
    %p134 = por %p132, %p133
    %p135 = scmp.le.s32.totalorder 1, %s9
    %p136 = scmp.lt.s32.totalorder %s9, 393
    %p137 = pnand %p135, %p136
    %p138 = pneg %p137
    // Predicated region
    $region9: #{decoder_forward.7} parent=5 // pred_check
      _
    $region10: #{decoder_forward.7} parent=5 // pred_check_branch
      %140 = sbr.rel (%p137) target = $region12
    $region11: #{decoder_forward.7} parent=5 // pred_region
      %s141 = ssub.s32 %s9, 1
      // Predicated region
      $region13: #{decoder_forward.7} parent=11 // pred_check
        %p142 = pneg %p73
      $region14: #{decoder_forward.7} parent=11 // pred_check_branch
        %144 = sbr.rel (%p142) target = $region16
      $region15: #{decoder_forward.7} parent=11 // pred_region
        %p145 = scmp.lt.s32.totalorder %s19, 0
        %s146 = scalar_select %p145, %s19, 0
        %s147 = smul.addr %s146, 4
        %s148 = scalar_lea.vmem %s1, %s147
      $region16: #{decoder_forward.7} parent=11 // pred_fallthru
        _
      // Predicated region
      $region17: #{decoder_forward.7} parent=11 // pred_check
        %p149 = pneg %p99
      $region18: #{decoder_forward.7} parent=11 // pred_check_branch
        %151 = sbr.rel (%p149) target = $region20
      $region19: #{decoder_forward.7} parent=11 // pred_region
        %p152 = scmp.lt.s32.totalorder %s19, 0
        %s153 = scalar_select %p152, %s19, 0
        %s154 = scalar_lea.vmem %s2, %s153
      $region20: #{decoder_forward.7} parent=11 // pred_fallthru
        _
    $region12: #{decoder_forward.7} parent=5 // pred_fallthru
      _
    %p155 = scmp.lt.s32.totalorder %s9, 392
    // Predicated region
    $region21: #{decoder_forward.7} parent=5 // pred_check
      %p156 = pneg %p155
    $region22: #{decoder_forward.7} parent=5 // pred_check_branch
      %158 = sbr.rel (%p156) target = $region24
    $region23: #{decoder_forward.7} parent=5 // pred_region
      // Predicated region
      $region25: #{decoder_forward.7} parent=23 // pred_check
        %p159 = pneg %p41
      $region26: #{decoder_forward.7} parent=23 // pred_check_branch
        %161 = sbr.rel (%p159) target = $region28
      $region27: #{decoder_forward.7} parent=23 // pred_region
        %s162 = smul.u32 32, %s16
        %p163 = scmp.lt.s32.totalorder %s162, 12543
        %s164 = scalar_select %p163, %s162, 12543
        %s165 = smul.addr %s164, 4
        %s166 = scalar_lea.vmem %s0, %s165
        %s167 = smul.u32 32, %s16
      $region28: #{decoder_forward.7} parent=23 // pred_fallthru
        _
    $region24: #{decoder_forward.7} parent=5 // pred_fallthru
      _
    %p168 = scmp.le.s32.totalorder 1, %s9
    %p169 = scmp.lt.s32.totalorder %s9, 393
    %p170 = pnand %p168, %p169
    %p171 = pneg %p170
    // Predicated region
    $region29: #{decoder_forward.7} parent=5 // pred_check
      _
    $region30: #{decoder_forward.7} parent=5 // pred_check_branch
      %173 = sbr.rel (%p170) target = $region32
    $region31: #{decoder_forward.7} parent=5 // pred_region
      %s174 = ssub.s32 %s9, 1
      %s175 = smul.u32 32, %s18
      %p176 = scmp.lt.s32.totalorder %s175, 12543
      %s177 = scalar_select %p176, %s175, 12543
      %s178 = smul.addr %s177, 4
      %s179 = scalar_lea.vmem %s0, %s178
      %p180 = pneg %p47
      %p181 = pneg %p44
      %p182 = scmp.lt.s32.totalorder %s19, 0
      %s183 = scalar_select %p182, %s19, 0
      %s184 = smul.addr %s183, 4
      %s185 = scalar_lea.vmem %s1, %s184
      %p186 = pneg %p73
      %p187 = pneg %p70
      %p188 = scmp.lt.s32.totalorder %s19, 0
      %s189 = scalar_select %p188, %s19, 0
      %s190 = scalar_lea.vmem %s2, %s189
      %p191 = pneg %p99
      %p192 = pneg %p96
      %p193 = pneg %p127
      %p194 = pneg %p124
      %s195 = smul.u32 32, %s18
      %p196 = scmp.lt.s32.totalorder %s195, 12543
      %s197 = scalar_select %p196, %s195, 12543
      %p198 = scmp.lt.s32.totalorder %s19, 0
      %s199 = scalar_select %p198, %s19, 0
      %s200 = sadd.s32 %s199, %s197
      %s201 = smul.addr %s200, 8
      %s202 = scalar_lea.vmem %s3, %s201
      %s203 = smul.u32 32, %s18
      %p204 = scmp.lt.s32.totalorder %s203, 12543
      %s205 = scalar_select %p204, %s203, 12543
      %s206 = smul.addr %s205, 4
      %s207 = scalar_lea.vmem %s0, %s206
      %s208 = smul.u32 32, %s18
      %p209 = scmp.lt.s32.totalorder %s19, 0
      %s210 = scalar_select %p209, %s19, 0
      %s211 = smul.addr %s210, 4
      %s212 = scalar_lea.vmem %s1, %s211
      %p213 = scmp.lt.s32.totalorder %s19, 0
      %s214 = scalar_select %p213, %s19, 0
      %s215 = scalar_lea.vmem %s2, %s214
      %s216 = smul.u32 32, %s18
      %p217 = scmp.lt.s32.totalorder %s216, 12543
      %s218 = scalar_select %p217, %s216, 12543
      %p219 = scmp.lt.s32.totalorder %s19, 0
      %s220 = scalar_select %p219, %s19, 0
      %s221 = sadd.s32 %s220, %s218
      %s222 = smul.addr %s221, 8
      %s223 = scalar_lea.vmem %s3, %s222
      %s224 = smul.u32 32, %s18
      %v225 = vld [vmem:[%s207] sm:$0xf]
      %v226 = vld [vmem:[%s207 + $0x4] sm:$0xf]
      %v227 = vld [vmem:[%s207 + $0x8] sm:$0xf]
      %v228 = vld [vmem:[%s207 + $0xc] sm:$0xf]
      %v229 = vld [vmem:[%s207 + $0x10] sm:$0xf]
      %v230 = vld [vmem:[%s207 + $0x14] sm:$0xf]
      %v231 = vld [vmem:[%s207 + $0x18] sm:$0xf]
      %v232 = vld [vmem:[%s207 + $0x1c] sm:$0xf]
      %v233 = vld [vmem:[%s207 + $0x20] sm:$0xf]
      %v234 = vld [vmem:[%s207 + $0x24] sm:$0xf]
      %v235 = vld [vmem:[%s207 + $0x28] sm:$0xf]
      %v236 = vld [vmem:[%s207 + $0x2c] sm:$0xf]
      %v237 = vld [vmem:[%s207 + $0x30] sm:$0xf]
      %v238 = vld [vmem:[%s207 + $0x34] sm:$0xf]
      %v239 = vld [vmem:[%s207 + $0x38] sm:$0xf]
      %v240 = vld [vmem:[%s207 + $0x3c] sm:$0xf]
      %v241 = vld [vmem:[%s207 + $0x40] sm:$0xf]
      %v242 = vld [vmem:[%s207 + $0x44] sm:$0xf]
      %v243 = vld [vmem:[%s207 + $0x48] sm:$0xf]
      %v244 = vld [vmem:[%s207 + $0x4c] sm:$0xf]
      %v245 = vld [vmem:[%s207 + $0x50] sm:$0xf]
      %v246 = vld [vmem:[%s207 + $0x54] sm:$0xf]
      %v247 = vld [vmem:[%s207 + $0x58] sm:$0xf]
      %v248 = vld [vmem:[%s207 + $0x5c] sm:$0xf]
      %v249 = vld [vmem:[%s207 + $0x60] sm:$0xf]
      %v250 = vld [vmem:[%s207 + $0x64] sm:$0xf]
      %v251 = vld [vmem:[%s207 + $0x68] sm:$0xf]
      %v252 = vld [vmem:[%s207 + $0x6c] sm:$0xf]
      %v253 = vld [vmem:[%s207 + $0x70] sm:$0xf]
      %v254 = vld [vmem:[%s207 + $0x74] sm:$0xf]
      %v255 = vld [vmem:[%s207 + $0x78] sm:$0xf]
      %v256 = vld [vmem:[%s207 + $0x7c] sm:$0xf]
      %v257 = vld [vmem:[%s212] sm:$0xf]
      %v258 = vld [vmem:[%s212 + $0x4] sm:$0xf]
      %v259 = vld [vmem:[%s212 + $0x8] sm:$0xf]
      %v260 = vld [vmem:[%s212 + $0xc] sm:$0xf]
      %v261 = vld [vmem:[%s212 + $0x10] sm:$0xf]
      %v262 = vld [vmem:[%s212 + $0x14] sm:$0xf]
      %v263 = vld [vmem:[%s212 + $0x18] sm:$0xf]
      %v264 = vld [vmem:[%s212 + $0x1c] sm:$0xf]
      %v265 = vld [vmem:[%s212 + $0x20] sm:$0xf]
      %v266 = vld [vmem:[%s212 + $0x24] sm:$0xf]
      %v267 = vld [vmem:[%s212 + $0x28] sm:$0xf]
      %v268 = vld [vmem:[%s212 + $0x2c] sm:$0xf]
      %v269 = vld [vmem:[%s212 + $0x30] sm:$0xf]
      %v270 = vld [vmem:[%s212 + $0x34] sm:$0xf]
      %v271 = vld [vmem:[%s212 + $0x38] sm:$0xf]
      %v272 = vld [vmem:[%s212 + $0x3c] sm:$0xf]
      %v273 = vld [vmem:[%s215] sm:$0x1]
      %v275 = vperm.slane %v273, 0
      %v309 = vunpack.c.l.b16 %v225
      %v310 = vunpack.c.l.b16 %v226
      %v311 = vunpack.c.l.b16 %v227
      %v312 = vunpack.c.l.b16 %v228
      %v313 = vunpack.c.l.b16 %v229
      %v314 = vunpack.c.l.b16 %v230
      %v315 = vunpack.c.l.b16 %v231
      %v316 = vunpack.c.l.b16 %v232
      %v317 = vunpack.c.l.b16 %v233
      %v318 = vunpack.c.l.b16 %v234
      %v319 = vunpack.c.l.b16 %v235
      %v320 = vunpack.c.l.b16 %v236
      %v321 = vunpack.c.l.b16 %v237
      %v322 = vunpack.c.l.b16 %v238
      %v323 = vunpack.c.l.b16 %v239
      %v324 = vunpack.c.l.b16 %v240
      %v325 = vunpack.c.l.b16 %v241
      %v326 = vunpack.c.l.b16 %v242
      %v327 = vunpack.c.l.b16 %v243
      %v328 = vunpack.c.l.b16 %v244
      %v329 = vunpack.c.l.b16 %v245
      %v330 = vunpack.c.l.b16 %v246
      %v331 = vunpack.c.l.b16 %v247
      %v332 = vunpack.c.l.b16 %v248
      %v333 = vunpack.c.l.b16 %v249
      %v334 = vunpack.c.l.b16 %v250
      %v335 = vunpack.c.l.b16 %v251
      %v336 = vunpack.c.l.b16 %v252
      %v337 = vunpack.c.l.b16 %v253
      %v338 = vunpack.c.l.b16 %v254
      %v339 = vunpack.c.l.b16 %v255
      %v340 = vunpack.c.l.b16 %v256
      %v341 = vpack.c.b16 %v310, %v309
      %v342 = vpack.c.b16 %v312, %v311
      %v343 = vpack.c.b16 %v314, %v313
      %v344 = vpack.c.b16 %v316, %v315
      %v345 = vpack.c.b16 %v318, %v317
      %v346 = vpack.c.b16 %v320, %v319
      %v347 = vpack.c.b16 %v322, %v321
      %v348 = vpack.c.b16 %v324, %v323
      %v349 = vpack.c.b16 %v326, %v325
      %v350 = vpack.c.b16 %v328, %v327
      %v351 = vpack.c.b16 %v330, %v329
      %v352 = vpack.c.b16 %v332, %v331
      %v353 = vpack.c.b16 %v334, %v333
      %v354 = vpack.c.b16 %v336, %v335
      %v355 = vpack.c.b16 %v338, %v337
      %v356 = vpack.c.b16 %v340, %v339
      %v389 = vunpack.c.l.b16 %v257
      %v390 = vunpack.c.l.b16 %v258
      %v391 = vunpack.c.l.b16 %v259
      %v392 = vunpack.c.l.b16 %v260
      %v393 = vunpack.c.l.b16 %v261
      %v394 = vunpack.c.l.b16 %v262
      %v395 = vunpack.c.l.b16 %v263
      %v396 = vunpack.c.l.b16 %v264
      %v397 = vunpack.c.l.b16 %v265
      %v398 = vunpack.c.l.b16 %v266
      %v399 = vunpack.c.l.b16 %v267
      %v400 = vunpack.c.l.b16 %v268
      %v401 = vunpack.c.l.b16 %v269
      %v402 = vunpack.c.l.b16 %v270
      %v403 = vunpack.c.l.b16 %v271
      %v404 = vunpack.c.l.b16 %v272
      %v405 = vpack.c.b16 %v390, %v389
      %v406 = vpack.c.b16 %v392, %v391
      %v407 = vpack.c.b16 %v394, %v393
      %v408 = vpack.c.b16 %v396, %v395
      %v409 = vpack.c.b16 %v398, %v397
      %v410 = vpack.c.b16 %v400, %v399
      %v411 = vpack.c.b16 %v402, %v401
      %v412 = vpack.c.b16 %v404, %v403
      %421 = vmatpush.bf16.msra.mxu0 %v412
      %422 = vmatpush.bf16.msra.mxu0 %v411
      %423 = vmatpush.bf16.msra.mxu0 %v410
      %424 = vmatpush.bf16.msra.mxu0 %v409
      %425 = vmatpush.bf16.msra.mxu0 %v408
      %426 = vmatpush.bf16.msra.mxu0 %v407
      %427 = vmatpush.bf16.msra.mxu0 %v406
      %428 = vmatpush.bf16.msra.mxu0 %v405
      %429 = vmatmul.bf16.gmra.mxu0 %v341
      %v430 = vpop.f32.mrf.mxu0
      %v431 = vadd.f32 %v275, %v430
      %v432 = vpop.f32.mrf.mxu0
      %v433 = vadd.f32 %v275, %v432
      %434 = vmatmul.bf16.gmra.mxu0 %v342
      %v435 = vpop.f32.mrf.mxu0
      %v436 = vadd.f32 %v275, %v435
      %v437 = vpop.f32.mrf.mxu0
      %v438 = vadd.f32 %v275, %v437
      %439 = vmatmul.bf16.gmra.mxu0 %v343
      %v440 = vpop.f32.mrf.mxu0
      %v441 = vadd.f32 %v275, %v440
      %v442 = vpop.f32.mrf.mxu0
      %v443 = vadd.f32 %v275, %v442
      %444 = vmatmul.bf16.gmra.mxu0 %v344
      %v445 = vpop.f32.mrf.mxu0
      %v446 = vadd.f32 %v275, %v445
      %v447 = vpop.f32.mrf.mxu0
      %v448 = vadd.f32 %v275, %v447
      %449 = vmatmul.bf16.gmra.mxu0 %v345
      %v450 = vpop.f32.mrf.mxu0
      %v451 = vadd.f32 %v275, %v450
      %v452 = vpop.f32.mrf.mxu0
      %v453 = vadd.f32 %v275, %v452
      %454 = vmatmul.bf16.gmra.mxu0 %v346
      %v455 = vpop.f32.mrf.mxu0
      %v456 = vadd.f32 %v275, %v455
      %v457 = vpop.f32.mrf.mxu0
      %v458 = vadd.f32 %v275, %v457
      %459 = vmatmul.bf16.gmra.mxu0 %v347
      %v460 = vpop.f32.mrf.mxu0
      %v461 = vadd.f32 %v275, %v460
      %v462 = vpop.f32.mrf.mxu0
      %v463 = vadd.f32 %v275, %v462
      %464 = vmatmul.bf16.gmra.mxu0 %v348
      %v465 = vpop.f32.mrf.mxu0
      %v466 = vadd.f32 %v275, %v465
      %v467 = vpop.f32.mrf.mxu0
      %v468 = vadd.f32 %v275, %v467
      %469 = vmatmul.bf16.gmra.mxu0 %v349
      %v470 = vpop.f32.mrf.mxu0
      %v471 = vadd.f32 %v275, %v470
      %v472 = vpop.f32.mrf.mxu0
      %v473 = vadd.f32 %v275, %v472
      %474 = vmatmul.bf16.gmra.mxu0 %v350
      %v475 = vpop.f32.mrf.mxu0
      %v476 = vadd.f32 %v275, %v475
      %v477 = vpop.f32.mrf.mxu0
      %v478 = vadd.f32 %v275, %v477
      %479 = vmatmul.bf16.gmra.mxu0 %v351
      %v480 = vpop.f32.mrf.mxu0
      %v481 = vadd.f32 %v275, %v480
      %v482 = vpop.f32.mrf.mxu0
      %v483 = vadd.f32 %v275, %v482
      %484 = vmatmul.bf16.gmra.mxu0 %v352
      %v485 = vpop.f32.mrf.mxu0
      %v486 = vadd.f32 %v275, %v485
      %v487 = vpop.f32.mrf.mxu0
      %v488 = vadd.f32 %v275, %v487
      %489 = vmatmul.bf16.gmra.mxu0 %v353
      %v490 = vpop.f32.mrf.mxu0
      %v491 = vadd.f32 %v275, %v490
      %v492 = vpop.f32.mrf.mxu0
      %v493 = vadd.f32 %v275, %v492
      %494 = vmatmul.bf16.gmra.mxu0 %v354
      %v495 = vpop.f32.mrf.mxu0
      %v496 = vadd.f32 %v275, %v495
      %v497 = vpop.f32.mrf.mxu0
      %v498 = vadd.f32 %v275, %v497
      %499 = vmatmul.bf16.gmra.mxu0 %v355
      %v500 = vpop.f32.mrf.mxu0
      %v501 = vadd.f32 %v275, %v500
      %v502 = vpop.f32.mrf.mxu0
      %v503 = vadd.f32 %v275, %v502
      %504 = vmatmul.bf16.gmra.mxu0 %v356
      %v505 = vpop.f32.mrf.mxu0
      %v506 = vadd.f32 %v275, %v505
      %v507 = vpop.f32.mrf.mxu0
      %v508 = vadd.f32 %v275, %v507
      %509 = vdwg.mxu0
      %v510 = vsub.f32 0.0, %v431
      %v511 = vsub.f32 0.0, %v433
      %v512 = vsub.f32 0.0, %v436
      %v513 = vsub.f32 0.0, %v438
      %v514 = vsub.f32 0.0, %v441
      %v515 = vsub.f32 0.0, %v443
      %v516 = vsub.f32 0.0, %v446
      %v517 = vsub.f32 0.0, %v448
      %v518 = vsub.f32 0.0, %v451
      %v519 = vsub.f32 0.0, %v453
      %v520 = vsub.f32 0.0, %v456
      %v521 = vsub.f32 0.0, %v458
      %v522 = vsub.f32 0.0, %v461
      %v523 = vsub.f32 0.0, %v463
      %v524 = vsub.f32 0.0, %v466
      %v525 = vsub.f32 0.0, %v468
      %v526 = vsub.f32 0.0, %v471
      %v527 = vsub.f32 0.0, %v473
      %v528 = vsub.f32 0.0, %v476
      %v529 = vsub.f32 0.0, %v478
      %v530 = vsub.f32 0.0, %v481
      %v531 = vsub.f32 0.0, %v483
      %v532 = vsub.f32 0.0, %v486
      %v533 = vsub.f32 0.0, %v488
      %v534 = vsub.f32 0.0, %v491
      %v535 = vsub.f32 0.0, %v493
      %v536 = vsub.f32 0.0, %v496
      %v537 = vsub.f32 0.0, %v498
      %v538 = vsub.f32 0.0, %v501
      %v539 = vsub.f32 0.0, %v503
      %v540 = vsub.f32 0.0, %v506
      %v541 = vsub.f32 0.0, %v508
      %v542 = vmul.f32 %v510, 1.442695
      %v543 = vpow.pop %v542
      %v544 = vmul.f32 %v511, 1.442695
      %v545 = vpow.pop %v544
      %v546 = vmul.f32 %v512, 1.442695
      %v547 = vpow.pop %v546
      %v548 = vmul.f32 %v513, 1.442695
      %v549 = vpow.pop %v548
      %v550 = vmul.f32 %v514, 1.442695
      %v551 = vpow.pop %v550
      %v552 = vmul.f32 %v515, 1.442695
      %v553 = vpow.pop %v552
      %v554 = vmul.f32 %v516, 1.442695
      %v555 = vpow.pop %v554
      %v556 = vmul.f32 %v517, 1.442695
      %v557 = vpow.pop %v556
      %v558 = vmul.f32 %v518, 1.442695
      %v559 = vpow.pop %v558
      %v560 = vmul.f32 %v519, 1.442695
      %v561 = vpow.pop %v560
      %v562 = vmul.f32 %v520, 1.442695
      %v563 = vpow.pop %v562
      %v564 = vmul.f32 %v521, 1.442695
      %v565 = vpow.pop %v564
      %v566 = vmul.f32 %v522, 1.442695
      %v567 = vpow.pop %v566
      %v568 = vmul.f32 %v523, 1.442695
      %v569 = vpow.pop %v568
      %v570 = vmul.f32 %v524, 1.442695
      %v571 = vpow.pop %v570
      %v572 = vmul.f32 %v525, 1.442695
      %v573 = vpow.pop %v572
      %v574 = vmul.f32 %v526, 1.442695
      %v575 = vpow.pop %v574
      %v576 = vmul.f32 %v527, 1.442695
      %v577 = vpow.pop %v576
      %v578 = vmul.f32 %v528, 1.442695
      %v579 = vpow.pop %v578
      %v580 = vmul.f32 %v529, 1.442695
      %v581 = vpow.pop %v580
      %v582 = vmul.f32 %v530, 1.442695
      %v583 = vpow.pop %v582
      %v584 = vmul.f32 %v531, 1.442695
      %v585 = vpow.pop %v584
      %v586 = vmul.f32 %v532, 1.442695
      %v587 = vpow.pop %v586
      %v588 = vmul.f32 %v533, 1.442695
      %v589 = vpow.pop %v588
      %v590 = vmul.f32 %v534, 1.442695
      %v591 = vpow.pop %v590
      %v592 = vmul.f32 %v535, 1.442695
      %v593 = vpow.pop %v592
      %v594 = vmul.f32 %v536, 1.442695
      %v595 = vpow.pop %v594
      %v596 = vmul.f32 %v537, 1.442695
      %v597 = vpow.pop %v596
      %v598 = vmul.f32 %v538, 1.442695
      %v599 = vpow.pop %v598
      %v600 = vmul.f32 %v539, 1.442695
      %v601 = vpow.pop %v600
      %v602 = vmul.f32 %v540, 1.442695
      %v603 = vpow.pop %v602
      %v604 = vmul.f32 %v541, 1.442695
      %v605 = vpow.pop %v604
      %v606 = vadd.f32 %v543, 1.0
      %v607 = vadd.f32 %v545, 1.0
      %v608 = vadd.f32 %v547, 1.0
      %v609 = vadd.f32 %v549, 1.0
      %v610 = vadd.f32 %v551, 1.0
      %v611 = vadd.f32 %v553, 1.0
      %v612 = vadd.f32 %v555, 1.0
      %v613 = vadd.f32 %v557, 1.0
      %v614 = vadd.f32 %v559, 1.0
      %v615 = vadd.f32 %v561, 1.0
      %v616 = vadd.f32 %v563, 1.0
      %v617 = vadd.f32 %v565, 1.0
      %v618 = vadd.f32 %v567, 1.0
      %v619 = vadd.f32 %v569, 1.0
      %v620 = vadd.f32 %v571, 1.0
      %v621 = vadd.f32 %v573, 1.0
      %v622 = vadd.f32 %v575, 1.0
      %v623 = vadd.f32 %v577, 1.0
      %v624 = vadd.f32 %v579, 1.0
      %v625 = vadd.f32 %v581, 1.0
      %v626 = vadd.f32 %v583, 1.0
      %v627 = vadd.f32 %v585, 1.0
      %v628 = vadd.f32 %v587, 1.0
      %v629 = vadd.f32 %v589, 1.0
      %v630 = vadd.f32 %v591, 1.0
      %v631 = vadd.f32 %v593, 1.0
      %v632 = vadd.f32 %v595, 1.0
      %v633 = vadd.f32 %v597, 1.0
      %v634 = vadd.f32 %v599, 1.0
      %v635 = vadd.f32 %v601, 1.0
      %v636 = vadd.f32 %v603, 1.0
      %v637 = vadd.f32 %v605, 1.0
      %v638 = vrcp.pop %v606
      %v639 = vmul.f32 %v606, %v638
      %v640 = vsub.f32 1.0, %v639
      %v641 = vmul.f32 %v638, %v640
      %v642 = vadd.f32 %v638, %v641
      %vm643 = vweird.f32 %v606
      %vm644 = vweird.f32 %v638
      %vm645 = vmor %vm643, %vm644
      %v646 = vsel %vm645, %v638, %v642
      %v647 = vand.u32 2147483647, %v606
      %vm648 = vcmp.eq.f32.partialorder %v647, 8.507059e+37
      %v649 = vand.u32 %v606, 2147483648
      %v650 = vor.u32 1.1754944e-38, %v649
      %v651 = vsel %vm648, %v650, %v646
      %v652 = vmul.f32 1.0, %v651
      %v653 = vrcp.pop %v607
      %v654 = vmul.f32 %v607, %v653
      %v655 = vsub.f32 1.0, %v654
      %v656 = vmul.f32 %v653, %v655
      %v657 = vadd.f32 %v653, %v656
      %vm658 = vweird.f32 %v607
      %vm659 = vweird.f32 %v653
      %vm660 = vmor %vm658, %vm659
      %v661 = vsel %vm660, %v653, %v657
      %v662 = vand.u32 2147483647, %v607
      %vm663 = vcmp.eq.f32.partialorder %v662, 8.507059e+37
      %v664 = vand.u32 %v607, 2147483648
      %v665 = vor.u32 1.1754944e-38, %v664
      %v666 = vsel %vm663, %v665, %v661
      %v667 = vmul.f32 1.0, %v666
      %v668 = vrcp.pop %v608
      %v669 = vmul.f32 %v608, %v668
      %v670 = vsub.f32 1.0, %v669
      %v671 = vmul.f32 %v668, %v670
      %v672 = vadd.f32 %v668, %v671
      %vm673 = vweird.f32 %v608
      %vm674 = vweird.f32 %v668
      %vm675 = vmor %vm673, %vm674
      %v676 = vsel %vm675, %v668, %v672
      %v677 = vand.u32 2147483647, %v608
      %vm678 = vcmp.eq.f32.partialorder %v677, 8.507059e+37
      %v679 = vand.u32 %v608, 2147483648
      %v680 = vor.u32 1.1754944e-38, %v679
      %v681 = vsel %vm678, %v680, %v676
      %v682 = vmul.f32 1.0, %v681
      %v683 = vrcp.pop %v609
      %v684 = vmul.f32 %v609, %v683
      %v685 = vsub.f32 1.0, %v684
      %v686 = vmul.f32 %v683, %v685
      %v687 = vadd.f32 %v683, %v686
      %vm688 = vweird.f32 %v609
      %vm689 = vweird.f32 %v683
      %vm690 = vmor %vm688, %vm689
      %v691 = vsel %vm690, %v683, %v687
      %v692 = vand.u32 2147483647, %v609
      %vm693 = vcmp.eq.f32.partialorder %v692, 8.507059e+37
      %v694 = vand.u32 %v609, 2147483648
      %v695 = vor.u32 1.1754944e-38, %v694
      %v696 = vsel %vm693, %v695, %v691
      %v697 = vmul.f32 1.0, %v696
      %v698 = vrcp.pop %v610
      %v699 = vmul.f32 %v610, %v698
      %v700 = vsub.f32 1.0, %v699
      %v701 = vmul.f32 %v698, %v700
      %v702 = vadd.f32 %v698, %v701
      %vm703 = vweird.f32 %v610
      %vm704 = vweird.f32 %v698
      %vm705 = vmor %vm703, %vm704
      %v706 = vsel %vm705, %v698, %v702
      %v707 = vand.u32 2147483647, %v610
      %vm708 = vcmp.eq.f32.partialorder %v707, 8.507059e+37
      %v709 = vand.u32 %v610, 2147483648
      %v710 = vor.u32 1.1754944e-38, %v709
      %v711 = vsel %vm708, %v710, %v706
      %v712 = vmul.f32 1.0, %v711
      %v713 = vrcp.pop %v611
      %v714 = vmul.f32 %v611, %v713
      %v715 = vsub.f32 1.0, %v714
      %v716 = vmul.f32 %v713, %v715
      %v717 = vadd.f32 %v713, %v716
      %vm718 = vweird.f32 %v611
      %vm719 = vweird.f32 %v713
      %vm720 = vmor %vm718, %vm719
      %v721 = vsel %vm720, %v713, %v717
      %v722 = vand.u32 2147483647, %v611
      %vm723 = vcmp.eq.f32.partialorder %v722, 8.507059e+37
      %v724 = vand.u32 %v611, 2147483648
      %v725 = vor.u32 1.1754944e-38, %v724
      %v726 = vsel %vm723, %v725, %v721
      %v727 = vmul.f32 1.0, %v726
      %v728 = vrcp.pop %v612
      %v729 = vmul.f32 %v612, %v728
      %v730 = vsub.f32 1.0, %v729
      %v731 = vmul.f32 %v728, %v730
      %v732 = vadd.f32 %v728, %v731
      %vm733 = vweird.f32 %v612
      %vm734 = vweird.f32 %v728
      %vm735 = vmor %vm733, %vm734
      %v736 = vsel %vm735, %v728, %v732
      %v737 = vand.u32 2147483647, %v612
      %vm738 = vcmp.eq.f32.partialorder %v737, 8.507059e+37
      %v739 = vand.u32 %v612, 2147483648
      %v740 = vor.u32 1.1754944e-38, %v739
      %v741 = vsel %vm738, %v740, %v736
      %v742 = vmul.f32 1.0, %v741
      %v743 = vrcp.pop %v613
      %v744 = vmul.f32 %v613, %v743
      %v745 = vsub.f32 1.0, %v744
      %v746 = vmul.f32 %v743, %v745
      %v747 = vadd.f32 %v743, %v746
      %vm748 = vweird.f32 %v613
      %vm749 = vweird.f32 %v743
      %vm750 = vmor %vm748, %vm749
      %v751 = vsel %vm750, %v743, %v747
      %v752 = vand.u32 2147483647, %v613
      %vm753 = vcmp.eq.f32.partialorder %v752, 8.507059e+37
      %v754 = vand.u32 %v613, 2147483648
      %v755 = vor.u32 1.1754944e-38, %v754
      %v756 = vsel %vm753, %v755, %v751
      %v757 = vmul.f32 1.0, %v756
      %v758 = vrcp.pop %v614
      %v759 = vmul.f32 %v614, %v758
      %v760 = vsub.f32 1.0, %v759
      %v761 = vmul.f32 %v758, %v760
      %v762 = vadd.f32 %v758, %v761
      %vm763 = vweird.f32 %v614
      %vm764 = vweird.f32 %v758
      %vm765 = vmor %vm763, %vm764
      %v766 = vsel %vm765, %v758, %v762
      %v767 = vand.u32 2147483647, %v614
      %vm768 = vcmp.eq.f32.partialorder %v767, 8.507059e+37
      %v769 = vand.u32 %v614, 2147483648
      %v770 = vor.u32 1.1754944e-38, %v769
      %v771 = vsel %vm768, %v770, %v766
      %v772 = vmul.f32 1.0, %v771
      %v773 = vrcp.pop %v615
      %v774 = vmul.f32 %v615, %v773
      %v775 = vsub.f32 1.0, %v774
      %v776 = vmul.f32 %v773, %v775
      %v777 = vadd.f32 %v773, %v776
      %vm778 = vweird.f32 %v615
      %vm779 = vweird.f32 %v773
      %vm780 = vmor %vm778, %vm779
      %v781 = vsel %vm780, %v773, %v777
      %v782 = vand.u32 2147483647, %v615
      %vm783 = vcmp.eq.f32.partialorder %v782, 8.507059e+37
      %v784 = vand.u32 %v615, 2147483648
      %v785 = vor.u32 1.1754944e-38, %v784
      %v786 = vsel %vm783, %v785, %v781
      %v787 = vmul.f32 1.0, %v786
      %v788 = vrcp.pop %v616
      %v789 = vmul.f32 %v616, %v788
      %v790 = vsub.f32 1.0, %v789
      %v791 = vmul.f32 %v788, %v790
      %v792 = vadd.f32 %v788, %v791
      %vm793 = vweird.f32 %v616
      %vm794 = vweird.f32 %v788
      %vm795 = vmor %vm793, %vm794
      %v796 = vsel %vm795, %v788, %v792
      %v797 = vand.u32 2147483647, %v616
      %vm798 = vcmp.eq.f32.partialorder %v797, 8.507059e+37
      %v799 = vand.u32 %v616, 2147483648
      %v800 = vor.u32 1.1754944e-38, %v799
      %v801 = vsel %vm798, %v800, %v796
      %v802 = vmul.f32 1.0, %v801
      %v803 = vrcp.pop %v617
      %v804 = vmul.f32 %v617, %v803
      %v805 = vsub.f32 1.0, %v804
      %v806 = vmul.f32 %v803, %v805
      %v807 = vadd.f32 %v803, %v806
      %vm808 = vweird.f32 %v617
      %vm809 = vweird.f32 %v803
      %vm810 = vmor %vm808, %vm809
      %v811 = vsel %vm810, %v803, %v807
      %v812 = vand.u32 2147483647, %v617
      %vm813 = vcmp.eq.f32.partialorder %v812, 8.507059e+37
      %v814 = vand.u32 %v617, 2147483648
      %v815 = vor.u32 1.1754944e-38, %v814
      %v816 = vsel %vm813, %v815, %v811
      %v817 = vmul.f32 1.0, %v816
      %v818 = vrcp.pop %v618
      %v819 = vmul.f32 %v618, %v818
      %v820 = vsub.f32 1.0, %v819
      %v821 = vmul.f32 %v818, %v820
      %v822 = vadd.f32 %v818, %v821
      %vm823 = vweird.f32 %v618
      %vm824 = vweird.f32 %v818
      %vm825 = vmor %vm823, %vm824
      %v826 = vsel %vm825, %v818, %v822
      %v827 = vand.u32 2147483647, %v618
      %vm828 = vcmp.eq.f32.partialorder %v827, 8.507059e+37
      %v829 = vand.u32 %v618, 2147483648
      %v830 = vor.u32 1.1754944e-38, %v829
      %v831 = vsel %vm828, %v830, %v826
      %v832 = vmul.f32 1.0, %v831
      %v833 = vrcp.pop %v619
      %v834 = vmul.f32 %v619, %v833
      %v835 = vsub.f32 1.0, %v834
      %v836 = vmul.f32 %v833, %v835
      %v837 = vadd.f32 %v833, %v836
      %vm838 = vweird.f32 %v619
      %vm839 = vweird.f32 %v833
      %vm840 = vmor %vm838, %vm839
      %v841 = vsel %vm840, %v833, %v837
      %v842 = vand.u32 2147483647, %v619
      %vm843 = vcmp.eq.f32.partialorder %v842, 8.507059e+37
      %v844 = vand.u32 %v619, 2147483648
      %v845 = vor.u32 1.1754944e-38, %v844
      %v846 = vsel %vm843, %v845, %v841
      %v847 = vmul.f32 1.0, %v846
      %v848 = vrcp.pop %v620
      %v849 = vmul.f32 %v620, %v848
      %v850 = vsub.f32 1.0, %v849
      %v851 = vmul.f32 %v848, %v850
      %v852 = vadd.f32 %v848, %v851
      %vm853 = vweird.f32 %v620
      %vm854 = vweird.f32 %v848
      %vm855 = vmor %vm853, %vm854
      %v856 = vsel %vm855, %v848, %v852
      %v857 = vand.u32 2147483647, %v620
      %vm858 = vcmp.eq.f32.partialorder %v857, 8.507059e+37
      %v859 = vand.u32 %v620, 2147483648
      %v860 = vor.u32 1.1754944e-38, %v859
      %v861 = vsel %vm858, %v860, %v856
      %v862 = vmul.f32 1.0, %v861
      %v863 = vrcp.pop %v621
      %v864 = vmul.f32 %v621, %v863
      %v865 = vsub.f32 1.0, %v864
      %v866 = vmul.f32 %v863, %v865
      %v867 = vadd.f32 %v863, %v866
      %vm868 = vweird.f32 %v621
      %vm869 = vweird.f32 %v863
      %vm870 = vmor %vm868, %vm869
      %v871 = vsel %vm870, %v863, %v867
      %v872 = vand.u32 2147483647, %v621
      %vm873 = vcmp.eq.f32.partialorder %v872, 8.507059e+37
      %v874 = vand.u32 %v621, 2147483648
      %v875 = vor.u32 1.1754944e-38, %v874
      %v876 = vsel %vm873, %v875, %v871
      %v877 = vmul.f32 1.0, %v876
      %v878 = vrcp.pop %v622
      %v879 = vmul.f32 %v622, %v878
      %v880 = vsub.f32 1.0, %v879
      %v881 = vmul.f32 %v878, %v880
      %v882 = vadd.f32 %v878, %v881
      %vm883 = vweird.f32 %v622
      %vm884 = vweird.f32 %v878
      %vm885 = vmor %vm883, %vm884
      %v886 = vsel %vm885, %v878, %v882
      %v887 = vand.u32 2147483647, %v622
      %vm888 = vcmp.eq.f32.partialorder %v887, 8.507059e+37
      %v889 = vand.u32 %v622, 2147483648
      %v890 = vor.u32 1.1754944e-38, %v889
      %v891 = vsel %vm888, %v890, %v886
      %v892 = vmul.f32 1.0, %v891
      %v893 = vrcp.pop %v623
      %v894 = vmul.f32 %v623, %v893
      %v895 = vsub.f32 1.0, %v894
      %v896 = vmul.f32 %v893, %v895
      %v897 = vadd.f32 %v893, %v896
      %vm898 = vweird.f32 %v623
      %vm899 = vweird.f32 %v893
      %vm900 = vmor %vm898, %vm899
      %v901 = vsel %vm900, %v893, %v897
      %v902 = vand.u32 2147483647, %v623
      %vm903 = vcmp.eq.f32.partialorder %v902, 8.507059e+37
      %v904 = vand.u32 %v623, 2147483648
      %v905 = vor.u32 1.1754944e-38, %v904
      %v906 = vsel %vm903, %v905, %v901
      %v907 = vmul.f32 1.0, %v906
      %v908 = vrcp.pop %v624
      %v909 = vmul.f32 %v624, %v908
      %v910 = vsub.f32 1.0, %v909
      %v911 = vmul.f32 %v908, %v910
      %v912 = vadd.f32 %v908, %v911
      %vm913 = vweird.f32 %v624
      %vm914 = vweird.f32 %v908
      %vm915 = vmor %vm913, %vm914
      %v916 = vsel %vm915, %v908, %v912
      %v917 = vand.u32 2147483647, %v624
      %vm918 = vcmp.eq.f32.partialorder %v917, 8.507059e+37
      %v919 = vand.u32 %v624, 2147483648
      %v920 = vor.u32 1.1754944e-38, %v919
      %v921 = vsel %vm918, %v920, %v916
      %v922 = vmul.f32 1.0, %v921
      %v923 = vrcp.pop %v625
      %v924 = vmul.f32 %v625, %v923
      %v925 = vsub.f32 1.0, %v924
      %v926 = vmul.f32 %v923, %v925
      %v927 = vadd.f32 %v923, %v926
      %vm928 = vweird.f32 %v625
      %vm929 = vweird.f32 %v923
      %vm930 = vmor %vm928, %vm929
      %v931 = vsel %vm930, %v923, %v927
      %v932 = vand.u32 2147483647, %v625
      %vm933 = vcmp.eq.f32.partialorder %v932, 8.507059e+37
      %v934 = vand.u32 %v625, 2147483648
      %v935 = vor.u32 1.1754944e-38, %v934
      %v936 = vsel %vm933, %v935, %v931
      %v937 = vmul.f32 1.0, %v936
      %v938 = vrcp.pop %v626
      %v939 = vmul.f32 %v626, %v938
      %v940 = vsub.f32 1.0, %v939
      %v941 = vmul.f32 %v938, %v940
      %v942 = vadd.f32 %v938, %v941
      %vm943 = vweird.f32 %v626
      %vm944 = vweird.f32 %v938
      %vm945 = vmor %vm943, %vm944
      %v946 = vsel %vm945, %v938, %v942
      %v947 = vand.u32 2147483647, %v626
      %vm948 = vcmp.eq.f32.partialorder %v947, 8.507059e+37
      %v949 = vand.u32 %v626, 2147483648
      %v950 = vor.u32 1.1754944e-38, %v949
      %v951 = vsel %vm948, %v950, %v946
      %v952 = vmul.f32 1.0, %v951
      %v953 = vrcp.pop %v627
      %v954 = vmul.f32 %v627, %v953
      %v955 = vsub.f32 1.0, %v954
      %v956 = vmul.f32 %v953, %v955
      %v957 = vadd.f32 %v953, %v956
      %vm958 = vweird.f32 %v627
      %vm959 = vweird.f32 %v953
      %vm960 = vmor %vm958, %vm959
      %v961 = vsel %vm960, %v953, %v957
      %v962 = vand.u32 2147483647, %v627
      %vm963 = vcmp.eq.f32.partialorder %v962, 8.507059e+37
      %v964 = vand.u32 %v627, 2147483648
      %v965 = vor.u32 1.1754944e-38, %v964
      %v966 = vsel %vm963, %v965, %v961
      %v967 = vmul.f32 1.0, %v966
      %v968 = vrcp.pop %v628
      %v969 = vmul.f32 %v628, %v968
      %v970 = vsub.f32 1.0, %v969
      %v971 = vmul.f32 %v968, %v970
      %v972 = vadd.f32 %v968, %v971
      %vm973 = vweird.f32 %v628
      %vm974 = vweird.f32 %v968
      %vm975 = vmor %vm973, %vm974
      %v976 = vsel %vm975, %v968, %v972
      %v977 = vand.u32 2147483647, %v628
      %vm978 = vcmp.eq.f32.partialorder %v977, 8.507059e+37
      %v979 = vand.u32 %v628, 2147483648
      %v980 = vor.u32 1.1754944e-38, %v979
      %v981 = vsel %vm978, %v980, %v976
      %v982 = vmul.f32 1.0, %v981
      %v983 = vrcp.pop %v629
      %v984 = vmul.f32 %v629, %v983
      %v985 = vsub.f32 1.0, %v984
      %v986 = vmul.f32 %v983, %v985
      %v987 = vadd.f32 %v983, %v986
      %vm988 = vweird.f32 %v629
      %vm989 = vweird.f32 %v983
      %vm990 = vmor %vm988, %vm989
      %v991 = vsel %vm990, %v983, %v987
      %v992 = vand.u32 2147483647, %v629
      %vm993 = vcmp.eq.f32.partialorder %v992, 8.507059e+37
      %v994 = vand.u32 %v629, 2147483648
      %v995 = vor.u32 1.1754944e-38, %v994
      %v996 = vsel %vm993, %v995, %v991
      %v997 = vmul.f32 1.0, %v996
      %v998 = vrcp.pop %v630
      %v999 = vmul.f32 %v630, %v998
      %v1000 = vsub.f32 1.0, %v999
      %v1001 = vmul.f32 %v998, %v1000
      %v1002 = vadd.f32 %v998, %v1001
      %vm1003 = vweird.f32 %v630
      %vm1004 = vweird.f32 %v998
      %vm1005 = vmor %vm1003, %vm1004
      %v1006 = vsel %vm1005, %v998, %v1002
      %v1007 = vand.u32 2147483647, %v630
      %vm1008 = vcmp.eq.f32.partialorder %v1007, 8.507059e+37
      %v1009 = vand.u32 %v630, 2147483648
      %v1010 = vor.u32 1.1754944e-38, %v1009
      %v1011 = vsel %vm1008, %v1010, %v1006
      %v1012 = vmul.f32 1.0, %v1011
      %v1013 = vrcp.pop %v631
      %v1014 = vmul.f32 %v631, %v1013
      %v1015 = vsub.f32 1.0, %v1014
      %v1016 = vmul.f32 %v1013, %v1015
      %v1017 = vadd.f32 %v1013, %v1016
      %vm1018 = vweird.f32 %v631
      %vm1019 = vweird.f32 %v1013
      %vm1020 = vmor %vm1018, %vm1019
      %v1021 = vsel %vm1020, %v1013, %v1017
      %v1022 = vand.u32 2147483647, %v631
      %vm1023 = vcmp.eq.f32.partialorder %v1022, 8.507059e+37
      %v1024 = vand.u32 %v631, 2147483648
      %v1025 = vor.u32 1.1754944e-38, %v1024
      %v1026 = vsel %vm1023, %v1025, %v1021
      %v1027 = vmul.f32 1.0, %v1026
      %v1028 = vrcp.pop %v632
      %v1029 = vmul.f32 %v632, %v1028
      %v1030 = vsub.f32 1.0, %v1029
      %v1031 = vmul.f32 %v1028, %v1030
      %v1032 = vadd.f32 %v1028, %v1031
      %vm1033 = vweird.f32 %v632
      %vm1034 = vweird.f32 %v1028
      %vm1035 = vmor %vm1033, %vm1034
      %v1036 = vsel %vm1035, %v1028, %v1032
      %v1037 = vand.u32 2147483647, %v632
      %vm1038 = vcmp.eq.f32.partialorder %v1037, 8.507059e+37
      %v1039 = vand.u32 %v632, 2147483648
      %v1040 = vor.u32 1.1754944e-38, %v1039
      %v1041 = vsel %vm1038, %v1040, %v1036
      %v1042 = vmul.f32 1.0, %v1041
      %v1043 = vrcp.pop %v633
      %v1044 = vmul.f32 %v633, %v1043
      %v1045 = vsub.f32 1.0, %v1044
      %v1046 = vmul.f32 %v1043, %v1045
      %v1047 = vadd.f32 %v1043, %v1046
      %vm1048 = vweird.f32 %v633
      %vm1049 = vweird.f32 %v1043
      %vm1050 = vmor %vm1048, %vm1049
      %v1051 = vsel %vm1050, %v1043, %v1047
      %v1052 = vand.u32 2147483647, %v633
      %vm1053 = vcmp.eq.f32.partialorder %v1052, 8.507059e+37
      %v1054 = vand.u32 %v633, 2147483648
      %v1055 = vor.u32 1.1754944e-38, %v1054
      %v1056 = vsel %vm1053, %v1055, %v1051
      %v1057 = vmul.f32 1.0, %v1056
      %v1058 = vrcp.pop %v634
      %v1059 = vmul.f32 %v634, %v1058
      %v1060 = vsub.f32 1.0, %v1059
      %v1061 = vmul.f32 %v1058, %v1060
      %v1062 = vadd.f32 %v1058, %v1061
      %vm1063 = vweird.f32 %v634
      %vm1064 = vweird.f32 %v1058
      %vm1065 = vmor %vm1063, %vm1064
      %v1066 = vsel %vm1065, %v1058, %v1062
      %v1067 = vand.u32 2147483647, %v634
      %vm1068 = vcmp.eq.f32.partialorder %v1067, 8.507059e+37
      %v1069 = vand.u32 %v634, 2147483648
      %v1070 = vor.u32 1.1754944e-38, %v1069
      %v1071 = vsel %vm1068, %v1070, %v1066
      %v1072 = vmul.f32 1.0, %v1071
      %v1073 = vrcp.pop %v635
      %v1074 = vmul.f32 %v635, %v1073
      %v1075 = vsub.f32 1.0, %v1074
      %v1076 = vmul.f32 %v1073, %v1075
      %v1077 = vadd.f32 %v1073, %v1076
      %vm1078 = vweird.f32 %v635
      %vm1079 = vweird.f32 %v1073
      %vm1080 = vmor %vm1078, %vm1079
      %v1081 = vsel %vm1080, %v1073, %v1077
      %v1082 = vand.u32 2147483647, %v635
      %vm1083 = vcmp.eq.f32.partialorder %v1082, 8.507059e+37
      %v1084 = vand.u32 %v635, 2147483648
      %v1085 = vor.u32 1.1754944e-38, %v1084
      %v1086 = vsel %vm1083, %v1085, %v1081
      %v1087 = vmul.f32 1.0, %v1086
      %v1088 = vrcp.pop %v636
      %v1089 = vmul.f32 %v636, %v1088
      %v1090 = vsub.f32 1.0, %v1089
      %v1091 = vmul.f32 %v1088, %v1090
      %v1092 = vadd.f32 %v1088, %v1091
      %vm1093 = vweird.f32 %v636
      %vm1094 = vweird.f32 %v1088
      %vm1095 = vmor %vm1093, %vm1094
      %v1096 = vsel %vm1095, %v1088, %v1092
      %v1097 = vand.u32 2147483647, %v636
      %vm1098 = vcmp.eq.f32.partialorder %v1097, 8.507059e+37
      %v1099 = vand.u32 %v636, 2147483648
      %v1100 = vor.u32 1.1754944e-38, %v1099
      %v1101 = vsel %vm1098, %v1100, %v1096
      %v1102 = vmul.f32 1.0, %v1101
      %v1103 = vrcp.pop %v637
      %v1104 = vmul.f32 %v637, %v1103
      %v1105 = vsub.f32 1.0, %v1104
      %v1106 = vmul.f32 %v1103, %v1105
      %v1107 = vadd.f32 %v1103, %v1106
      %vm1108 = vweird.f32 %v637
      %vm1109 = vweird.f32 %v1103
      %vm1110 = vmor %vm1108, %vm1109
      %v1111 = vsel %vm1110, %v1103, %v1107
      %v1112 = vand.u32 2147483647, %v637
      %vm1113 = vcmp.eq.f32.partialorder %v1112, 8.507059e+37
      %v1114 = vand.u32 %v637, 2147483648
      %v1115 = vor.u32 1.1754944e-38, %v1114
      %v1116 = vsel %vm1113, %v1115, %v1111
      %v1117 = vmul.f32 1.0, %v1116
      %1118 = vst [vmem:[%s223] sm:$0xff] %v652
      %1119 = vst [vmem:[%s223 + $0x8] sm:$0xff] %v667
      %1120 = vst [vmem:[%s223 + $0x10] sm:$0xff] %v682
      %1121 = vst [vmem:[%s223 + $0x18] sm:$0xff] %v697
      %1122 = vst [vmem:[%s223 + $0x20] sm:$0xff] %v712
      %1123 = vst [vmem:[%s223 + $0x28] sm:$0xff] %v727
      %1124 = vst [vmem:[%s223 + $0x30] sm:$0xff] %v742
      %1125 = vst [vmem:[%s223 + $0x38] sm:$0xff] %v757
      %1126 = vst [vmem:[%s223 + $0x40] sm:$0xff] %v772
      %1127 = vst [vmem:[%s223 + $0x48] sm:$0xff] %v787
      %1128 = vst [vmem:[%s223 + $0x50] sm:$0xff] %v802
      %1129 = vst [vmem:[%s223 + $0x58] sm:$0xff] %v817
      %1130 = vst [vmem:[%s223 + $0x60] sm:$0xff] %v832
      %1131 = vst [vmem:[%s223 + $0x68] sm:$0xff] %v847
      %1132 = vst [vmem:[%s223 + $0x70] sm:$0xff] %v862
      %1133 = vst [vmem:[%s223 + $0x78] sm:$0xff] %v877
      %1134 = vst [vmem:[%s223 + $0x80] sm:$0xff] %v892
      %1135 = vst [vmem:[%s223 + $0x88] sm:$0xff] %v907
      %1136 = vst [vmem:[%s223 + $0x90] sm:$0xff] %v922
      %1137 = vst [vmem:[%s223 + $0x98] sm:$0xff] %v937
      %1138 = vst [vmem:[%s223 + $0xa0] sm:$0xff] %v952
      %1139 = vst [vmem:[%s223 + $0xa8] sm:$0xff] %v967
      %1140 = vst [vmem:[%s223 + $0xb0] sm:$0xff] %v982
      %1141 = vst [vmem:[%s223 + $0xb8] sm:$0xff] %v997
      %1142 = vst [vmem:[%s223 + $0xc0] sm:$0xff] %v1012
      %1143 = vst [vmem:[%s223 + $0xc8] sm:$0xff] %v1027
      %1144 = vst [vmem:[%s223 + $0xd0] sm:$0xff] %v1042
      %1145 = vst [vmem:[%s223 + $0xd8] sm:$0xff] %v1057
      %1146 = vst [vmem:[%s223 + $0xe0] sm:$0xff] %v1072
      %1147 = vst [vmem:[%s223 + $0xe8] sm:$0xff] %v1087
      %1148 = vst [vmem:[%s223 + $0xf0] sm:$0xff] %v1102
      %1149 = vst [vmem:[%s223 + $0xf8] sm:$0xff] %v1117
      %s1150 = smul.u32 32, %s18
      %p1151 = scmp.lt.s32.totalorder %s1150, 12543
      %s1152 = scalar_select %p1151, %s1150, 12543
      %p1153 = scmp.lt.s32.totalorder %s19, 0
      %s1154 = scalar_select %p1153, %s19, 0
      %s1155 = sadd.s32 %s1154, %s1152
      %s1156 = smul.addr %s1155, 8
      %s1157 = scalar_lea.vmem %s3, %s1156
      // Predicated region
      $region33: #{decoder_forward.7} parent=31 // pred_check
        %p1158 = pneg %p124
      $region34: #{decoder_forward.7} parent=31 // pred_check_branch
        %1160 = sbr.rel (%p1158) target = $region36
      $region35: #{decoder_forward.7} parent=31 // pred_region
        %s1161 = smul.u32 32, %s18
      $region36: #{decoder_forward.7} parent=31 // pred_fallthru
        _
    $region32: #{decoder_forward.7} parent=5 // pred_fallthru
      _
    %p1162 = scmp.le.s32.totalorder 2, %s9
    // Predicated region
    $region37: #{decoder_forward.7} parent=5 // pred_check
      %p1163 = pneg %p1162
    $region38: #{decoder_forward.7} parent=5 // pred_check_branch
      %1165 = sbr.rel (%p1163) target = $region40
    $region39: #{decoder_forward.7} parent=5 // pred_region
      %s1166 = ssub.s32 %s9, 2
      // Predicated region
      $region41: #{decoder_forward.7} parent=39 // pred_check
        %p1167 = pneg %p130
      $region42: #{decoder_forward.7} parent=39 // pred_check_branch
        %1169 = sbr.rel (%p1167) target = $region44
      $region43: #{decoder_forward.7} parent=39 // pred_region
        %s1170 = smul.u32 32, %s20
        %p1171 = scmp.lt.s32.totalorder %s1170, 12543
        %s1172 = scalar_select %p1171, %s1170, 12543
        %p1173 = scmp.lt.s32.totalorder %s21, 0
        %s1174 = scalar_select %p1173, %s21, 0
        %s1175 = sadd.s32 %s1174, %s1172
        %s1176 = smul.addr %s1175, 8
        %s1177 = scalar_lea.vmem %s3, %s1176
      $region44: #{decoder_forward.7} parent=39 // pred_fallthru
        _
    $region40: #{decoder_forward.7} parent=5 // pred_fallthru
      _
  $region6: #{decoder_forward.7} parent=0 // loop_footer
    %s13 = sadd.s32 1, %s9
  $region7: #{decoder_forward.7} parent=0 // loop_footer_branch
    %8 = sbr.rel target = $region3
  $region8: #{decoder_forward.7} parent=0 // loop_exit
    _

</llo_original>
